<compile_context>
chip_gen: v5e
topology: v5e:2x2
jax: 0.10.0
libtpu: 0.0.40
codegen_flags: <defaults>
</compile_context>

<pallas_src>
import functools
import math

import jax
import jax.numpy as jnp
from jax.experimental import pallas as pl
from jax.experimental.pallas import tpu as pltpu

N_EMBED = 384          # n_embed in the reference module
BLOCK_SIZE = 256       # max sequence length (causal mask buffer size)


# ---------------------------------------------------------------------------
# Fused kernel: QKV (all heads, one GEMM) -> causal softmax attention
#               -> scratch concat -> output projection, for `bb` batch
#               elements per grid step.
# ---------------------------------------------------------------------------
def _mha_fused_kernel(x_ref, wqkv_ref, wp_ref, bp_ref, o_ref, y_ref,
                      *, num_heads):
    # x_ref   : (bb, T, C)        wqkv_ref : (C, 3D)   (scale folded into Q cols)
    # wp_ref  : (D, C)            bp_ref   : (1, C)    (f32)
    # o_ref   : (bb, T, C)        y_ref    : (bb, T, D) VMEM scratch (MXU dtype)
    bb, T, C = x_ref.shape
    D = wqkv_ref.shape[1] // 3
    hs = D // num_heads
    dt = x_ref.dtype                       # MXU input dtype (f32 or bf16)

    x2 = x_ref[...].reshape(bb * T, C)     # M = bb*T rows for the big GEMMs

    # Fused QKV: one GEMM, N = 3D = 384 output lanes, f32 accumulation.
    qkv = jnp.dot(x2, wqkv_ref[...], preferred_element_type=jnp.float32)

    # 128-lane-aligned slices (D = 128); cast once on the full slabs so the
    # scores / PV matmuls run at the bf16 MXU rate when dt == bf16.
    q = qkv[:, 0 * D:1 * D].astype(dt).reshape(bb, T, D)   # scale pre-folded
    k = qkv[:, 1 * D:2 * D].astype(dt).reshape(bb, T, D)
    v = qkv[:, 2 * D:3 * D].astype(dt).reshape(bb, T, D)

    # Causal mask, generated once per grid step.
    row = jax.lax.broadcasted_iota(jnp.int32, (1, T, T), 1)
    col = jax.lax.broadcasted_iota(jnp.int32, (1, T, T), 2)
    causal = col <= row                     # tril; diagonal always unmasked

    # Static unroll over heads only; the batch dim bb is carried inside the
    # dot_generals as a batch dimension.
    for h in range(num_heads):
        sl = slice(h * hs, (h + 1) * hs)
        qh = q[:, :, sl]                    # (bb, T, hs)
        kh = k[:, :, sl]                    # (bb, T, hs)
        vh = v[:, :, sl]                    # (bb, T, hs)

        # q @ k^T without materialising a transpose: contract hs, batch bb.
        s = jax.lax.dot_general(
            qh, kh, (((2,), (2,)), ((0,), (0,))),
            preferred_element_type=jnp.float32)             # (bb, T, T)
        s = jnp.where(causal, s, -jnp.inf)                  # masked_fill(tril==0)
        s = s - jnp.max(s, axis=-1, keepdims=True)
        p = jnp.exp(s)
        p = p * pl.reciprocal(jnp.sum(p, axis=-1, keepdims=True),
                              approx=True)                  # softmax (EUP recip)
        # dropout(p): identity in eval mode

        oh = jax.lax.dot_general(
            p.astype(dt), vh, (((2,), (1,)), ((0,), (0,))),
            preferred_element_type=jnp.float32)             # (bb, T, hs)
        # Direct scratch write at static lane offset == torch.cat(dim=-1).
        y_ref[:, :, sl] = oh.astype(dt)

    # Output projection from scratch: single K = D = 128 GEMM, lane-dense
    # C = 384 output block.
    y2 = y_ref[...].reshape(bb * T, D)
    out = jnp.dot(y2, wp_ref[...], preferred_element_type=jnp.float32)
    out = out + bp_ref[...]
    # dropout(out): identity in eval mode
    o_ref[...] = out.reshape(bb, T, C).astype(o_ref.dtype)


# ---------------------------------------------------------------------------
# Parameter preparation (hoist out of the forward call path; do it once).
# ---------------------------------------------------------------------------
def fuse_mha_params(wq, wk, wv, wp_t, bp, matmul_dtype=None):
    """Fuse per-head weights into (wqkv, wp, bp2d) for the kernel.

    wq/wk/wv : (H, C, hs) per-head weights (transposed nn.Linear weights)
    wp_t     : (H*hs, C)  projection weight, pre-transposed
    bp       : (C,)       projection bias

    The 1/sqrt(C) attention scale (C = n_embed, as in the reference module)
    is folded into the Q columns.  Head h occupies columns [h*hs, (h+1)*hs),
    matching torch.cat([head(x) for head in heads], dim=-1).
    """
    H, C, hs = wq.shape
    D = H * hs
    scale = 1.0 / math.sqrt(C)
    wq_f = jnp.transpose(wq, (1, 0, 2)).reshape(C, D) * scale
    wk_f = jnp.transpose(wk, (1, 0, 2)).reshape(C, D)
    wv_f = jnp.transpose(wv, (1, 0, 2)).reshape(C, D)
    wqkv = jnp.concatenate([wq_f, wk_f, wv_f], axis=1)      # (C, 3D)
    wp = wp_t
    if matmul_dtype is not None:
        wqkv = wqkv.astype(matmul_dtype)
        wp = wp.astype(matmul_dtype)
    bp2d = bp.reshape(1, C).astype(jnp.float32)              # bias stays f32
    return wqkv, wp, bp2d


# ---------------------------------------------------------------------------
# pallas_call wrapper (expects pre-fused params)
# ---------------------------------------------------------------------------
def mha_forward(x, wqkv, wp, bp2d, *, num_heads, out_dtype=None,
                batch_block=2, vmem_limit_bytes=None):
    B, T, C = x.shape
    D = wp.shape[0]
    assert wqkv.shape == (C, 3 * D)
    assert T <= BLOCK_SIZE
    out_dtype = x.dtype if out_dtype is None else out_dtype

    bb = batch_block if (B % batch_block == 0) else 1
    grid = (B // bb,)

    cp_kwargs = dict(dimension_semantics=("parallel",))      # megacore split
    if vmem_limit_bytes is not None:
        cp_kwargs["vmem_limit_bytes"] = vmem_limit_bytes

    kernel = functools.partial(_mha_fused_kernel, num_heads=num_heads)
    return pl.pallas_call(
        kernel,
        out_shape=jax.ShapeDtypeStruct((B, T, C), out_dtype),
        grid_spec=pltpu.PrefetchScalarGridSpec(
            num_scalar_prefetch=0,
            grid=grid,
            in_specs=[
                pl.BlockSpec((bb, T, C), lambda i: (i, 0, 0)),
                pl.BlockSpec((C, 3 * D), lambda i: (0, 0)),
                pl.BlockSpec((D, C), lambda i: (0, 0)),
                pl.BlockSpec((1, C), lambda i: (0, 0)),
            ],
            out_specs=pl.BlockSpec((bb, T, C), lambda i: (i, 0, 0)),
            scratch_shapes=[pltpu.VMEM((bb, T, D), x.dtype)],  # y concat buffer
        ),
        compiler_params=pltpu.CompilerParams(**cp_kwargs),
    )(x, wqkv, wp, bp2d)


# ---------------------------------------------------------------------------
# Convenience wrapper taking the raw per-head weights (prep done inline).
# For production, call fuse_mha_params() once and use mha_forward() directly.
# ---------------------------------------------------------------------------
def multi_head_attention(x, wq, wk, wv, wp_t, bp, *, matmul_dtype=None,
                         batch_block=2, vmem_limit_bytes=None):
    """Fused multi-head causal self-attention + output projection.

    matmul_dtype: e.g. jnp.bfloat16 for MXU rate + halved HBM DMA bytes on
    all generations (v5e/v6e/v7x); accumulation and softmax stay f32.
    """
    out_dtype = x.dtype
    H = wq.shape[0]
    wqkv, wp, bp2d = fuse_mha_params(wq, wk, wv, wp_t, bp, matmul_dtype)
    if matmul_dtype is not None:
        x = x.astype(matmul_dtype)
    return mha_forward(x, wqkv, wp, bp2d, num_heads=H, out_dtype=out_dtype,
                       batch_block=batch_block,
                       vmem_limit_bytes=vmem_limit_bytes)


# ---------------------------------------------------------------------------
# Pure-JAX reference (for correctness check)
# ---------------------------------------------------------------------------
def _reference(x, wq, wk, wv, wp_t, bp):
    B, T, C = x.shape
    H, _, hs = wq.shape
    outs = []
    for h in range(H):
        q = x @ wq[h]
        k = x @ wk[h]
        v = x @ wv[h]
        s = (q @ jnp.swapaxes(k, -2, -1)) / math.sqrt(C)
        mask = jnp.tril(jnp.ones((T, T), dtype=bool))
        s = jnp.where(mask, s, -jnp.inf)
        p = jax.nn.softmax(s, axis=-1)
        outs.append(p @ v)
    y = jnp.concatenate(outs, axis=-1)
    return y @ wp_t + bp


if __name__ == "__main__":
    # module-consistent small shapes: C = n_embed = 384, T <= block_size
    B, T = 8, 128
    H, HS = 4, 32                      # num_heads * head_size = 128
    C = N_EMBED

    key = jax.random.PRNGKey(0)
    kx, kq, kk, kv, kp, kb = jax.random.split(key, 6)

    x = jax.random.normal(kx, (B, T, C), dtype=jnp.float32)
    # torch Linear weight is (out, in); we store the transposed (in, out) form.
    wq = jax.random.normal(kq, (H, C, HS), dtype=jnp.float32) * 0.02
    wk = jax.random.normal(kk, (H, C, HS), dtype=jnp.float32) * 0.02
    wv = jax.random.normal(kv, (H, C, HS), dtype=jnp.float32) * 0.02
    wp_t = jax.random.normal(kp, (H * HS, C), dtype=jnp.float32) * 0.02
    bp = jax.random.normal(kb, (C,), dtype=jnp.float32) * 0.02

    ref = _reference(x, wq, wk, wv, wp_t, bp)

    # --- f32 MXU-input path, params fused once (hoisted out of call path) ---
    wqkv_f32, wp_f32, bp2d = fuse_mha_params(wq, wk, wv, wp_t, bp)
    out = jax.block_until_ready(
        mha_forward(x, wqkv_f32, wp_f32, bp2d, num_heads=H))
    assert out.shape == (B, T, C)
    assert jnp.allclose(out, ref, atol=3e-3, rtol=3e-3), "f32 mismatch vs reference"

    # --- bf16 MXU-input path (all generations), f32 accumulation/softmax ---
    out_bf16 = jax.block_until_ready(
        multi_head_attention(x, wq, wk, wv, wp_t, bp,
                             matmul_dtype=jnp.bfloat16))
    assert out_bf16.shape == (B, T, C)
    assert jnp.allclose(out_bf16, ref, atol=5e-2, rtol=5e-2), "bf16 mismatch vs reference"

    print("KERNEL_OK")
</pallas_src>

<mosaic_0001>
module attributes {stable_mosaic.version = 11 : i64} {
  func.func @_mha_fused_kernel(%arg0: i32, %arg1: memref<2x128x384xf32, #tpu.memory_space<vmem>>, %arg2: memref<384x384xf32, #tpu.memory_space<vmem>>, %arg3: memref<128x384xf32, #tpu.memory_space<vmem>>, %arg4: memref<1x384xf32, #tpu.memory_space<vmem>>, %arg5: memref<2x128x384xf32, #tpu.memory_space<vmem>>, %arg6: memref<2x128x128xf32, #tpu.memory_space<vmem>>) attributes {dimension_semantics = [#tpu.dimension_semantics<parallel>], iteration_bounds = array<i64: 4>, scalar_prefetch = 0 : i64, scratch_operands = 1 : i64, tpu.core_type = #tpu.core_type<tc>, window_params = [{transform_indices = @transform_0, window_bounds = array<i64: 2, 128, 384>}, {pipeline_mode = #tpu.pipeline_mode<synchronous>, transform_indices = @transform_1, window_bounds = array<i64: 384, 384>}, {pipeline_mode = #tpu.pipeline_mode<synchronous>, transform_indices = @transform_2, window_bounds = array<i64: 128, 384>}, {pipeline_mode = #tpu.pipeline_mode<synchronous>, transform_indices = @transform_3, window_bounds = array<i64: 1, 384>}, {transform_indices = @transform_4, window_bounds = array<i64: 2, 128, 384>}]} {
    %c0 = arith.constant 0 : index
    %c0_0 = arith.constant 0 : index
    %c0_1 = arith.constant 0 : index
    %0 = vector.load %arg1[%c0, %c0_0, %c0_1] : memref<2x128x384xf32, #tpu.memory_space<vmem>>, vector<2x128x384xf32>
    %1 = vector.shape_cast %0 : vector<2x128x384xf32> to vector<256x384xf32>
    %c0_2 = arith.constant 0 : index
    %c0_3 = arith.constant 0 : index
    %2 = vector.load %arg2[%c0_2, %c0_3] : memref<384x384xf32, #tpu.memory_space<vmem>>, vector<384x384xf32>
    %cst = arith.constant dense<0.000000e+00> : vector<256x384xf32>
    %3 = tpu.matmul %1, %2, %cst {dimension_numbers = #tpu.dot_dimension_numbers<[1], [0], [0], [1], [0, 0, 1, 1], [], []>} : vector<256x384xf32>, vector<384x384xf32>, vector<256x384xf32> -> vector<256x384xf32>
    %4 = vector.extract_strided_slice %3 {offsets = [0, 0], sizes = [256, 128], strides = [1, 1]} : vector<256x384xf32> to vector<256x128xf32>
    %5 = vector.shape_cast %4 : vector<256x128xf32> to vector<2x128x128xf32>
    %6 = vector.extract_strided_slice %3 {offsets = [0, 128], sizes = [256, 128], strides = [1, 1]} : vector<256x384xf32> to vector<256x128xf32>
    %7 = vector.shape_cast %6 : vector<256x128xf32> to vector<2x128x128xf32>
    %8 = vector.extract_strided_slice %3 {offsets = [0, 256], sizes = [256, 128], strides = [1, 1]} : vector<256x384xf32> to vector<256x128xf32>
    %9 = vector.shape_cast %8 : vector<256x128xf32> to vector<2x128x128xf32>
    %10 = tpu.iota {dimensions = array<i32: 1>} : vector<1x128x128xi32>
    %11 = tpu.iota {dimensions = array<i32: 2>} : vector<1x128x128xi32>
    %12 = arith.cmpi sle, %11, %10 : vector<1x128x128xi32>
    %13 = vector.extract_strided_slice %5 {offsets = [0, 0, 0], sizes = [2, 128, 32], strides = [1, 1, 1]} : vector<2x128x128xf32> to vector<2x128x32xf32>
    %14 = vector.extract_strided_slice %7 {offsets = [0, 0, 0], sizes = [2, 128, 32], strides = [1, 1, 1]} : vector<2x128x128xf32> to vector<2x128x32xf32>
    %15 = vector.extract_strided_slice %9 {offsets = [0, 0, 0], sizes = [2, 128, 32], strides = [1, 1, 1]} : vector<2x128x128xf32> to vector<2x128x32xf32>
    %cst_4 = arith.constant dense<0.000000e+00> : vector<2x128x128xf32>
    %16 = tpu.matmul %13, %14, %cst_4 {dimension_numbers = #tpu.dot_dimension_numbers<[2], [2], [1], [1], [0, 0, 0, 1, 1, 1], [0], [0]>} : vector<2x128x32xf32>, vector<2x128x32xf32>, vector<2x128x128xf32> -> vector<2x128x128xf32>
    %cst_5 = arith.constant 0xFF800000 : f32
    %17 = vector.shape_cast %12 : vector<1x128x128xi1> to vector<1x128x128xi1>
    %18 = vector.broadcast %17 : vector<1x128x128xi1> to vector<2x128x128xi1>
    %19 = vector.broadcast %cst_5 : f32 to vector<2x128x128xf32>
    %20 = arith.select %18, %16, %19 : vector<2x128x128xi1>, vector<2x128x128xf32>
    %cst_6 = arith.constant dense<0xFF800000> : vector<2x128xf32>
    %21 = vector.multi_reduction <maximumf>, %20, %cst_6 [2] : vector<2x128x128xf32> to vector<2x128xf32>
    %22 = vector.shape_cast %21 : vector<2x128xf32> to vector<2x128x1xf32>
    %23 = vector.broadcast %22 : vector<2x128x1xf32> to vector<2x128x128xf32>
    %24 = arith.subf %20, %23 : vector<2x128x128xf32>
    %25 = math.exp %24 : vector<2x128x128xf32>
    %cst_7 = arith.constant dense<0.000000e+00> : vector<2x128xf32>
    %26 = vector.multi_reduction <add>, %25, %cst_7 [2] : vector<2x128x128xf32> to vector<2x128xf32>
    %27 = vector.shape_cast %26 : vector<2x128xf32> to vector<2x128x1xf32>
    %28 = tpu.reciprocal %27 {approx = true} : vector<2x128x1xf32> -> vector<2x128x1xf32>
    %29 = vector.broadcast %28 : vector<2x128x1xf32> to vector<2x128x128xf32>
    %30 = arith.mulf %25, %29 : vector<2x128x128xf32>
    %cst_8 = arith.constant dense<0.000000e+00> : vector<2x128x32xf32>
    %31 = tpu.matmul %30, %15, %cst_8 {dimension_numbers = #tpu.dot_dimension_numbers<[2], [1], [1], [2], [0, 0, 0, 1, 1, 2], [0], [0]>} : vector<2x128x128xf32>, vector<2x128x32xf32>, vector<2x128x32xf32> -> vector<2x128x32xf32>
    %c0_9 = arith.constant 0 : index
    %c0_10 = arith.constant 0 : index
    %c0_11 = arith.constant 0 : index
    %32 = vector.load %arg6[%c0_9, %c0_10, %c0_11] : memref<2x128x128xf32, #tpu.memory_space<vmem>>, vector<2x128x32xf32>
    tpu.vector_store %arg6[%c0_9, %c0_10, %c0_11], %31 {strides = array<i32>} : memref<2x128x128xf32, #tpu.memory_space<vmem>>, vector<2x128x32xf32>,
    %33 = vector.extract_strided_slice %5 {offsets = [0, 0, 32], sizes = [2, 128, 32], strides = [1, 1, 1]} : vector<2x128x128xf32> to vector<2x128x32xf32>
    %34 = vector.extract_strided_slice %7 {offsets = [0, 0, 32], sizes = [2, 128, 32], strides = [1, 1, 1]} : vector<2x128x128xf32> to vector<2x128x32xf32>
    %35 = vector.extract_strided_slice %9 {offsets = [0, 0, 32], sizes = [2, 128, 32], strides = [1, 1, 1]} : vector<2x128x128xf32> to vector<2x128x32xf32>
    %cst_12 = arith.constant dense<0.000000e+00> : vector<2x128x128xf32>
    %36 = tpu.matmul %33, %34, %cst_12 {dimension_numbers = #tpu.dot_dimension_numbers<[2], [2], [1], [1], [0, 0, 0, 1, 1, 1], [0], [0]>} : vector<2x128x32xf32>, vector<2x128x32xf32>, vector<2x128x128xf32> -> vector<2x128x128xf32>
    %cst_13 = arith.constant 0xFF800000 : f32
    %37 = vector.shape_cast %12 : vector<1x128x128xi1> to vector<1x128x128xi1>
    %38 = vector.broadcast %37 : vector<1x128x128xi1> to vector<2x128x128xi1>
    %39 = vector.broadcast %cst_13 : f32 to vector<2x128x128xf32>
    %40 = arith.select %38, %36, %39 : vector<2x128x128xi1>, vector<2x128x128xf32>
    %cst_14 = arith.constant dense<0xFF800000> : vector<2x128xf32>
    %41 = vector.multi_reduction <maximumf>, %40, %cst_14 [2] : vector<2x128x128xf32> to vector<2x128xf32>
    %42 = vector.shape_cast %41 : vector<2x128xf32> to vector<2x128x1xf32>
    %43 = vector.broadcast %42 : vector<2x128x1xf32> to vector<2x128x128xf32>
    %44 = arith.subf %40, %43 : vector<2x128x128xf32>
    %45 = math.exp %44 : vector<2x128x128xf32>
    %cst_15 = arith.constant dense<0.000000e+00> : vector<2x128xf32>
    %46 = vector.multi_reduction <add>, %45, %cst_15 [2] : vector<2x128x128xf32> to vector<2x128xf32>
    %47 = vector.shape_cast %46 : vector<2x128xf32> to vector<2x128x1xf32>
    %48 = tpu.reciprocal %47 {approx = true} : vector<2x128x1xf32> -> vector<2x128x1xf32>
    %49 = vector.broadcast %48 : vector<2x128x1xf32> to vector<2x128x128xf32>
    %50 = arith.mulf %45, %49 : vector<2x128x128xf32>
    %cst_16 = arith.constant dense<0.000000e+00> : vector<2x128x32xf32>
    %51 = tpu.matmul %50, %35, %cst_16 {dimension_numbers = #tpu.dot_dimension_numbers<[2], [1], [1], [2], [0, 0, 0, 1, 1, 2], [0], [0]>} : vector<2x128x128xf32>, vector<2x128x32xf32>, vector<2x128x32xf32> -> vector<2x128x32xf32>
    %c0_17 = arith.constant 0 : index
    %c0_18 = arith.constant 0 : index
    %c32 = arith.constant 32 : index
    %52 = vector.load %arg6[%c0_17, %c0_18, %c32] : memref<2x128x128xf32, #tpu.memory_space<vmem>>, vector<2x128x32xf32>
    tpu.vector_store %arg6[%c0_17, %c0_18, %c32], %51 {strides = array<i32>} : memref<2x128x128xf32, #tpu.memory_space<vmem>>, vector<2x128x32xf32>,
    %53 = vector.extract_strided_slice %5 {offsets = [0, 0, 64], sizes = [2, 128, 32], strides = [1, 1, 1]} : vector<2x128x128xf32> to vector<2x128x32xf32>
    %54 = vector.extract_strided_slice %7 {offsets = [0, 0, 64], sizes = [2, 128, 32], strides = [1, 1, 1]} : vector<2x128x128xf32> to vector<2x128x32xf32>
    %55 = vector.extract_strided_slice %9 {offsets = [0, 0, 64], sizes = [2, 128, 32], strides = [1, 1, 1]} : vector<2x128x128xf32> to vector<2x128x32xf32>
    %cst_19 = arith.constant dense<0.000000e+00> : vector<2x128x128xf32>
    %56 = tpu.matmul %53, %54, %cst_19 {dimension_numbers = #tpu.dot_dimension_numbers<[2], [2], [1], [1], [0, 0, 0, 1, 1, 1], [0], [0]>} : vector<2x128x32xf32>, vector<2x128x32xf32>, vector<2x128x128xf32> -> vector<2x128x128xf32>
    %cst_20 = arith.constant 0xFF800000 : f32
    %57 = vector.shape_cast %12 : vector<1x128x128xi1> to vector<1x128x128xi1>
    %58 = vector.broadcast %57 : vector<1x128x128xi1> to vector<2x128x128xi1>
    %59 = vector.broadcast %cst_20 : f32 to vector<2x128x128xf32>
    %60 = arith.select %58, %56, %59 : vector<2x128x128xi1>, vector<2x128x128xf32>
    %cst_21 = arith.constant dense<0xFF800000> : vector<2x128xf32>
    %61 = vector.multi_reduction <maximumf>, %60, %cst_21 [2] : vector<2x128x128xf32> to vector<2x128xf32>
    %62 = vector.shape_cast %61 : vector<2x128xf32> to vector<2x128x1xf32>
    %63 = vector.broadcast %62 : vector<2x128x1xf32> to vector<2x128x128xf32>
    %64 = arith.subf %60, %63 : vector<2x128x128xf32>
    %65 = math.exp %64 : vector<2x128x128xf32>
    %cst_22 = arith.constant dense<0.000000e+00> : vector<2x128xf32>
    %66 = vector.multi_reduction <add>, %65, %cst_22 [2] : vector<2x128x128xf32> to vector<2x128xf32>
    %67 = vector.shape_cast %66 : vector<2x128xf32> to vector<2x128x1xf32>
    %68 = tpu.reciprocal %67 {approx = true} : vector<2x128x1xf32> -> vector<2x128x1xf32>
    %69 = vector.broadcast %68 : vector<2x128x1xf32> to vector<2x128x128xf32>
    %70 = arith.mulf %65, %69 : vector<2x128x128xf32>
    %cst_23 = arith.constant dense<0.000000e+00> : vector<2x128x32xf32>
    %71 = tpu.matmul %70, %55, %cst_23 {dimension_numbers = #tpu.dot_dimension_numbers<[2], [1], [1], [2], [0, 0, 0, 1, 1, 2], [0], [0]>} : vector<2x128x128xf32>, vector<2x128x32xf32>, vector<2x128x32xf32> -> vector<2x128x32xf32>
    %c0_24 = arith.constant 0 : index
    %c0_25 = arith.constant 0 : index
    %c64 = arith.constant 64 : index
    %72 = vector.load %arg6[%c0_24, %c0_25, %c64] : memref<2x128x128xf32, #tpu.memory_space<vmem>>, vector<2x128x32xf32>
    tpu.vector_store %arg6[%c0_24, %c0_25, %c64], %71 {strides = array<i32>} : memref<2x128x128xf32, #tpu.memory_space<vmem>>, vector<2x128x32xf32>,
    %73 = vector.extract_strided_slice %5 {offsets = [0, 0, 96], sizes = [2, 128, 32], strides = [1, 1, 1]} : vector<2x128x128xf32> to vector<2x128x32xf32>
    %74 = vector.extract_strided_slice %7 {offsets = [0, 0, 96], sizes = [2, 128, 32], strides = [1, 1, 1]} : vector<2x128x128xf32> to vector<2x128x32xf32>
    %75 = vector.extract_strided_slice %9 {offsets = [0, 0, 96], sizes = [2, 128, 32], strides = [1, 1, 1]} : vector<2x128x128xf32> to vector<2x128x32xf32>
    %cst_26 = arith.constant dense<0.000000e+00> : vector<2x128x128xf32>
    %76 = tpu.matmul %73, %74, %cst_26 {dimension_numbers = #tpu.dot_dimension_numbers<[2], [2], [1], [1], [0, 0, 0, 1, 1, 1], [0], [0]>} : vector<2x128x32xf32>, vector<2x128x32xf32>, vector<2x128x128xf32> -> vector<2x128x128xf32>
    %cst_27 = arith.constant 0xFF800000 : f32
    %77 = vector.shape_cast %12 : vector<1x128x128xi1> to vector<1x128x128xi1>
    %78 = vector.broadcast %77 : vector<1x128x128xi1> to vector<2x128x128xi1>
    %79 = vector.broadcast %cst_27 : f32 to vector<2x128x128xf32>
    %80 = arith.select %78, %76, %79 : vector<2x128x128xi1>, vector<2x128x128xf32>
    %cst_28 = arith.constant dense<0xFF800000> : vector<2x128xf32>
    %81 = vector.multi_reduction <maximumf>, %80, %cst_28 [2] : vector<2x128x128xf32> to vector<2x128xf32>
    %82 = vector.shape_cast %81 : vector<2x128xf32> to vector<2x128x1xf32>
    %83 = vector.broadcast %82 : vector<2x128x1xf32> to vector<2x128x128xf32>
    %84 = arith.subf %80, %83 : vector<2x128x128xf32>
    %85 = math.exp %84 : vector<2x128x128xf32>
    %cst_29 = arith.constant dense<0.000000e+00> : vector<2x128xf32>
    %86 = vector.multi_reduction <add>, %85, %cst_29 [2] : vector<2x128x128xf32> to vector<2x128xf32>
    %87 = vector.shape_cast %86 : vector<2x128xf32> to vector<2x128x1xf32>
    %88 = tpu.reciprocal %87 {approx = true} : vector<2x128x1xf32> -> vector<2x128x1xf32>
    %89 = vector.broadcast %88 : vector<2x128x1xf32> to vector<2x128x128xf32>
    %90 = arith.mulf %85, %89 : vector<2x128x128xf32>
    %cst_30 = arith.constant dense<0.000000e+00> : vector<2x128x32xf32>
    %91 = tpu.matmul %90, %75, %cst_30 {dimension_numbers = #tpu.dot_dimension_numbers<[2], [1], [1], [2], [0, 0, 0, 1, 1, 2], [0], [0]>} : vector<2x128x128xf32>, vector<2x128x32xf32>, vector<2x128x32xf32> -> vector<2x128x32xf32>
    %c0_31 = arith.constant 0 : index
    %c0_32 = arith.constant 0 : index
    %c96 = arith.constant 96 : index
    %92 = vector.load %arg6[%c0_31, %c0_32, %c96] : memref<2x128x128xf32, #tpu.memory_space<vmem>>, vector<2x128x32xf32>
    tpu.vector_store %arg6[%c0_31, %c0_32, %c96], %91 {strides = array<i32>} : memref<2x128x128xf32, #tpu.memory_space<vmem>>, vector<2x128x32xf32>,
    %c0_33 = arith.constant 0 : index
    %c0_34 = arith.constant 0 : index
    %c0_35 = arith.constant 0 : index
    %93 = vector.load %arg6[%c0_33, %c0_34, %c0_35] : memref<2x128x128xf32, #tpu.memory_space<vmem>>, vector<2x128x128xf32>
    %94 = vector.shape_cast %93 : vector<2x128x128xf32> to vector<256x128xf32>
    %c0_36 = arith.constant 0 : index
    %c0_37 = arith.constant 0 : index
    %95 = vector.load %arg3[%c0_36, %c0_37] : memref<128x384xf32, #tpu.memory_space<vmem>>, vector<128x384xf32>
    %cst_38 = arith.constant dense<0.000000e+00> : vector<256x384xf32>
    %96 = tpu.matmul %94, %95, %cst_38 {dimension_numbers = #tpu.dot_dimension_numbers<[1], [0], [0], [1], [0, 0, 1, 1], [], []>} : vector<256x128xf32>, vector<128x384xf32>, vector<256x384xf32> -> vector<256x384xf32>
    %c0_39 = arith.constant 0 : index
    %c0_40 = arith.constant 0 : index
    %97 = vector.load %arg4[%c0_39, %c0_40] : memref<1x384xf32, #tpu.memory_space<vmem>>, vector<1x384xf32>
    %98 = vector.broadcast %97 : vector<1x384xf32> to vector<256x384xf32>
    %99 = arith.addf %96, %98 : vector<256x384xf32>
    %100 = vector.shape_cast %99 : vector<256x384xf32> to vector<2x128x384xf32>
    %c0_41 = arith.constant 0 : index
    %c0_42 = arith.constant 0 : index
    %c0_43 = arith.constant 0 : index
    %101 = vector.load %arg5[%c0_41, %c0_42, %c0_43] : memref<2x128x384xf32, #tpu.memory_space<vmem>>, vector<2x128x384xf32>
    tpu.vector_store %arg5[%c0_41, %c0_42, %c0_43], %100 {strides = array<i32>} : memref<2x128x384xf32, #tpu.memory_space<vmem>>, vector<2x128x384xf32>,
    return
  }
  func.func @transform_0(%arg0: i32) -> (i32, i32, i32) {
    %c0_i32 = arith.constant 0 : i32
    %c0_i32_0 = arith.constant 0 : i32
    %c0_i32_1 = arith.constant 0 : i32
    return %arg0, %c0_i32, %c0_i32_0 : i32, i32, i32
  }
  func.func @transform_1(%arg0: i32) -> (i32, i32) {
    %c0_i32 = arith.constant 0 : i32
    %c0_i32_0 = arith.constant 0 : i32
    %c0_i32_1 = arith.constant 0 : i32
    return %c0_i32, %c0_i32_0 : i32, i32
  }
  func.func @transform_2(%arg0: i32) -> (i32, i32) {
    %c0_i32 = arith.constant 0 : i32
    %c0_i32_0 = arith.constant 0 : i32
    %c0_i32_1 = arith.constant 0 : i32
    return %c0_i32, %c0_i32_0 : i32, i32
  }
  func.func @transform_3(%arg0: i32) -> (i32, i32) {
    %c0_i32 = arith.constant 0 : i32
    %c0_i32_0 = arith.constant 0 : i32
    %c0_i32_1 = arith.constant 0 : i32
    return %c0_i32, %c0_i32_0 : i32, i32
  }
  func.func @transform_4(%arg0: i32) -> (i32, i32, i32) {
    %c0_i32 = arith.constant 0 : i32
    %c0_i32_0 = arith.constant 0 : i32
    %c0_i32_1 = arith.constant 0 : i32
    return %arg0, %c0_i32, %c0_i32_0 : i32, i32, i32
  }
}

</mosaic_0001>

<llo_original>
// kernel: tpu_custom_call.1
$region0: #{tpu_custom_call.1}
  #allocation0 [shape = 'u32[]', space=smem, size = 0x4, offset = 0x4, fixed_abs, tag = 'smem constant byte address 0x4 - core index']
  #allocation1 [shape = 'u32[72,128]{1,0:T(1,128)}', space=vmem, size = 0x9000, scoped, tag = 'internal scratch']
  #allocation2 [shape = 'f32[2,128,128]{2,1,0:T(8,128)}', space=vmem, size = 0x20000, scoped, tag = 'scratch operand']
  %s0 = inlined_call_operand.hbm [shape: f32[8,128,384], index: 0, kind: input, shape index: {}]
  %s1 = inlined_call_operand.hbm [shape: f32[384,384], index: 1, kind: input, shape index: {}]
  %s2 = inlined_call_operand.hbm [shape: f32[128,384], index: 2, kind: input, shape index: {}]
  %s3 = inlined_call_operand.hbm [shape: f32[1,384], index: 3, kind: input, shape index: {}]
  %s4 = inlined_call_operand.hbm [shape: f32[8,128,384], index: 4, kind: output, shape index: {}]
  %s5 = sld [smem:[#allocation0]]
  $region65: #{tpu_custom_call.1} parent=0
    _
  %s7 = ssub.s32 1, %s5
  %s8 = scalar_select 0, %s7, %s5
  $region1: #{tpu_custom_call.1} parent=0
    #allocation3 [shape = 'u8[786432]{0}', space=vmem, size = 0xc0000, scoped, tag = 'input window, operand 0']
    #allocation4 [shape = 's32[2]{0}', space=sflag, size = 0x8, scoped, tag = 'scoped memory for tpu_custom_call.1']
    #allocation5 [shape = 's32[2]{0}', space=sflag, size = 0x8, scoped, tag = 'scoped memory for tpu_custom_call.1']
    #allocation6 [shape = 'u8[589824]{0}', space=vmem, size = 0x90000, scoped, tag = 'input window, operand 1, single buffered']
    #allocation7 [shape = 's32[1]{0}', space=sflag, size = 0x4, scoped, tag = 'scoped memory for tpu_custom_call.1']
    #allocation8 [shape = 'u8[196608]{0}', space=vmem, size = 0x30000, scoped, tag = 'input window, operand 2, single buffered']
    #allocation9 [shape = 'u8[1536]{0}', space=vmem, size = 0x800, scoped, tag = 'input window, operand 3, single buffered']
    #allocation10 [shape = 's32[1]{0}', space=sflag, size = 0x4, scoped, tag = 'scoped memory for tpu_custom_call.1']
    #allocation11 [shape = 'u8[786432]{0}', space=vmem, size = 0xc0000, scoped, tag = 'output window, operand 0']
    %9 = vsyncpa [#allocation4], 0
    %s10 = scalar_lea.sflag [#allocation4], 1
    %11 = vsyncpa %s10, 0
    %12 = vsyncpa [#allocation7], 0
    %13 = vsyncpa [#allocation10], 0
    %14 = vsyncpa [#allocation5], 0
    %s15 = scalar_lea.sflag [#allocation5], 1
    %16 = vsyncpa %s15, 0
    loop: start=0, step=1, limit=6
    $region2: #{tpu_custom_call.1} parent=1 // loop_pre_header
      _
    $region3: #{tpu_custom_call.1} parent=1 // loop_header
      %s18 = sphi 0, %s22
      %p19 = scmp.ge.s32.totalorder %s18, 6
      %s28 = sphi 0, %s30
      %s31 = sphi 0, %s28
      %s32 = sphi 0, %s31
      %s48 = sphi 0, %s32
      %s52 = sphi 0, %s52
      %s54 = sphi 0, %s52
      %s55 = sphi 0, %s54
      %s69 = sphi 0, %s55
      %s73 = sphi 0, %s73
      %s75 = sphi 0, %s73
      %s76 = sphi 0, %s75
      %s90 = sphi 0, %s76
      %s94 = sphi 0, %s94
      %s96 = sphi 0, %s94
      %s97 = sphi 0, %s96
      %s111 = sphi 0, %s97
      %s117 = sphi 0, %s119
      %s120 = sphi 0, %s117
      %s121 = sphi 0, %s120
      %s137 = sphi 0, %s121
    $region4: #{tpu_custom_call.1} parent=1 // loop_header_branch
      %21 = sbr.rel (%p19) target = $region8
    $region5: #{tpu_custom_call.1} parent=1 // loop_body
      %s23 = ssub.s32 %s18, 1
      %s24 = ssub.s32 %s18, 2
      %s25 = sadd.s32 %s18, 1
      %s26 = ssub.s32 %s18, %s25
      %p27 = scmp.eq.s32.totalorder %s26, 0
      %s29 = sadd.s32 %s28, 1
      %s30 = scalar_select %p27, %s28, %s29
      %p33 = pneg %p27
      %p34 = scmp.eq.s32.totalorder %s18, 3
      %p35 = por %p33, %p34
      %p36 = scmp.ne.s32.totalorder %s28, %s31
      %p37 = scmp.eq.s32.totalorder %s18, 0
      %p38 = por %p36, %p37
      %p39 = scmp.ne.s32.totalorder %s28, %s31
      %p40 = scmp.eq.s32.totalorder %s23, 3
      %p41 = por %p39, %p40
      %p42 = scmp.ne.s32.totalorder %s31, %s32
      %p43 = scmp.eq.s32.totalorder %s23, 0
      %p44 = por %p42, %p43
      %p45 = scmp.ne.s32.totalorder %s31, %s32
      %p46 = scmp.eq.s32.totalorder %s24, 3
      %p47 = por %p45, %p46
      %p49 = scmp.ne.s32.totalorder %s32, %s48
      %p50 = scmp.eq.s32.totalorder %s24, 0
      %p51 = por %p49, %p50
      %s53 = sadd.s32 %s52, 1
      %p56 = scmp.eq.s32.totalorder %s18, 3
      %p57 = scmp.ne.s32.totalorder %s52, %s54
      %p58 = scmp.eq.s32.totalorder %s18, 0
      %p59 = por %p57, %p58
      %p60 = scmp.ne.s32.totalorder %s52, %s54
      %p61 = scmp.eq.s32.totalorder %s23, 3
      %p62 = por %p60, %p61
      %p63 = scmp.ne.s32.totalorder %s54, %s55
      %p64 = scmp.eq.s32.totalorder %s23, 0
      %p65 = por %p63, %p64
      %p66 = scmp.ne.s32.totalorder %s54, %s55
      %p67 = scmp.eq.s32.totalorder %s24, 3
      %p68 = por %p66, %p67
      %p70 = scmp.ne.s32.totalorder %s55, %s69
      %p71 = scmp.eq.s32.totalorder %s24, 0
      %p72 = por %p70, %p71
      %s74 = sadd.s32 %s73, 1
      %p77 = scmp.eq.s32.totalorder %s18, 3
      %p78 = scmp.ne.s32.totalorder %s73, %s75
      %p79 = scmp.eq.s32.totalorder %s18, 0
      %p80 = por %p78, %p79
      %p81 = scmp.ne.s32.totalorder %s73, %s75
      %p82 = scmp.eq.s32.totalorder %s23, 3
      %p83 = por %p81, %p82
      %p84 = scmp.ne.s32.totalorder %s75, %s76
      %p85 = scmp.eq.s32.totalorder %s23, 0
      %p86 = por %p84, %p85
      %p87 = scmp.ne.s32.totalorder %s75, %s76
      %p88 = scmp.eq.s32.totalorder %s24, 3
      %p89 = por %p87, %p88
      %p91 = scmp.ne.s32.totalorder %s76, %s90
      %p92 = scmp.eq.s32.totalorder %s24, 0
      %p93 = por %p91, %p92
      %s95 = sadd.s32 %s94, 1
      %p98 = scmp.eq.s32.totalorder %s18, 3
      %p99 = scmp.ne.s32.totalorder %s94, %s96
      %p100 = scmp.eq.s32.totalorder %s18, 0
      %p101 = por %p99, %p100
      %p102 = scmp.ne.s32.totalorder %s94, %s96
      %p103 = scmp.eq.s32.totalorder %s23, 3
      %p104 = por %p102, %p103
      %p105 = scmp.ne.s32.totalorder %s96, %s97
      %p106 = scmp.eq.s32.totalorder %s23, 0
      %p107 = por %p105, %p106
      %p108 = scmp.ne.s32.totalorder %s96, %s97
      %p109 = scmp.eq.s32.totalorder %s24, 3
      %p110 = por %p108, %p109
      %p112 = scmp.ne.s32.totalorder %s97, %s111
      %p113 = scmp.eq.s32.totalorder %s24, 0
      %p114 = por %p112, %p113
      %s115 = ssub.s32 %s18, %s25
      %p116 = scmp.eq.s32.totalorder %s115, 0
      %s118 = sadd.s32 %s117, 1
      %s119 = scalar_select %p116, %s117, %s118
      %p122 = pneg %p116
      %p123 = scmp.eq.s32.totalorder %s18, 3
      %p124 = por %p122, %p123
      %p125 = scmp.ne.s32.totalorder %s117, %s120
      %p126 = scmp.eq.s32.totalorder %s18, 0
      %p127 = por %p125, %p126
      %p128 = scmp.ne.s32.totalorder %s117, %s120
      %p129 = scmp.eq.s32.totalorder %s23, 3
      %p130 = por %p128, %p129
      %p131 = scmp.ne.s32.totalorder %s120, %s121
      %p132 = scmp.eq.s32.totalorder %s23, 0
      %p133 = por %p131, %p132
      %p134 = scmp.ne.s32.totalorder %s120, %s121
      %p135 = scmp.eq.s32.totalorder %s24, 3
      %p136 = por %p134, %p135
      %p138 = scmp.ne.s32.totalorder %s121, %s137
      %p139 = scmp.eq.s32.totalorder %s24, 0
      %p140 = por %p138, %p139
      %p141 = scmp.le.s32.totalorder 1, %s18
      %p142 = scmp.lt.s32.totalorder %s18, 5
      %p143 = pnand %p141, %p142
      %p144 = pneg %p143
      // Predicated region
      $region9: #{tpu_custom_call.1} parent=5 // pred_check
        _
      $region10: #{tpu_custom_call.1} parent=5 // pred_check_branch
        %146 = sbr.rel (%p143) target = $region12
      $region11: #{tpu_custom_call.1} parent=5 // pred_region
        %s147 = ssub.s32 %s18, 1
        // Predicated region
        $region13: #{tpu_custom_call.1} parent=11 // pred_check
          %p148 = pneg %p65
        $region14: #{tpu_custom_call.1} parent=11 // pred_check_branch
          %150 = sbr.rel (%p148) target = $region16
        $region15: #{tpu_custom_call.1} parent=11 // pred_region
          %152 = vsyncadd [#allocation7], 0
          %s153 = sshll.u32 %s1, 4
          %s154 = int_to_ptr.hbm [resolvable:$true] %s153
          %s155 = sshll.u32 [#allocation6], 4
          %s156 = int_to_ptr.vmem [resolvable:$true] %s155
          %161 = dma.hbm_to_vmem [thread:$0]  %s154, 18432, %s156, [#allocation7], 384, 384, 24
        $region16: #{tpu_custom_call.1} parent=11 // pred_fallthru
          _
        // Predicated region
        $region17: #{tpu_custom_call.1} parent=11 // pred_check
          %p162 = pneg %p86
        $region18: #{tpu_custom_call.1} parent=11 // pred_check_branch
          %164 = sbr.rel (%p162) target = $region20
        $region19: #{tpu_custom_call.1} parent=11 // pred_region
          %166 = vsyncadd [#allocation7], 0
          %s167 = sshll.u32 %s2, 4
          %s168 = int_to_ptr.hbm [resolvable:$true] %s167
          %s169 = sshll.u32 [#allocation8], 4
          %s170 = int_to_ptr.vmem [resolvable:$true] %s169
          %175 = dma.hbm_to_vmem [thread:$0]  %s168, 6144, %s170, [#allocation7], 384, 384, 24
        $region20: #{tpu_custom_call.1} parent=11 // pred_fallthru
          _
        // Predicated region
        $region21: #{tpu_custom_call.1} parent=11 // pred_check
          %p176 = pneg %p107
        $region22: #{tpu_custom_call.1} parent=11 // pred_check_branch
          %178 = sbr.rel (%p176) target = $region24
        $region23: #{tpu_custom_call.1} parent=11 // pred_region
          %180 = vsyncadd [#allocation10], 0
          %s182 = sshll.u32 %s3, 4
          %s183 = int_to_ptr.hbm [resolvable:$true] %s182
          %s184 = sshll.u32 [#allocation9], 4
          %s185 = int_to_ptr.vmem [resolvable:$true] %s184
          %187 = dma.hbm_to_vmem [thread:$0]  %s183, 48, %s185, [#allocation10]
        $region24: #{tpu_custom_call.1} parent=11 // pred_fallthru
          _
      $region12: #{tpu_custom_call.1} parent=5 // pred_fallthru
        _
      %p188 = scmp.lt.s32.totalorder %s18, 4
      // Predicated region
      $region25: #{tpu_custom_call.1} parent=5 // pred_check
        %p189 = pneg %p188
      $region26: #{tpu_custom_call.1} parent=5 // pred_check_branch
        %191 = sbr.rel (%p189) target = $region28
      $region27: #{tpu_custom_call.1} parent=5 // pred_region
        // Predicated region
        $region29: #{tpu_custom_call.1} parent=27 // pred_check
          %p192 = pneg %p38
        $region30: #{tpu_custom_call.1} parent=27 // pred_check_branch
          %194 = sbr.rel (%p192) target = $region32
        $region31: #{tpu_custom_call.1} parent=27 // pred_region
          %s195 = sand.u32 %s28, 1
          %s196 = scalar_lea.sflag [#allocation4], %s195
          %s197 = sand.u32 %s28, 1
          %s198 = smul.addr %s197, 768
          %s199 = scalar_lea.vmem [#allocation3], %s198
          %s200 = smul.u32 2, %s18
          %202 = vsyncadd %s196, 0
          %s203 = smul.addr %s200, 48
          %s204 = smul.addr %s203, 8
          %s205 = scalar_lea.hbm %s0, %s204
          %s206 = sshll.u32 %s205, 4
          %s207 = int_to_ptr.hbm [resolvable:$true] %s206
          %s208 = sshll.u32 %s199, 4
          %s209 = int_to_ptr.vmem [resolvable:$true] %s208
          %214 = dma.hbm_to_vmem [thread:$0]  %s207, 12288, %s209, %s196, 384, 384, 24
        $region32: #{tpu_custom_call.1} parent=27 // pred_fallthru
          _
      $region28: #{tpu_custom_call.1} parent=5 // pred_fallthru
        _
      %p215 = scmp.le.s32.totalorder 1, %s18
      %p216 = scmp.lt.s32.totalorder %s18, 5
      %p217 = pnand %p215, %p216
      %p218 = pneg %p217
      // Predicated region
      $region33: #{tpu_custom_call.1} parent=5 // pred_check
        _
      $region34: #{tpu_custom_call.1} parent=5 // pred_check_branch
        %220 = sbr.rel (%p217) target = $region36
      $region35: #{tpu_custom_call.1} parent=5 // pred_region
        %s221 = ssub.s32 %s18, 1
        %s222 = sand.u32 %s31, 1
        %s223 = scalar_lea.sflag [#allocation4], %s222
        %s224 = sand.u32 %s31, 1
        %s225 = smul.addr %s224, 768
        %s226 = scalar_lea.vmem [#allocation3], %s225
        // Predicated region
        $region37: #{tpu_custom_call.1} parent=35 // pred_check
          %p227 = pneg %p44
        $region38: #{tpu_custom_call.1} parent=35 // pred_check_branch
          %229 = sbr.rel (%p227) target = $region40
        $region39: #{tpu_custom_call.1} parent=35 // pred_region
          %231 = dma.done %s223, 12288
        $region40: #{tpu_custom_call.1} parent=35 // pred_fallthru
          _
        // Predicated region
        $region41: #{tpu_custom_call.1} parent=35 // pred_check
          %p232 = pneg %p65
        $region42: #{tpu_custom_call.1} parent=35 // pred_check_branch
          %234 = sbr.rel (%p232) target = $region44
        $region43: #{tpu_custom_call.1} parent=35 // pred_region
          %236 = dma.done [#allocation7], 18432
        $region44: #{tpu_custom_call.1} parent=35 // pred_fallthru
          _
        // Predicated region
        $region45: #{tpu_custom_call.1} parent=35 // pred_check
          %p237 = pneg %p86
        $region46: #{tpu_custom_call.1} parent=35 // pred_check_branch
          %239 = sbr.rel (%p237) target = $region48
        $region47: #{tpu_custom_call.1} parent=35 // pred_region
          %241 = dma.done [#allocation7], 6144
        $region48: #{tpu_custom_call.1} parent=35 // pred_fallthru
          _
        // Predicated region
        $region49: #{tpu_custom_call.1} parent=35 // pred_check
          %p242 = pneg %p107
        $region50: #{tpu_custom_call.1} parent=35 // pred_check_branch
          %244 = sbr.rel (%p242) target = $region52
        $region51: #{tpu_custom_call.1} parent=35 // pred_region
          %246 = dma.done [#allocation10], 48
        $region52: #{tpu_custom_call.1} parent=35 // pred_fallthru
          _
        %s247 = sand.u32 %s31, 1
        %s248 = scalar_lea.sflag [#allocation4], %s247
        %s249 = sand.u32 %s31, 1
        %s250 = smul.addr %s249, 768
        %s251 = scalar_lea.vmem [#allocation3], %s250
        %p252 = pneg %p44
        %p253 = pneg %p41
        %p254 = pneg %p65
        %p255 = pneg %p62
        %p256 = pneg %p86
        %p257 = pneg %p83
        %p258 = pneg %p107
        %p259 = pneg %p104
        %p260 = pneg %p133
        %p261 = pneg %p130
        %s262 = sand.u32 %s120, 1
        %s263 = scalar_lea.sflag [#allocation5], %s262
        %s264 = sand.u32 %s120, 1
        %s265 = smul.addr %s264, 768
        %s266 = scalar_lea.vmem [#allocation11], %s265
        %s267 = smul.u32 2, %s23
        %s268 = smul.u32 2, %s23
        %v269 = vld [vmem:[%s226] sm:$0xff]
        %v270 = vld [vmem:[%s226 + $0x8] sm:$0xff]
        %v271 = vld [vmem:[%s226 + $0x10] sm:$0xff]
        %v272 = vld [vmem:[%s226 + $0x18] sm:$0xff]
        %v273 = vld [vmem:[%s226 + $0x20] sm:$0xff]
        %v274 = vld [vmem:[%s226 + $0x28] sm:$0xff]
        %v275 = vld [vmem:[%s226 + $0x30] sm:$0xff]
        %v276 = vld [vmem:[%s226 + $0x38] sm:$0xff]
        %v277 = vld [vmem:[%s226 + $0x40] sm:$0xff]
        %v278 = vld [vmem:[%s226 + $0x48] sm:$0xff]
        %v279 = vld [vmem:[%s226 + $0x50] sm:$0xff]
        %v280 = vld [vmem:[%s226 + $0x58] sm:$0xff]
        %v281 = vld [vmem:[%s226 + $0x60] sm:$0xff]
        %v282 = vld [vmem:[%s226 + $0x68] sm:$0xff]
        %v283 = vld [vmem:[%s226 + $0x70] sm:$0xff]
        %v284 = vld [vmem:[%s226 + $0x78] sm:$0xff]
        %v285 = vld [vmem:[%s226 + $0x80] sm:$0xff]
        %v286 = vld [vmem:[%s226 + $0x88] sm:$0xff]
        %v287 = vld [vmem:[%s226 + $0x90] sm:$0xff]
        %v288 = vld [vmem:[%s226 + $0x98] sm:$0xff]
        %v289 = vld [vmem:[%s226 + $0xa0] sm:$0xff]
        %v290 = vld [vmem:[%s226 + $0xa8] sm:$0xff]
        %v291 = vld [vmem:[%s226 + $0xb0] sm:$0xff]
        %v292 = vld [vmem:[%s226 + $0xb8] sm:$0xff]
        %v293 = vld [vmem:[%s226 + $0xc0] sm:$0xff]
        %v294 = vld [vmem:[%s226 + $0xc8] sm:$0xff]
        %v295 = vld [vmem:[%s226 + $0xd0] sm:$0xff]
        %v296 = vld [vmem:[%s226 + $0xd8] sm:$0xff]
        %v297 = vld [vmem:[%s226 + $0xe0] sm:$0xff]
        %v298 = vld [vmem:[%s226 + $0xe8] sm:$0xff]
        %v299 = vld [vmem:[%s226 + $0xf0] sm:$0xff]
        %v300 = vld [vmem:[%s226 + $0xf8] sm:$0xff]
        %v301 = vld [vmem:[%s226 + $0x100] sm:$0xff]
        %v302 = vld [vmem:[%s226 + $0x108] sm:$0xff]
        %v303 = vld [vmem:[%s226 + $0x110] sm:$0xff]
        %v304 = vld [vmem:[%s226 + $0x118] sm:$0xff]
        %v305 = vld [vmem:[%s226 + $0x120] sm:$0xff]
        %v306 = vld [vmem:[%s226 + $0x128] sm:$0xff]
        %v307 = vld [vmem:[%s226 + $0x130] sm:$0xff]
        %v308 = vld [vmem:[%s226 + $0x138] sm:$0xff]
        %v309 = vld [vmem:[%s226 + $0x140] sm:$0xff]
        %v310 = vld [vmem:[%s226 + $0x148] sm:$0xff]
        %v311 = vld [vmem:[%s226 + $0x150] sm:$0xff]
        %v312 = vld [vmem:[%s226 + $0x158] sm:$0xff]
        %v313 = vld [vmem:[%s226 + $0x160] sm:$0xff]
        %v314 = vld [vmem:[%s226 + $0x168] sm:$0xff]
        %v315 = vld [vmem:[%s226 + $0x170] sm:$0xff]
        %v316 = vld [vmem:[%s226 + $0x178] sm:$0xff]
        %v317 = vld [vmem:[%s226 + $0x180] sm:$0xff]
        %v318 = vld [vmem:[%s226 + $0x188] sm:$0xff]
        %v319 = vld [vmem:[%s226 + $0x190] sm:$0xff]
        %v320 = vld [vmem:[%s226 + $0x198] sm:$0xff]
        %v321 = vld [vmem:[%s226 + $0x1a0] sm:$0xff]
        %v322 = vld [vmem:[%s226 + $0x1a8] sm:$0xff]
        %v323 = vld [vmem:[%s226 + $0x1b0] sm:$0xff]
        %v324 = vld [vmem:[%s226 + $0x1b8] sm:$0xff]
        %v325 = vld [vmem:[%s226 + $0x1c0] sm:$0xff]
        %v326 = vld [vmem:[%s226 + $0x1c8] sm:$0xff]
        %v327 = vld [vmem:[%s226 + $0x1d0] sm:$0xff]
        %v328 = vld [vmem:[%s226 + $0x1d8] sm:$0xff]
        %v329 = vld [vmem:[%s226 + $0x1e0] sm:$0xff]
        %v330 = vld [vmem:[%s226 + $0x1e8] sm:$0xff]
        %v331 = vld [vmem:[%s226 + $0x1f0] sm:$0xff]
        %v332 = vld [vmem:[%s226 + $0x1f8] sm:$0xff]
        %v333 = vld [vmem:[%s226 + $0x200] sm:$0xff]
        %v334 = vld [vmem:[%s226 + $0x208] sm:$0xff]
        %v335 = vld [vmem:[%s226 + $0x210] sm:$0xff]
        %v336 = vld [vmem:[%s226 + $0x218] sm:$0xff]
        %v337 = vld [vmem:[%s226 + $0x220] sm:$0xff]
        %v338 = vld [vmem:[%s226 + $0x228] sm:$0xff]
        %v339 = vld [vmem:[%s226 + $0x230] sm:$0xff]
        %v340 = vld [vmem:[%s226 + $0x238] sm:$0xff]
        %v341 = vld [vmem:[%s226 + $0x240] sm:$0xff]
        %v342 = vld [vmem:[%s226 + $0x248] sm:$0xff]
        %v343 = vld [vmem:[%s226 + $0x250] sm:$0xff]
        %v344 = vld [vmem:[%s226 + $0x258] sm:$0xff]
        %v345 = vld [vmem:[%s226 + $0x260] sm:$0xff]
        %v346 = vld [vmem:[%s226 + $0x268] sm:$0xff]
        %v347 = vld [vmem:[%s226 + $0x270] sm:$0xff]
        %v348 = vld [vmem:[%s226 + $0x278] sm:$0xff]
        %v349 = vld [vmem:[%s226 + $0x280] sm:$0xff]
        %v350 = vld [vmem:[%s226 + $0x288] sm:$0xff]
        %v351 = vld [vmem:[%s226 + $0x290] sm:$0xff]
        %v352 = vld [vmem:[%s226 + $0x298] sm:$0xff]
        %v353 = vld [vmem:[%s226 + $0x2a0] sm:$0xff]
        %v354 = vld [vmem:[%s226 + $0x2a8] sm:$0xff]
        %v355 = vld [vmem:[%s226 + $0x2b0] sm:$0xff]
        %v356 = vld [vmem:[%s226 + $0x2b8] sm:$0xff]
        %v357 = vld [vmem:[%s226 + $0x2c0] sm:$0xff]
        %v358 = vld [vmem:[%s226 + $0x2c8] sm:$0xff]
        %v359 = vld [vmem:[%s226 + $0x2d0] sm:$0xff]
        %v360 = vld [vmem:[%s226 + $0x2d8] sm:$0xff]
        %v361 = vld [vmem:[%s226 + $0x2e0] sm:$0xff]
        %v362 = vld [vmem:[%s226 + $0x2e8] sm:$0xff]
        %v363 = vld [vmem:[%s226 + $0x2f0] sm:$0xff]
        %v364 = vld [vmem:[%s226 + $0x2f8] sm:$0xff]
        %v365 = vld [vmem:[#allocation6] sm:$0xff]
        %v366 = vld [vmem:[#allocation6 + $0x8] sm:$0xff]
        %v367 = vld [vmem:[#allocation6 + $0x10] sm:$0xff]
        %v368 = vld [vmem:[#allocation6 + $0x18] sm:$0xff]
        %v369 = vld [vmem:[#allocation6 + $0x20] sm:$0xff]
        %v370 = vld [vmem:[#allocation6 + $0x28] sm:$0xff]
        %v371 = vld [vmem:[#allocation6 + $0x30] sm:$0xff]
        %v372 = vld [vmem:[#allocation6 + $0x38] sm:$0xff]
        %v373 = vld [vmem:[#allocation6 + $0x40] sm:$0xff]
        %v374 = vld [vmem:[#allocation6 + $0x48] sm:$0xff]
        %v375 = vld [vmem:[#allocation6 + $0x50] sm:$0xff]
        %v376 = vld [vmem:[#allocation6 + $0x58] sm:$0xff]
        %v377 = vld [vmem:[#allocation6 + $0x60] sm:$0xff]
        %v378 = vld [vmem:[#allocation6 + $0x68] sm:$0xff]
        %v379 = vld [vmem:[#allocation6 + $0x70] sm:$0xff]
        %v380 = vld [vmem:[#allocation6 + $0x78] sm:$0xff]
        %v381 = vld [vmem:[#allocation6 + $0x80] sm:$0xff]
        %v382 = vld [vmem:[#allocation6 + $0x88] sm:$0xff]
        %v383 = vld [vmem:[#allocation6 + $0x90] sm:$0xff]
        %v384 = vld [vmem:[#allocation6 + $0x98] sm:$0xff]
        %v385 = vld [vmem:[#allocation6 + $0xa0] sm:$0xff]
        %v386 = vld [vmem:[#allocation6 + $0xa8] sm:$0xff]
        %v387 = vld [vmem:[#allocation6 + $0xb0] sm:$0xff]
        %v388 = vld [vmem:[#allocation6 + $0xb8] sm:$0xff]
        %v389 = vld [vmem:[#allocation6 + $0xc0] sm:$0xff]
        %v390 = vld [vmem:[#allocation6 + $0xc8] sm:$0xff]
        %v391 = vld [vmem:[#allocation6 + $0xd0] sm:$0xff]
        %v392 = vld [vmem:[#allocation6 + $0xd8] sm:$0xff]
        %v393 = vld [vmem:[#allocation6 + $0xe0] sm:$0xff]
        %v394 = vld [vmem:[#allocation6 + $0xe8] sm:$0xff]
        %v395 = vld [vmem:[#allocation6 + $0xf0] sm:$0xff]
        %v396 = vld [vmem:[#allocation6 + $0xf8] sm:$0xff]
        %v397 = vld [vmem:[#allocation6 + $0x100] sm:$0xff]
        %v398 = vld [vmem:[#allocation6 + $0x108] sm:$0xff]
        %v399 = vld [vmem:[#allocation6 + $0x110] sm:$0xff]
        %v400 = vld [vmem:[#allocation6 + $0x118] sm:$0xff]
        %v401 = vld [vmem:[#allocation6 + $0x120] sm:$0xff]
        %v402 = vld [vmem:[#allocation6 + $0x128] sm:$0xff]
        %v403 = vld [vmem:[#allocation6 + $0x130] sm:$0xff]
        %v404 = vld [vmem:[#allocation6 + $0x138] sm:$0xff]
        %v405 = vld [vmem:[#allocation6 + $0x140] sm:$0xff]
        %v406 = vld [vmem:[#allocation6 + $0x148] sm:$0xff]
        %v407 = vld [vmem:[#allocation6 + $0x150] sm:$0xff]
        %v408 = vld [vmem:[#allocation6 + $0x158] sm:$0xff]
        %v409 = vld [vmem:[#allocation6 + $0x160] sm:$0xff]
        %v410 = vld [vmem:[#allocation6 + $0x168] sm:$0xff]
        %v411 = vld [vmem:[#allocation6 + $0x170] sm:$0xff]
        %v412 = vld [vmem:[#allocation6 + $0x178] sm:$0xff]
        %v413 = vld [vmem:[#allocation6 + $0x180] sm:$0xff]
        %v414 = vld [vmem:[#allocation6 + $0x188] sm:$0xff]
        %v415 = vld [vmem:[#allocation6 + $0x190] sm:$0xff]
        %v416 = vld [vmem:[#allocation6 + $0x198] sm:$0xff]
        %v417 = vld [vmem:[#allocation6 + $0x1a0] sm:$0xff]
        %v418 = vld [vmem:[#allocation6 + $0x1a8] sm:$0xff]
        %v419 = vld [vmem:[#allocation6 + $0x1b0] sm:$0xff]
        %v420 = vld [vmem:[#allocation6 + $0x1b8] sm:$0xff]
        %v421 = vld [vmem:[#allocation6 + $0x1c0] sm:$0xff]
        %v422 = vld [vmem:[#allocation6 + $0x1c8] sm:$0xff]
        %v423 = vld [vmem:[#allocation6 + $0x1d0] sm:$0xff]
        %v424 = vld [vmem:[#allocation6 + $0x1d8] sm:$0xff]
        %v425 = vld [vmem:[#allocation6 + $0x1e0] sm:$0xff]
        %v426 = vld [vmem:[#allocation6 + $0x1e8] sm:$0xff]
        %v427 = vld [vmem:[#allocation6 + $0x1f0] sm:$0xff]
        %v428 = vld [vmem:[#allocation6 + $0x1f8] sm:$0xff]
        %v429 = vld [vmem:[#allocation6 + $0x200] sm:$0xff]
        %v430 = vld [vmem:[#allocation6 + $0x208] sm:$0xff]
        %v431 = vld [vmem:[#allocation6 + $0x210] sm:$0xff]
        %v432 = vld [vmem:[#allocation6 + $0x218] sm:$0xff]
        %v433 = vld [vmem:[#allocation6 + $0x220] sm:$0xff]
        %v434 = vld [vmem:[#allocation6 + $0x228] sm:$0xff]
        %v435 = vld [vmem:[#allocation6 + $0x230] sm:$0xff]
        %v436 = vld [vmem:[#allocation6 + $0x238] sm:$0xff]
        %v437 = vld [vmem:[#allocation6 + $0x240] sm:$0xff]
        %v438 = vld [vmem:[#allocation6 + $0x248] sm:$0xff]
        %v439 = vld [vmem:[#allocation6 + $0x250] sm:$0xff]
        %v440 = vld [vmem:[#allocation6 + $0x258] sm:$0xff]
        %v441 = vld [vmem:[#allocation6 + $0x260] sm:$0xff]
        %v442 = vld [vmem:[#allocation6 + $0x268] sm:$0xff]
        %v443 = vld [vmem:[#allocation6 + $0x270] sm:$0xff]
        %v444 = vld [vmem:[#allocation6 + $0x278] sm:$0xff]
        %v445 = vld [vmem:[#allocation6 + $0x280] sm:$0xff]
        %v446 = vld [vmem:[#allocation6 + $0x288] sm:$0xff]
        %v447 = vld [vmem:[#allocation6 + $0x290] sm:$0xff]
        %v448 = vld [vmem:[#allocation6 + $0x298] sm:$0xff]
        %v449 = vld [vmem:[#allocation6 + $0x2a0] sm:$0xff]
        %v450 = vld [vmem:[#allocation6 + $0x2a8] sm:$0xff]
        %v451 = vld [vmem:[#allocation6 + $0x2b0] sm:$0xff]
        %v452 = vld [vmem:[#allocation6 + $0x2b8] sm:$0xff]
        %v453 = vld [vmem:[#allocation6 + $0x2c0] sm:$0xff]
        %v454 = vld [vmem:[#allocation6 + $0x2c8] sm:$0xff]
        %v455 = vld [vmem:[#allocation6 + $0x2d0] sm:$0xff]
        %v456 = vld [vmem:[#allocation6 + $0x2d8] sm:$0xff]
        %v457 = vld [vmem:[#allocation6 + $0x2e0] sm:$0xff]
        %v458 = vld [vmem:[#allocation6 + $0x2e8] sm:$0xff]
        %v459 = vld [vmem:[#allocation6 + $0x2f0] sm:$0xff]
        %v460 = vld [vmem:[#allocation6 + $0x2f8] sm:$0xff]
        %v461 = vld [vmem:[#allocation6 + $0x300] sm:$0xff]
        %v462 = vld [vmem:[#allocation6 + $0x308] sm:$0xff]
        %v463 = vld [vmem:[#allocation6 + $0x310] sm:$0xff]
        %v464 = vld [vmem:[#allocation6 + $0x318] sm:$0xff]
        %v465 = vld [vmem:[#allocation6 + $0x320] sm:$0xff]
        %v466 = vld [vmem:[#allocation6 + $0x328] sm:$0xff]
        %v467 = vld [vmem:[#allocation6 + $0x330] sm:$0xff]
        %v468 = vld [vmem:[#allocation6 + $0x338] sm:$0xff]
        %v469 = vld [vmem:[#allocation6 + $0x340] sm:$0xff]
        %v470 = vld [vmem:[#allocation6 + $0x348] sm:$0xff]
        %v471 = vld [vmem:[#allocation6 + $0x350] sm:$0xff]
        %v472 = vld [vmem:[#allocation6 + $0x358] sm:$0xff]
        %v473 = vld [vmem:[#allocation6 + $0x360] sm:$0xff]
        %v474 = vld [vmem:[#allocation6 + $0x368] sm:$0xff]
        %v475 = vld [vmem:[#allocation6 + $0x370] sm:$0xff]
        %v476 = vld [vmem:[#allocation6 + $0x378] sm:$0xff]
        %v477 = vld [vmem:[#allocation6 + $0x380] sm:$0xff]
        %v478 = vld [vmem:[#allocation6 + $0x388] sm:$0xff]
        %v479 = vld [vmem:[#allocation6 + $0x390] sm:$0xff]
        %v480 = vld [vmem:[#allocation6 + $0x398] sm:$0xff]
        %v481 = vld [vmem:[#allocation6 + $0x3a0] sm:$0xff]
        %v482 = vld [vmem:[#allocation6 + $0x3a8] sm:$0xff]
        %v483 = vld [vmem:[#allocation6 + $0x3b0] sm:$0xff]
        %v484 = vld [vmem:[#allocation6 + $0x3b8] sm:$0xff]
        %v485 = vld [vmem:[#allocation6 + $0x3c0] sm:$0xff]
        %v486 = vld [vmem:[#allocation6 + $0x3c8] sm:$0xff]
        %v487 = vld [vmem:[#allocation6 + $0x3d0] sm:$0xff]
        %v488 = vld [vmem:[#allocation6 + $0x3d8] sm:$0xff]
        %v489 = vld [vmem:[#allocation6 + $0x3e0] sm:$0xff]
        %v490 = vld [vmem:[#allocation6 + $0x3e8] sm:$0xff]
        %v491 = vld [vmem:[#allocation6 + $0x3f0] sm:$0xff]
        %v492 = vld [vmem:[#allocation6 + $0x3f8] sm:$0xff]
        %v493 = vld [vmem:[#allocation6 + $0x400] sm:$0xff]
        %v494 = vld [vmem:[#allocation6 + $0x408] sm:$0xff]
        %v495 = vld [vmem:[#allocation6 + $0x410] sm:$0xff]
        %v496 = vld [vmem:[#allocation6 + $0x418] sm:$0xff]
        %v497 = vld [vmem:[#allocation6 + $0x420] sm:$0xff]
        %v498 = vld [vmem:[#allocation6 + $0x428] sm:$0xff]
        %v499 = vld [vmem:[#allocation6 + $0x430] sm:$0xff]
        %v500 = vld [vmem:[#allocation6 + $0x438] sm:$0xff]
        %v501 = vld [vmem:[#allocation6 + $0x440] sm:$0xff]
        %v502 = vld [vmem:[#allocation6 + $0x448] sm:$0xff]
        %v503 = vld [vmem:[#allocation6 + $0x450] sm:$0xff]
        %v504 = vld [vmem:[#allocation6 + $0x458] sm:$0xff]
        %v505 = vld [vmem:[#allocation6 + $0x460] sm:$0xff]
        %v506 = vld [vmem:[#allocation6 + $0x468] sm:$0xff]
        %v507 = vld [vmem:[#allocation6 + $0x470] sm:$0xff]
        %v508 = vld [vmem:[#allocation6 + $0x478] sm:$0xff]
        %509 = vmatpush.msra.mxu0 %v410
        %510 = vmatpush.msra.mxu0 %v407
        %511 = vmatpush.msra.mxu0 %v404
        %512 = vmatpush.msra.mxu0 %v401
        %513 = vmatpush.msra.mxu0 %v398
        %514 = vmatpush.msra.mxu0 %v395
        %515 = vmatpush.msra.mxu0 %v392
        %516 = vmatpush.msra.mxu0 %v389
        %517 = vmatpush.msra.mxu0 %v386
        %518 = vmatpush.msra.mxu0 %v383
        %519 = vmatpush.msra.mxu0 %v380
        %520 = vmatpush.msra.mxu0 %v377
        %521 = vmatpush.msra.mxu0 %v374
        %522 = vmatpush.msra.mxu0 %v371
        %523 = vmatpush.msra.mxu0 %v368
        %524 = vmatpush.msra.mxu0 %v365
        %525 = vmatmul.f32.gmra.mxu0 %v269
        %v526 = vpop.f32.mrf.mxu0
        %v527 = vadd.f32 0.0, %v526
        %528 = vmatmul.f32.gmra.mxu0 %v272
        %v529 = vpop.f32.mrf.mxu0
        %v530 = vadd.f32 0.0, %v529
        %531 = vmatmul.f32.gmra.mxu0 %v275
        %v532 = vpop.f32.mrf.mxu0
        %v533 = vadd.f32 0.0, %v532
        %534 = vmatmul.f32.gmra.mxu0 %v278
        %v535 = vpop.f32.mrf.mxu0
        %v536 = vadd.f32 0.0, %v535
        %537 = vmatmul.f32.gmra.mxu0 %v281
        %v538 = vpop.f32.mrf.mxu0
        %v539 = vadd.f32 0.0, %v538
        %540 = vmatmul.f32.gmra.mxu0 %v284
        %v541 = vpop.f32.mrf.mxu0
        %v542 = vadd.f32 0.0, %v541
        %543 = vmatmul.f32.gmra.mxu0 %v287
        %v544 = vpop.f32.mrf.mxu0
        %v545 = vadd.f32 0.0, %v544
        %546 = vmatmul.f32.gmra.mxu0 %v290
        %v547 = vpop.f32.mrf.mxu0
        %v548 = vadd.f32 0.0, %v547
        %549 = vmatmul.f32.gmra.mxu0 %v293
        %v550 = vpop.f32.mrf.mxu0
        %v551 = vadd.f32 0.0, %v550
        %552 = vmatmul.f32.gmra.mxu0 %v296
        %v553 = vpop.f32.mrf.mxu0
        %v554 = vadd.f32 0.0, %v553
        %555 = vmatmul.f32.gmra.mxu0 %v299
        %v556 = vpop.f32.mrf.mxu0
        %v557 = vadd.f32 0.0, %v556
        %558 = vmatmul.f32.gmra.mxu0 %v302
        %v559 = vpop.f32.mrf.mxu0
        %v560 = vadd.f32 0.0, %v559
        %561 = vmatmul.f32.gmra.mxu0 %v305
        %v562 = vpop.f32.mrf.mxu0
        %v563 = vadd.f32 0.0, %v562
        %564 = vmatmul.f32.gmra.mxu0 %v308
        %v565 = vpop.f32.mrf.mxu0
        %v566 = vadd.f32 0.0, %v565
        %567 = vmatmul.f32.gmra.mxu0 %v311
        %v568 = vpop.f32.mrf.mxu0
        %v569 = vadd.f32 0.0, %v568
        %570 = vmatmul.f32.gmra.mxu0 %v314
        %v571 = vpop.f32.mrf.mxu0
        %v572 = vadd.f32 0.0, %v571
        %573 = vmatmul.f32.gmra.mxu0 %v317
        %v574 = vpop.f32.mrf.mxu0
        %v575 = vadd.f32 0.0, %v574
        %576 = vmatmul.f32.gmra.mxu0 %v320
        %v577 = vpop.f32.mrf.mxu0
        %v578 = vadd.f32 0.0, %v577
        %579 = vmatmul.f32.gmra.mxu0 %v323
        %v580 = vpop.f32.mrf.mxu0
        %v581 = vadd.f32 0.0, %v580
        %582 = vmatmul.f32.gmra.mxu0 %v326
        %v583 = vpop.f32.mrf.mxu0
        %v584 = vadd.f32 0.0, %v583
        %585 = vmatmul.f32.gmra.mxu0 %v329
        %v586 = vpop.f32.mrf.mxu0
        %v587 = vadd.f32 0.0, %v586
        %588 = vmatmul.f32.gmra.mxu0 %v332
        %v589 = vpop.f32.mrf.mxu0
        %v590 = vadd.f32 0.0, %v589
        %591 = vmatmul.f32.gmra.mxu0 %v335
        %v592 = vpop.f32.mrf.mxu0
        %v593 = vadd.f32 0.0, %v592
        %594 = vmatmul.f32.gmra.mxu0 %v338
        %v595 = vpop.f32.mrf.mxu0
        %v596 = vadd.f32 0.0, %v595
        %597 = vmatmul.f32.gmra.mxu0 %v341
        %v598 = vpop.f32.mrf.mxu0
        %v599 = vadd.f32 0.0, %v598
        %600 = vmatmul.f32.gmra.mxu0 %v344
        %v601 = vpop.f32.mrf.mxu0
        %v602 = vadd.f32 0.0, %v601
        %603 = vmatmul.f32.gmra.mxu0 %v347
        %v604 = vpop.f32.mrf.mxu0
        %v605 = vadd.f32 0.0, %v604
        %606 = vmatmul.f32.gmra.mxu0 %v350
        %v607 = vpop.f32.mrf.mxu0
        %v608 = vadd.f32 0.0, %v607
        %609 = vmatmul.f32.gmra.mxu0 %v353
        %v610 = vpop.f32.mrf.mxu0
        %v611 = vadd.f32 0.0, %v610
        %612 = vmatmul.f32.gmra.mxu0 %v356
        %v613 = vpop.f32.mrf.mxu0
        %v614 = vadd.f32 0.0, %v613
        %615 = vmatmul.f32.gmra.mxu0 %v359
        %v616 = vpop.f32.mrf.mxu0
        %v617 = vadd.f32 0.0, %v616
        %618 = vmatmul.f32.gmra.mxu0 %v362
        %v619 = vpop.f32.mrf.mxu0
        %v620 = vadd.f32 0.0, %v619
        %621 = vdwg.mxu0
        %622 = vmatpush.msra.mxu0 %v458
        %623 = vmatpush.msra.mxu0 %v455
        %624 = vmatpush.msra.mxu0 %v452
        %625 = vmatpush.msra.mxu0 %v449
        %626 = vmatpush.msra.mxu0 %v446
        %627 = vmatpush.msra.mxu0 %v443
        %628 = vmatpush.msra.mxu0 %v440
        %629 = vmatpush.msra.mxu0 %v437
        %630 = vmatpush.msra.mxu0 %v434
        %631 = vmatpush.msra.mxu0 %v431
        %632 = vmatpush.msra.mxu0 %v428
        %633 = vmatpush.msra.mxu0 %v425
        %634 = vmatpush.msra.mxu0 %v422
        %635 = vmatpush.msra.mxu0 %v419
        %636 = vmatpush.msra.mxu0 %v416
        %637 = vmatpush.msra.mxu0 %v413
        %638 = vmatmul.f32.gmra.mxu0 %v270
        %v639 = vpop.f32.mrf.mxu0
        %v640 = vadd.f32 %v527, %v639
        %641 = vmatmul.f32.gmra.mxu0 %v273
        %v642 = vpop.f32.mrf.mxu0
        %v643 = vadd.f32 %v530, %v642
        %644 = vmatmul.f32.gmra.mxu0 %v276
        %v645 = vpop.f32.mrf.mxu0
        %v646 = vadd.f32 %v533, %v645
        %647 = vmatmul.f32.gmra.mxu0 %v279
        %v648 = vpop.f32.mrf.mxu0
        %v649 = vadd.f32 %v536, %v648
        %650 = vmatmul.f32.gmra.mxu0 %v282
        %v651 = vpop.f32.mrf.mxu0
        %v652 = vadd.f32 %v539, %v651
        %653 = vmatmul.f32.gmra.mxu0 %v285
        %v654 = vpop.f32.mrf.mxu0
        %v655 = vadd.f32 %v542, %v654
        %656 = vmatmul.f32.gmra.mxu0 %v288
        %v657 = vpop.f32.mrf.mxu0
        %v658 = vadd.f32 %v545, %v657
        %659 = vmatmul.f32.gmra.mxu0 %v291
        %v660 = vpop.f32.mrf.mxu0
        %v661 = vadd.f32 %v548, %v660
        %662 = vmatmul.f32.gmra.mxu0 %v294
        %v663 = vpop.f32.mrf.mxu0
        %v664 = vadd.f32 %v551, %v663
        %665 = vmatmul.f32.gmra.mxu0 %v297
        %v666 = vpop.f32.mrf.mxu0
        %v667 = vadd.f32 %v554, %v666
        %668 = vmatmul.f32.gmra.mxu0 %v300
        %v669 = vpop.f32.mrf.mxu0
        %v670 = vadd.f32 %v557, %v669
        %671 = vmatmul.f32.gmra.mxu0 %v303
        %v672 = vpop.f32.mrf.mxu0
        %v673 = vadd.f32 %v560, %v672
        %674 = vmatmul.f32.gmra.mxu0 %v306
        %v675 = vpop.f32.mrf.mxu0
        %v676 = vadd.f32 %v563, %v675
        %677 = vmatmul.f32.gmra.mxu0 %v309
        %v678 = vpop.f32.mrf.mxu0
        %v679 = vadd.f32 %v566, %v678
        %680 = vmatmul.f32.gmra.mxu0 %v312
        %v681 = vpop.f32.mrf.mxu0
        %v682 = vadd.f32 %v569, %v681
        %683 = vmatmul.f32.gmra.mxu0 %v315
        %v684 = vpop.f32.mrf.mxu0
        %v685 = vadd.f32 %v572, %v684
        %686 = vmatmul.f32.gmra.mxu0 %v318
        %v687 = vpop.f32.mrf.mxu0
        %v688 = vadd.f32 %v575, %v687
        %689 = vmatmul.f32.gmra.mxu0 %v321
        %v690 = vpop.f32.mrf.mxu0
        %v691 = vadd.f32 %v578, %v690
        %692 = vmatmul.f32.gmra.mxu0 %v324
        %v693 = vpop.f32.mrf.mxu0
        %v694 = vadd.f32 %v581, %v693
        %695 = vmatmul.f32.gmra.mxu0 %v327
        %v696 = vpop.f32.mrf.mxu0
        %v697 = vadd.f32 %v584, %v696
        %698 = vmatmul.f32.gmra.mxu0 %v330
        %v699 = vpop.f32.mrf.mxu0
        %v700 = vadd.f32 %v587, %v699
        %701 = vmatmul.f32.gmra.mxu0 %v333
        %v702 = vpop.f32.mrf.mxu0
        %v703 = vadd.f32 %v590, %v702
        %704 = vmatmul.f32.gmra.mxu0 %v336
        %v705 = vpop.f32.mrf.mxu0
        %v706 = vadd.f32 %v593, %v705
        %707 = vmatmul.f32.gmra.mxu0 %v339
        %v708 = vpop.f32.mrf.mxu0
        %v709 = vadd.f32 %v596, %v708
        %710 = vmatmul.f32.gmra.mxu0 %v342
        %v711 = vpop.f32.mrf.mxu0
        %v712 = vadd.f32 %v599, %v711
        %713 = vmatmul.f32.gmra.mxu0 %v345
        %v714 = vpop.f32.mrf.mxu0
        %v715 = vadd.f32 %v602, %v714
        %716 = vmatmul.f32.gmra.mxu0 %v348
        %v717 = vpop.f32.mrf.mxu0
        %v718 = vadd.f32 %v605, %v717
        %719 = vmatmul.f32.gmra.mxu0 %v351
        %v720 = vpop.f32.mrf.mxu0
        %v721 = vadd.f32 %v608, %v720
        %722 = vmatmul.f32.gmra.mxu0 %v354
        %v723 = vpop.f32.mrf.mxu0
        %v724 = vadd.f32 %v611, %v723
        %725 = vmatmul.f32.gmra.mxu0 %v357
        %v726 = vpop.f32.mrf.mxu0
        %v727 = vadd.f32 %v614, %v726
        %728 = vmatmul.f32.gmra.mxu0 %v360
        %v729 = vpop.f32.mrf.mxu0
        %v730 = vadd.f32 %v617, %v729
        %731 = vmatmul.f32.gmra.mxu0 %v363
        %v732 = vpop.f32.mrf.mxu0
        %v733 = vadd.f32 %v620, %v732
        %734 = vdwg.mxu0
        %735 = vmatpush.msra.mxu0 %v506
        %736 = vmatpush.msra.mxu0 %v503
        %737 = vmatpush.msra.mxu0 %v500
        %738 = vmatpush.msra.mxu0 %v497
        %739 = vmatpush.msra.mxu0 %v494
        %740 = vmatpush.msra.mxu0 %v491
        %741 = vmatpush.msra.mxu0 %v488
        %742 = vmatpush.msra.mxu0 %v485
        %743 = vmatpush.msra.mxu0 %v482
        %744 = vmatpush.msra.mxu0 %v479
        %745 = vmatpush.msra.mxu0 %v476
        %746 = vmatpush.msra.mxu0 %v473
        %747 = vmatpush.msra.mxu0 %v470
        %748 = vmatpush.msra.mxu0 %v467
        %749 = vmatpush.msra.mxu0 %v464
        %750 = vmatpush.msra.mxu0 %v461
        %751 = vmatmul.f32.gmra.mxu0 %v271
        %v752 = vpop.f32.mrf.mxu0
        %v753 = vadd.f32 %v640, %v752
        %754 = vmatmul.f32.gmra.mxu0 %v274
        %v755 = vpop.f32.mrf.mxu0
        %v756 = vadd.f32 %v643, %v755
        %757 = vmatmul.f32.gmra.mxu0 %v277
        %v758 = vpop.f32.mrf.mxu0
        %v759 = vadd.f32 %v646, %v758
        %760 = vmatmul.f32.gmra.mxu0 %v280
        %v761 = vpop.f32.mrf.mxu0
        %v762 = vadd.f32 %v649, %v761
        %763 = vmatmul.f32.gmra.mxu0 %v283
        %v764 = vpop.f32.mrf.mxu0
        %v765 = vadd.f32 %v652, %v764
        %766 = vmatmul.f32.gmra.mxu0 %v286
        %v767 = vpop.f32.mrf.mxu0
        %v768 = vadd.f32 %v655, %v767
        %769 = vmatmul.f32.gmra.mxu0 %v289
        %v770 = vpop.f32.mrf.mxu0
        %v771 = vadd.f32 %v658, %v770
        %772 = vmatmul.f32.gmra.mxu0 %v292
        %v773 = vpop.f32.mrf.mxu0
        %v774 = vadd.f32 %v661, %v773
        %775 = vmatmul.f32.gmra.mxu0 %v295
        %v776 = vpop.f32.mrf.mxu0
        %v777 = vadd.f32 %v664, %v776
        %778 = vmatmul.f32.gmra.mxu0 %v298
        %v779 = vpop.f32.mrf.mxu0
        %v780 = vadd.f32 %v667, %v779
        %781 = vmatmul.f32.gmra.mxu0 %v301
        %v782 = vpop.f32.mrf.mxu0
        %v783 = vadd.f32 %v670, %v782
        %784 = vmatmul.f32.gmra.mxu0 %v304
        %v785 = vpop.f32.mrf.mxu0
        %v786 = vadd.f32 %v673, %v785
        %787 = vmatmul.f32.gmra.mxu0 %v307
        %v788 = vpop.f32.mrf.mxu0
        %v789 = vadd.f32 %v676, %v788
        %790 = vmatmul.f32.gmra.mxu0 %v310
        %v791 = vpop.f32.mrf.mxu0
        %v792 = vadd.f32 %v679, %v791
        %793 = vmatmul.f32.gmra.mxu0 %v313
        %v794 = vpop.f32.mrf.mxu0
        %v795 = vadd.f32 %v682, %v794
        %796 = vmatmul.f32.gmra.mxu0 %v316
        %v797 = vpop.f32.mrf.mxu0
        %v798 = vadd.f32 %v685, %v797
        %799 = vmatmul.f32.gmra.mxu0 %v319
        %v800 = vpop.f32.mrf.mxu0
        %v801 = vadd.f32 %v688, %v800
        %802 = vmatmul.f32.gmra.mxu0 %v322
        %v803 = vpop.f32.mrf.mxu0
        %v804 = vadd.f32 %v691, %v803
        %805 = vmatmul.f32.gmra.mxu0 %v325
        %v806 = vpop.f32.mrf.mxu0
        %v807 = vadd.f32 %v694, %v806
        %808 = vmatmul.f32.gmra.mxu0 %v328
        %v809 = vpop.f32.mrf.mxu0
        %v810 = vadd.f32 %v697, %v809
        %811 = vmatmul.f32.gmra.mxu0 %v331
        %v812 = vpop.f32.mrf.mxu0
        %v813 = vadd.f32 %v700, %v812
        %814 = vmatmul.f32.gmra.mxu0 %v334
        %v815 = vpop.f32.mrf.mxu0
        %v816 = vadd.f32 %v703, %v815
        %817 = vmatmul.f32.gmra.mxu0 %v337
        %v818 = vpop.f32.mrf.mxu0
        %v819 = vadd.f32 %v706, %v818
        %820 = vmatmul.f32.gmra.mxu0 %v340
        %v821 = vpop.f32.mrf.mxu0
        %v822 = vadd.f32 %v709, %v821
        %823 = vmatmul.f32.gmra.mxu0 %v343
        %v824 = vpop.f32.mrf.mxu0
        %v825 = vadd.f32 %v712, %v824
        %826 = vmatmul.f32.gmra.mxu0 %v346
        %v827 = vpop.f32.mrf.mxu0
        %v828 = vadd.f32 %v715, %v827
        %829 = vmatmul.f32.gmra.mxu0 %v349
        %v830 = vpop.f32.mrf.mxu0
        %v831 = vadd.f32 %v718, %v830
        %832 = vmatmul.f32.gmra.mxu0 %v352
        %v833 = vpop.f32.mrf.mxu0
        %v834 = vadd.f32 %v721, %v833
        %835 = vmatmul.f32.gmra.mxu0 %v355
        %v836 = vpop.f32.mrf.mxu0
        %v837 = vadd.f32 %v724, %v836
        %838 = vmatmul.f32.gmra.mxu0 %v358
        %v839 = vpop.f32.mrf.mxu0
        %v840 = vadd.f32 %v727, %v839
        %841 = vmatmul.f32.gmra.mxu0 %v361
        %v842 = vpop.f32.mrf.mxu0
        %v843 = vadd.f32 %v730, %v842
        %844 = vmatmul.f32.gmra.mxu0 %v364
        %v845 = vpop.f32.mrf.mxu0
        %v846 = vadd.f32 %v733, %v845
        %847 = vdwg.mxu0
        %848 = vmatpush.msra.mxu0 %v411
        %849 = vmatpush.msra.mxu0 %v408
        %850 = vmatpush.msra.mxu0 %v405
        %851 = vmatpush.msra.mxu0 %v402
        %852 = vmatpush.msra.mxu0 %v399
        %853 = vmatpush.msra.mxu0 %v396
        %854 = vmatpush.msra.mxu0 %v393
        %855 = vmatpush.msra.mxu0 %v390
        %856 = vmatpush.msra.mxu0 %v387
        %857 = vmatpush.msra.mxu0 %v384
        %858 = vmatpush.msra.mxu0 %v381
        %859 = vmatpush.msra.mxu0 %v378
        %860 = vmatpush.msra.mxu0 %v375
        %861 = vmatpush.msra.mxu0 %v372
        %862 = vmatpush.msra.mxu0 %v369
        %863 = vmatpush.msra.mxu0 %v366
        %864 = vmatmul.f32.gmra.mxu0 %v269
        %v865 = vpop.f32.mrf.mxu0
        %v866 = vadd.f32 0.0, %v865
        %867 = vmatmul.f32.gmra.mxu0 %v272
        %v868 = vpop.f32.mrf.mxu0
        %v869 = vadd.f32 0.0, %v868
        %870 = vmatmul.f32.gmra.mxu0 %v275
        %v871 = vpop.f32.mrf.mxu0
        %v872 = vadd.f32 0.0, %v871
        %873 = vmatmul.f32.gmra.mxu0 %v278
        %v874 = vpop.f32.mrf.mxu0
        %v875 = vadd.f32 0.0, %v874
        %876 = vmatmul.f32.gmra.mxu0 %v281
        %v877 = vpop.f32.mrf.mxu0
        %v878 = vadd.f32 0.0, %v877
        %879 = vmatmul.f32.gmra.mxu0 %v284
        %v880 = vpop.f32.mrf.mxu0
        %v881 = vadd.f32 0.0, %v880
        %882 = vmatmul.f32.gmra.mxu0 %v287
        %v883 = vpop.f32.mrf.mxu0
        %v884 = vadd.f32 0.0, %v883
        %885 = vmatmul.f32.gmra.mxu0 %v290
        %v886 = vpop.f32.mrf.mxu0
        %v887 = vadd.f32 0.0, %v886
        %888 = vmatmul.f32.gmra.mxu0 %v293
        %v889 = vpop.f32.mrf.mxu0
        %v890 = vadd.f32 0.0, %v889
        %891 = vmatmul.f32.gmra.mxu0 %v296
        %v892 = vpop.f32.mrf.mxu0
        %v893 = vadd.f32 0.0, %v892
        %894 = vmatmul.f32.gmra.mxu0 %v299
        %v895 = vpop.f32.mrf.mxu0
        %v896 = vadd.f32 0.0, %v895
        %897 = vmatmul.f32.gmra.mxu0 %v302
        %v898 = vpop.f32.mrf.mxu0
        %v899 = vadd.f32 0.0, %v898
        %900 = vmatmul.f32.gmra.mxu0 %v305
        %v901 = vpop.f32.mrf.mxu0
        %v902 = vadd.f32 0.0, %v901
        %903 = vmatmul.f32.gmra.mxu0 %v308
        %v904 = vpop.f32.mrf.mxu0
        %v905 = vadd.f32 0.0, %v904
        %906 = vmatmul.f32.gmra.mxu0 %v311
        %v907 = vpop.f32.mrf.mxu0
        %v908 = vadd.f32 0.0, %v907
        %909 = vmatmul.f32.gmra.mxu0 %v314
        %v910 = vpop.f32.mrf.mxu0
        %v911 = vadd.f32 0.0, %v910
        %912 = vmatmul.f32.gmra.mxu0 %v317
        %v913 = vpop.f32.mrf.mxu0
        %v914 = vadd.f32 0.0, %v913
        %915 = vmatmul.f32.gmra.mxu0 %v320
        %v916 = vpop.f32.mrf.mxu0
        %v917 = vadd.f32 0.0, %v916
        %918 = vmatmul.f32.gmra.mxu0 %v323
        %v919 = vpop.f32.mrf.mxu0
        %v920 = vadd.f32 0.0, %v919
        %921 = vmatmul.f32.gmra.mxu0 %v326
        %v922 = vpop.f32.mrf.mxu0
        %v923 = vadd.f32 0.0, %v922
        %924 = vmatmul.f32.gmra.mxu0 %v329
        %v925 = vpop.f32.mrf.mxu0
        %v926 = vadd.f32 0.0, %v925
        %927 = vmatmul.f32.gmra.mxu0 %v332
        %v928 = vpop.f32.mrf.mxu0
        %v929 = vadd.f32 0.0, %v928
        %930 = vmatmul.f32.gmra.mxu0 %v335
        %v931 = vpop.f32.mrf.mxu0
        %v932 = vadd.f32 0.0, %v931
        %933 = vmatmul.f32.gmra.mxu0 %v338
        %v934 = vpop.f32.mrf.mxu0
        %v935 = vadd.f32 0.0, %v934
        %936 = vmatmul.f32.gmra.mxu0 %v341
        %v937 = vpop.f32.mrf.mxu0
        %v938 = vadd.f32 0.0, %v937
        %939 = vmatmul.f32.gmra.mxu0 %v344
        %v940 = vpop.f32.mrf.mxu0
        %v941 = vadd.f32 0.0, %v940
        %942 = vmatmul.f32.gmra.mxu0 %v347
        %v943 = vpop.f32.mrf.mxu0
        %v944 = vadd.f32 0.0, %v943
        %945 = vmatmul.f32.gmra.mxu0 %v350
        %v946 = vpop.f32.mrf.mxu0
        %v947 = vadd.f32 0.0, %v946
        %948 = vmatmul.f32.gmra.mxu0 %v353
        %v949 = vpop.f32.mrf.mxu0
        %v950 = vadd.f32 0.0, %v949
        %951 = vmatmul.f32.gmra.mxu0 %v356
        %v952 = vpop.f32.mrf.mxu0
        %v953 = vadd.f32 0.0, %v952
        %954 = vmatmul.f32.gmra.mxu0 %v359
        %v955 = vpop.f32.mrf.mxu0
        %v956 = vadd.f32 0.0, %v955
        %957 = vmatmul.f32.gmra.mxu0 %v362
        %v958 = vpop.f32.mrf.mxu0
        %v959 = vadd.f32 0.0, %v958
        %960 = vdwg.mxu0
        %961 = vmatpush.msra.mxu0 %v459
        %962 = vmatpush.msra.mxu0 %v456
        %963 = vmatpush.msra.mxu0 %v453
        %964 = vmatpush.msra.mxu0 %v450
        %965 = vmatpush.msra.mxu0 %v447
        %966 = vmatpush.msra.mxu0 %v444
        %967 = vmatpush.msra.mxu0 %v441
        %968 = vmatpush.msra.mxu0 %v438
        %969 = vmatpush.msra.mxu0 %v435
        %970 = vmatpush.msra.mxu0 %v432
        %971 = vmatpush.msra.mxu0 %v429
        %972 = vmatpush.msra.mxu0 %v426
        %973 = vmatpush.msra.mxu0 %v423
        %974 = vmatpush.msra.mxu0 %v420
        %975 = vmatpush.msra.mxu0 %v417
        %976 = vmatpush.msra.mxu0 %v414
        %977 = vmatmul.f32.gmra.mxu0 %v270
        %v978 = vpop.f32.mrf.mxu0
        %v979 = vadd.f32 %v866, %v978
        %980 = vmatmul.f32.gmra.mxu0 %v273
        %v981 = vpop.f32.mrf.mxu0
        %v982 = vadd.f32 %v869, %v981
        %983 = vmatmul.f32.gmra.mxu0 %v276
        %v984 = vpop.f32.mrf.mxu0
        %v985 = vadd.f32 %v872, %v984
        %986 = vmatmul.f32.gmra.mxu0 %v279
        %v987 = vpop.f32.mrf.mxu0
        %v988 = vadd.f32 %v875, %v987
        %989 = vmatmul.f32.gmra.mxu0 %v282
        %v990 = vpop.f32.mrf.mxu0
        %v991 = vadd.f32 %v878, %v990
        %992 = vmatmul.f32.gmra.mxu0 %v285
        %v993 = vpop.f32.mrf.mxu0
        %v994 = vadd.f32 %v881, %v993
        %995 = vmatmul.f32.gmra.mxu0 %v288
        %v996 = vpop.f32.mrf.mxu0
        %v997 = vadd.f32 %v884, %v996
        %998 = vmatmul.f32.gmra.mxu0 %v291
        %v999 = vpop.f32.mrf.mxu0
        %v1000 = vadd.f32 %v887, %v999
        %1001 = vmatmul.f32.gmra.mxu0 %v294
        %v1002 = vpop.f32.mrf.mxu0
        %v1003 = vadd.f32 %v890, %v1002
        %1004 = vmatmul.f32.gmra.mxu0 %v297
        %v1005 = vpop.f32.mrf.mxu0
        %v1006 = vadd.f32 %v893, %v1005
        %1007 = vmatmul.f32.gmra.mxu0 %v300
        %v1008 = vpop.f32.mrf.mxu0
        %v1009 = vadd.f32 %v896, %v1008
        %1010 = vmatmul.f32.gmra.mxu0 %v303
        %v1011 = vpop.f32.mrf.mxu0
        %v1012 = vadd.f32 %v899, %v1011
        %1013 = vmatmul.f32.gmra.mxu0 %v306
        %v1014 = vpop.f32.mrf.mxu0
        %v1015 = vadd.f32 %v902, %v1014
        %1016 = vmatmul.f32.gmra.mxu0 %v309
        %v1017 = vpop.f32.mrf.mxu0
        %v1018 = vadd.f32 %v905, %v1017
        %1019 = vmatmul.f32.gmra.mxu0 %v312
        %v1020 = vpop.f32.mrf.mxu0
        %v1021 = vadd.f32 %v908, %v1020
        %1022 = vmatmul.f32.gmra.mxu0 %v315
        %v1023 = vpop.f32.mrf.mxu0
        %v1024 = vadd.f32 %v911, %v1023
        %1025 = vmatmul.f32.gmra.mxu0 %v318
        %v1026 = vpop.f32.mrf.mxu0
        %v1027 = vadd.f32 %v914, %v1026
        %1028 = vmatmul.f32.gmra.mxu0 %v321
        %v1029 = vpop.f32.mrf.mxu0
        %v1030 = vadd.f32 %v917, %v1029
        %1031 = vmatmul.f32.gmra.mxu0 %v324
        %v1032 = vpop.f32.mrf.mxu0
        %v1033 = vadd.f32 %v920, %v1032
        %1034 = vmatmul.f32.gmra.mxu0 %v327
        %v1035 = vpop.f32.mrf.mxu0
        %v1036 = vadd.f32 %v923, %v1035
        %1037 = vmatmul.f32.gmra.mxu0 %v330
        %v1038 = vpop.f32.mrf.mxu0
        %v1039 = vadd.f32 %v926, %v1038
        %1040 = vmatmul.f32.gmra.mxu0 %v333
        %v1041 = vpop.f32.mrf.mxu0
        %v1042 = vadd.f32 %v929, %v1041
        %1043 = vmatmul.f32.gmra.mxu0 %v336
        %v1044 = vpop.f32.mrf.mxu0
        %v1045 = vadd.f32 %v932, %v1044
        %1046 = vmatmul.f32.gmra.mxu0 %v339
        %v1047 = vpop.f32.mrf.mxu0
        %v1048 = vadd.f32 %v935, %v1047
        %1049 = vmatmul.f32.gmra.mxu0 %v342
        %v1050 = vpop.f32.mrf.mxu0
        %v1051 = vadd.f32 %v938, %v1050
        %1052 = vmatmul.f32.gmra.mxu0 %v345
        %v1053 = vpop.f32.mrf.mxu0
        %v1054 = vadd.f32 %v941, %v1053
        %1055 = vmatmul.f32.gmra.mxu0 %v348
        %v1056 = vpop.f32.mrf.mxu0
        %v1057 = vadd.f32 %v944, %v1056
        %1058 = vmatmul.f32.gmra.mxu0 %v351
        %v1059 = vpop.f32.mrf.mxu0
        %v1060 = vadd.f32 %v947, %v1059
        %1061 = vmatmul.f32.gmra.mxu0 %v354
        %v1062 = vpop.f32.mrf.mxu0
        %v1063 = vadd.f32 %v950, %v1062
        %1064 = vmatmul.f32.gmra.mxu0 %v357
        %v1065 = vpop.f32.mrf.mxu0
        %v1066 = vadd.f32 %v953, %v1065
        %1067 = vmatmul.f32.gmra.mxu0 %v360
        %v1068 = vpop.f32.mrf.mxu0
        %v1069 = vadd.f32 %v956, %v1068
        %1070 = vmatmul.f32.gmra.mxu0 %v363
        %v1071 = vpop.f32.mrf.mxu0
        %v1072 = vadd.f32 %v959, %v1071
        %1073 = vdwg.mxu0
        %1074 = vmatpush.msra.mxu0 %v507
        %1075 = vmatpush.msra.mxu0 %v504
        %1076 = vmatpush.msra.mxu0 %v501
        %1077 = vmatpush.msra.mxu0 %v498
        %1078 = vmatpush.msra.mxu0 %v495
        %1079 = vmatpush.msra.mxu0 %v492
        %1080 = vmatpush.msra.mxu0 %v489
        %1081 = vmatpush.msra.mxu0 %v486
        %1082 = vmatpush.msra.mxu0 %v483
        %1083 = vmatpush.msra.mxu0 %v480
        %1084 = vmatpush.msra.mxu0 %v477
        %1085 = vmatpush.msra.mxu0 %v474
        %1086 = vmatpush.msra.mxu0 %v471
        %1087 = vmatpush.msra.mxu0 %v468
        %1088 = vmatpush.msra.mxu0 %v465
        %1089 = vmatpush.msra.mxu0 %v462
        %1090 = vmatmul.f32.gmra.mxu0 %v271
        %v1091 = vpop.f32.mrf.mxu0
        %v1092 = vadd.f32 %v979, %v1091
        %1093 = vmatmul.f32.gmra.mxu0 %v274
        %v1094 = vpop.f32.mrf.mxu0
        %v1095 = vadd.f32 %v982, %v1094
        %1096 = vmatmul.f32.gmra.mxu0 %v277
        %v1097 = vpop.f32.mrf.mxu0
        %v1098 = vadd.f32 %v985, %v1097
        %1099 = vmatmul.f32.gmra.mxu0 %v280
        %v1100 = vpop.f32.mrf.mxu0
        %v1101 = vadd.f32 %v988, %v1100
        %1102 = vmatmul.f32.gmra.mxu0 %v283
        %v1103 = vpop.f32.mrf.mxu0
        %v1104 = vadd.f32 %v991, %v1103
        %1105 = vmatmul.f32.gmra.mxu0 %v286
        %v1106 = vpop.f32.mrf.mxu0
        %v1107 = vadd.f32 %v994, %v1106
        %1108 = vmatmul.f32.gmra.mxu0 %v289
        %v1109 = vpop.f32.mrf.mxu0
        %v1110 = vadd.f32 %v997, %v1109
        %1111 = vmatmul.f32.gmra.mxu0 %v292
        %v1112 = vpop.f32.mrf.mxu0
        %v1113 = vadd.f32 %v1000, %v1112
        %1114 = vmatmul.f32.gmra.mxu0 %v295
        %v1115 = vpop.f32.mrf.mxu0
        %v1116 = vadd.f32 %v1003, %v1115
        %1117 = vmatmul.f32.gmra.mxu0 %v298
        %v1118 = vpop.f32.mrf.mxu0
        %v1119 = vadd.f32 %v1006, %v1118
        %1120 = vmatmul.f32.gmra.mxu0 %v301
        %v1121 = vpop.f32.mrf.mxu0
        %v1122 = vadd.f32 %v1009, %v1121
        %1123 = vmatmul.f32.gmra.mxu0 %v304
        %v1124 = vpop.f32.mrf.mxu0
        %v1125 = vadd.f32 %v1012, %v1124
        %1126 = vmatmul.f32.gmra.mxu0 %v307
        %v1127 = vpop.f32.mrf.mxu0
        %v1128 = vadd.f32 %v1015, %v1127
        %1129 = vmatmul.f32.gmra.mxu0 %v310
        %v1130 = vpop.f32.mrf.mxu0
        %v1131 = vadd.f32 %v1018, %v1130
        %1132 = vmatmul.f32.gmra.mxu0 %v313
        %v1133 = vpop.f32.mrf.mxu0
        %v1134 = vadd.f32 %v1021, %v1133
        %1135 = vmatmul.f32.gmra.mxu0 %v316
        %v1136 = vpop.f32.mrf.mxu0
        %v1137 = vadd.f32 %v1024, %v1136
        %1138 = vmatmul.f32.gmra.mxu0 %v319
        %v1139 = vpop.f32.mrf.mxu0
        %v1140 = vadd.f32 %v1027, %v1139
        %1141 = vmatmul.f32.gmra.mxu0 %v322
        %v1142 = vpop.f32.mrf.mxu0
        %v1143 = vadd.f32 %v1030, %v1142
        %1144 = vmatmul.f32.gmra.mxu0 %v325
        %v1145 = vpop.f32.mrf.mxu0
        %v1146 = vadd.f32 %v1033, %v1145
        %1147 = vmatmul.f32.gmra.mxu0 %v328
        %v1148 = vpop.f32.mrf.mxu0
        %v1149 = vadd.f32 %v1036, %v1148
        %1150 = vmatmul.f32.gmra.mxu0 %v331
        %v1151 = vpop.f32.mrf.mxu0
        %v1152 = vadd.f32 %v1039, %v1151
        %1153 = vmatmul.f32.gmra.mxu0 %v334
        %v1154 = vpop.f32.mrf.mxu0
        %v1155 = vadd.f32 %v1042, %v1154
        %1156 = vmatmul.f32.gmra.mxu0 %v337
        %v1157 = vpop.f32.mrf.mxu0
        %v1158 = vadd.f32 %v1045, %v1157
        %1159 = vmatmul.f32.gmra.mxu0 %v340
        %v1160 = vpop.f32.mrf.mxu0
        %v1161 = vadd.f32 %v1048, %v1160
        %1162 = vmatmul.f32.gmra.mxu0 %v343
        %v1163 = vpop.f32.mrf.mxu0
        %v1164 = vadd.f32 %v1051, %v1163
        %1165 = vmatmul.f32.gmra.mxu0 %v346
        %v1166 = vpop.f32.mrf.mxu0
        %v1167 = vadd.f32 %v1054, %v1166
        %1168 = vmatmul.f32.gmra.mxu0 %v349
        %v1169 = vpop.f32.mrf.mxu0
        %v1170 = vadd.f32 %v1057, %v1169
        %1171 = vmatmul.f32.gmra.mxu0 %v352
        %v1172 = vpop.f32.mrf.mxu0
        %v1173 = vadd.f32 %v1060, %v1172
        %1174 = vmatmul.f32.gmra.mxu0 %v355
        %v1175 = vpop.f32.mrf.mxu0
        %v1176 = vadd.f32 %v1063, %v1175
        %1177 = vmatmul.f32.gmra.mxu0 %v358
        %v1178 = vpop.f32.mrf.mxu0
        %v1179 = vadd.f32 %v1066, %v1178
        %1180 = vmatmul.f32.gmra.mxu0 %v361
        %v1181 = vpop.f32.mrf.mxu0
        %v1182 = vadd.f32 %v1069, %v1181
        %1183 = vmatmul.f32.gmra.mxu0 %v364
        %v1184 = vpop.f32.mrf.mxu0
        %v1185 = vadd.f32 %v1072, %v1184
        %1186 = vdwg.mxu0
        %1187 = vmatpush.msra.mxu0 %v412
        %1188 = vmatpush.msra.mxu0 %v409
        %1189 = vmatpush.msra.mxu0 %v406
        %1190 = vmatpush.msra.mxu0 %v403
        %1191 = vmatpush.msra.mxu0 %v400
        %1192 = vmatpush.msra.mxu0 %v397
        %1193 = vmatpush.msra.mxu0 %v394
        %1194 = vmatpush.msra.mxu0 %v391
        %1195 = vmatpush.msra.mxu0 %v388
        %1196 = vmatpush.msra.mxu0 %v385
        %1197 = vmatpush.msra.mxu0 %v382
        %1198 = vmatpush.msra.mxu0 %v379
        %1199 = vmatpush.msra.mxu0 %v376
        %1200 = vmatpush.msra.mxu0 %v373
        %1201 = vmatpush.msra.mxu0 %v370
        %1202 = vmatpush.msra.mxu0 %v367
        %1203 = vmatmul.f32.gmra.mxu0 %v269
        %v1204 = vpop.f32.mrf.mxu0
        %v1205 = vadd.f32 0.0, %v1204
        %1206 = vmatmul.f32.gmra.mxu0 %v272
        %v1207 = vpop.f32.mrf.mxu0
        %v1208 = vadd.f32 0.0, %v1207
        %1209 = vmatmul.f32.gmra.mxu0 %v275
        %v1210 = vpop.f32.mrf.mxu0
        %v1211 = vadd.f32 0.0, %v1210
        %1212 = vmatmul.f32.gmra.mxu0 %v278
        %v1213 = vpop.f32.mrf.mxu0
        %v1214 = vadd.f32 0.0, %v1213
        %1215 = vmatmul.f32.gmra.mxu0 %v281
        %v1216 = vpop.f32.mrf.mxu0
        %v1217 = vadd.f32 0.0, %v1216
        %1218 = vmatmul.f32.gmra.mxu0 %v284
        %v1219 = vpop.f32.mrf.mxu0
        %v1220 = vadd.f32 0.0, %v1219
        %1221 = vmatmul.f32.gmra.mxu0 %v287
        %v1222 = vpop.f32.mrf.mxu0
        %v1223 = vadd.f32 0.0, %v1222
        %1224 = vmatmul.f32.gmra.mxu0 %v290
        %v1225 = vpop.f32.mrf.mxu0
        %v1226 = vadd.f32 0.0, %v1225
        %1227 = vmatmul.f32.gmra.mxu0 %v293
        %v1228 = vpop.f32.mrf.mxu0
        %v1229 = vadd.f32 0.0, %v1228
        %1230 = vmatmul.f32.gmra.mxu0 %v296
        %v1231 = vpop.f32.mrf.mxu0
        %v1232 = vadd.f32 0.0, %v1231
        %1233 = vmatmul.f32.gmra.mxu0 %v299
        %v1234 = vpop.f32.mrf.mxu0
        %v1235 = vadd.f32 0.0, %v1234
        %1236 = vmatmul.f32.gmra.mxu0 %v302
        %v1237 = vpop.f32.mrf.mxu0
        %v1238 = vadd.f32 0.0, %v1237
        %1239 = vmatmul.f32.gmra.mxu0 %v305
        %v1240 = vpop.f32.mrf.mxu0
        %v1241 = vadd.f32 0.0, %v1240
        %1242 = vmatmul.f32.gmra.mxu0 %v308
        %v1243 = vpop.f32.mrf.mxu0
        %v1244 = vadd.f32 0.0, %v1243
        %1245 = vmatmul.f32.gmra.mxu0 %v311
        %v1246 = vpop.f32.mrf.mxu0
        %v1247 = vadd.f32 0.0, %v1246
        %1248 = vmatmul.f32.gmra.mxu0 %v314
        %v1249 = vpop.f32.mrf.mxu0
        %v1250 = vadd.f32 0.0, %v1249
        %1251 = vmatmul.f32.gmra.mxu0 %v317
        %v1252 = vpop.f32.mrf.mxu0
        %v1253 = vadd.f32 0.0, %v1252
        %1254 = vmatmul.f32.gmra.mxu0 %v320
        %v1255 = vpop.f32.mrf.mxu0
        %v1256 = vadd.f32 0.0, %v1255
        %1257 = vmatmul.f32.gmra.mxu0 %v323
        %v1258 = vpop.f32.mrf.mxu0
        %v1259 = vadd.f32 0.0, %v1258
        %1260 = vmatmul.f32.gmra.mxu0 %v326
        %v1261 = vpop.f32.mrf.mxu0
        %v1262 = vadd.f32 0.0, %v1261
        %1263 = vmatmul.f32.gmra.mxu0 %v329
        %v1264 = vpop.f32.mrf.mxu0
        %v1265 = vadd.f32 0.0, %v1264
        %1266 = vmatmul.f32.gmra.mxu0 %v332
        %v1267 = vpop.f32.mrf.mxu0
        %v1268 = vadd.f32 0.0, %v1267
        %1269 = vmatmul.f32.gmra.mxu0 %v335
        %v1270 = vpop.f32.mrf.mxu0
        %v1271 = vadd.f32 0.0, %v1270
        %1272 = vmatmul.f32.gmra.mxu0 %v338
        %v1273 = vpop.f32.mrf.mxu0
        %v1274 = vadd.f32 0.0, %v1273
        %1275 = vmatmul.f32.gmra.mxu0 %v341
        %v1276 = vpop.f32.mrf.mxu0
        %v1277 = vadd.f32 0.0, %v1276
        %1278 = vmatmul.f32.gmra.mxu0 %v344
        %v1279 = vpop.f32.mrf.mxu0
        %v1280 = vadd.f32 0.0, %v1279
        %1281 = vmatmul.f32.gmra.mxu0 %v347
        %v1282 = vpop.f32.mrf.mxu0
        %v1283 = vadd.f32 0.0, %v1282
        %1284 = vmatmul.f32.gmra.mxu0 %v350
        %v1285 = vpop.f32.mrf.mxu0
        %v1286 = vadd.f32 0.0, %v1285
        %1287 = vmatmul.f32.gmra.mxu0 %v353
        %v1288 = vpop.f32.mrf.mxu0
        %v1289 = vadd.f32 0.0, %v1288
        %1290 = vmatmul.f32.gmra.mxu0 %v356
        %v1291 = vpop.f32.mrf.mxu0
        %v1292 = vadd.f32 0.0, %v1291
        %1293 = vmatmul.f32.gmra.mxu0 %v359
        %v1294 = vpop.f32.mrf.mxu0
        %v1295 = vadd.f32 0.0, %v1294
        %1296 = vmatmul.f32.gmra.mxu0 %v362
        %v1297 = vpop.f32.mrf.mxu0
        %v1298 = vadd.f32 0.0, %v1297
        %1299 = vdwg.mxu0
        %1300 = vmatpush.msra.mxu0 %v460
        %1301 = vmatpush.msra.mxu0 %v457
        %1302 = vmatpush.msra.mxu0 %v454
        %1303 = vmatpush.msra.mxu0 %v451
        %1304 = vmatpush.msra.mxu0 %v448
        %1305 = vmatpush.msra.mxu0 %v445
        %1306 = vmatpush.msra.mxu0 %v442
        %1307 = vmatpush.msra.mxu0 %v439
        %1308 = vmatpush.msra.mxu0 %v436
        %1309 = vmatpush.msra.mxu0 %v433
        %1310 = vmatpush.msra.mxu0 %v430
        %1311 = vmatpush.msra.mxu0 %v427
        %1312 = vmatpush.msra.mxu0 %v424
        %1313 = vmatpush.msra.mxu0 %v421
        %1314 = vmatpush.msra.mxu0 %v418
        %1315 = vmatpush.msra.mxu0 %v415
        %1316 = vmatmul.f32.gmra.mxu0 %v270
        %v1317 = vpop.f32.mrf.mxu0
        %v1318 = vadd.f32 %v1205, %v1317
        %1319 = vmatmul.f32.gmra.mxu0 %v273
        %v1320 = vpop.f32.mrf.mxu0
        %v1321 = vadd.f32 %v1208, %v1320
        %1322 = vmatmul.f32.gmra.mxu0 %v276
        %v1323 = vpop.f32.mrf.mxu0
        %v1324 = vadd.f32 %v1211, %v1323
        %1325 = vmatmul.f32.gmra.mxu0 %v279
        %v1326 = vpop.f32.mrf.mxu0
        %v1327 = vadd.f32 %v1214, %v1326
        %1328 = vmatmul.f32.gmra.mxu0 %v282
        %v1329 = vpop.f32.mrf.mxu0
        %v1330 = vadd.f32 %v1217, %v1329
        %1331 = vmatmul.f32.gmra.mxu0 %v285
        %v1332 = vpop.f32.mrf.mxu0
        %v1333 = vadd.f32 %v1220, %v1332
        %1334 = vmatmul.f32.gmra.mxu0 %v288
        %v1335 = vpop.f32.mrf.mxu0
        %v1336 = vadd.f32 %v1223, %v1335
        %1337 = vmatmul.f32.gmra.mxu0 %v291
        %v1338 = vpop.f32.mrf.mxu0
        %v1339 = vadd.f32 %v1226, %v1338
        %1340 = vmatmul.f32.gmra.mxu0 %v294
        %v1341 = vpop.f32.mrf.mxu0
        %v1342 = vadd.f32 %v1229, %v1341
        %1343 = vmatmul.f32.gmra.mxu0 %v297
        %v1344 = vpop.f32.mrf.mxu0
        %v1345 = vadd.f32 %v1232, %v1344
        %1346 = vmatmul.f32.gmra.mxu0 %v300
        %v1347 = vpop.f32.mrf.mxu0
        %v1348 = vadd.f32 %v1235, %v1347
        %1349 = vmatmul.f32.gmra.mxu0 %v303
        %v1350 = vpop.f32.mrf.mxu0
        %v1351 = vadd.f32 %v1238, %v1350
        %1352 = vmatmul.f32.gmra.mxu0 %v306
        %v1353 = vpop.f32.mrf.mxu0
        %v1354 = vadd.f32 %v1241, %v1353
        %1355 = vmatmul.f32.gmra.mxu0 %v309
        %v1356 = vpop.f32.mrf.mxu0
        %v1357 = vadd.f32 %v1244, %v1356
        %1358 = vmatmul.f32.gmra.mxu0 %v312
        %v1359 = vpop.f32.mrf.mxu0
        %v1360 = vadd.f32 %v1247, %v1359
        %1361 = vmatmul.f32.gmra.mxu0 %v315
        %v1362 = vpop.f32.mrf.mxu0
        %v1363 = vadd.f32 %v1250, %v1362
        %1364 = vmatmul.f32.gmra.mxu0 %v318
        %v1365 = vpop.f32.mrf.mxu0
        %v1366 = vadd.f32 %v1253, %v1365
        %1367 = vmatmul.f32.gmra.mxu0 %v321
        %v1368 = vpop.f32.mrf.mxu0
        %v1369 = vadd.f32 %v1256, %v1368
        %1370 = vmatmul.f32.gmra.mxu0 %v324
        %v1371 = vpop.f32.mrf.mxu0
        %v1372 = vadd.f32 %v1259, %v1371
        %1373 = vmatmul.f32.gmra.mxu0 %v327
        %v1374 = vpop.f32.mrf.mxu0
        %v1375 = vadd.f32 %v1262, %v1374
        %1376 = vmatmul.f32.gmra.mxu0 %v330
        %v1377 = vpop.f32.mrf.mxu0
        %v1378 = vadd.f32 %v1265, %v1377
        %1379 = vmatmul.f32.gmra.mxu0 %v333
        %v1380 = vpop.f32.mrf.mxu0
        %v1381 = vadd.f32 %v1268, %v1380
        %1382 = vmatmul.f32.gmra.mxu0 %v336
        %v1383 = vpop.f32.mrf.mxu0
        %v1384 = vadd.f32 %v1271, %v1383
        %1385 = vmatmul.f32.gmra.mxu0 %v339
        %v1386 = vpop.f32.mrf.mxu0
        %v1387 = vadd.f32 %v1274, %v1386
        %1388 = vmatmul.f32.gmra.mxu0 %v342
        %v1389 = vpop.f32.mrf.mxu0
        %v1390 = vadd.f32 %v1277, %v1389
        %1391 = vmatmul.f32.gmra.mxu0 %v345
        %v1392 = vpop.f32.mrf.mxu0
        %v1393 = vadd.f32 %v1280, %v1392
        %1394 = vmatmul.f32.gmra.mxu0 %v348
        %v1395 = vpop.f32.mrf.mxu0
        %v1396 = vadd.f32 %v1283, %v1395
        %1397 = vmatmul.f32.gmra.mxu0 %v351
        %v1398 = vpop.f32.mrf.mxu0
        %v1399 = vadd.f32 %v1286, %v1398
        %1400 = vmatmul.f32.gmra.mxu0 %v354
        %v1401 = vpop.f32.mrf.mxu0
        %v1402 = vadd.f32 %v1289, %v1401
        %1403 = vmatmul.f32.gmra.mxu0 %v357
        %v1404 = vpop.f32.mrf.mxu0
        %v1405 = vadd.f32 %v1292, %v1404
        %1406 = vmatmul.f32.gmra.mxu0 %v360
        %v1407 = vpop.f32.mrf.mxu0
        %v1408 = vadd.f32 %v1295, %v1407
        %1409 = vmatmul.f32.gmra.mxu0 %v363
        %v1410 = vpop.f32.mrf.mxu0
        %v1411 = vadd.f32 %v1298, %v1410
        %1412 = vdwg.mxu0
        %1413 = vmatpush.msra.mxu0 %v508
        %1414 = vmatpush.msra.mxu0 %v505
        %1415 = vmatpush.msra.mxu0 %v502
        %1416 = vmatpush.msra.mxu0 %v499
        %1417 = vmatpush.msra.mxu0 %v496
        %1418 = vmatpush.msra.mxu0 %v493
        %1419 = vmatpush.msra.mxu0 %v490
        %1420 = vmatpush.msra.mxu0 %v487
        %1421 = vmatpush.msra.mxu0 %v484
        %1422 = vmatpush.msra.mxu0 %v481
        %1423 = vmatpush.msra.mxu0 %v478
        %1424 = vmatpush.msra.mxu0 %v475
        %1425 = vmatpush.msra.mxu0 %v472
        %1426 = vmatpush.msra.mxu0 %v469
        %1427 = vmatpush.msra.mxu0 %v466
        %1428 = vmatpush.msra.mxu0 %v463
        %1429 = vmatmul.f32.gmra.mxu0 %v271
        %v1430 = vpop.f32.mrf.mxu0
        %v1431 = vadd.f32 %v1318, %v1430
        %1432 = vmatmul.f32.gmra.mxu0 %v274
        %v1433 = vpop.f32.mrf.mxu0
        %v1434 = vadd.f32 %v1321, %v1433
        %1435 = vmatmul.f32.gmra.mxu0 %v277
        %v1436 = vpop.f32.mrf.mxu0
        %v1437 = vadd.f32 %v1324, %v1436
        %1438 = vmatmul.f32.gmra.mxu0 %v280
        %v1439 = vpop.f32.mrf.mxu0
        %v1440 = vadd.f32 %v1327, %v1439
        %1441 = vmatmul.f32.gmra.mxu0 %v283
        %v1442 = vpop.f32.mrf.mxu0
        %v1443 = vadd.f32 %v1330, %v1442
        %1444 = vmatmul.f32.gmra.mxu0 %v286
        %v1445 = vpop.f32.mrf.mxu0
        %v1446 = vadd.f32 %v1333, %v1445
        %1447 = vmatmul.f32.gmra.mxu0 %v289
        %v1448 = vpop.f32.mrf.mxu0
        %v1449 = vadd.f32 %v1336, %v1448
        %1450 = vmatmul.f32.gmra.mxu0 %v292
        %v1451 = vpop.f32.mrf.mxu0
        %v1452 = vadd.f32 %v1339, %v1451
        %1453 = vmatmul.f32.gmra.mxu0 %v295
        %v1454 = vpop.f32.mrf.mxu0
        %v1455 = vadd.f32 %v1342, %v1454
        %1456 = vmatmul.f32.gmra.mxu0 %v298
        %v1457 = vpop.f32.mrf.mxu0
        %v1458 = vadd.f32 %v1345, %v1457
        %1459 = vmatmul.f32.gmra.mxu0 %v301
        %v1460 = vpop.f32.mrf.mxu0
        %v1461 = vadd.f32 %v1348, %v1460
        %1462 = vmatmul.f32.gmra.mxu0 %v304
        %v1463 = vpop.f32.mrf.mxu0
        %v1464 = vadd.f32 %v1351, %v1463
        %1465 = vmatmul.f32.gmra.mxu0 %v307
        %v1466 = vpop.f32.mrf.mxu0
        %v1467 = vadd.f32 %v1354, %v1466
        %1468 = vmatmul.f32.gmra.mxu0 %v310
        %v1469 = vpop.f32.mrf.mxu0
        %v1470 = vadd.f32 %v1357, %v1469
        %1471 = vmatmul.f32.gmra.mxu0 %v313
        %v1472 = vpop.f32.mrf.mxu0
        %v1473 = vadd.f32 %v1360, %v1472
        %1474 = vmatmul.f32.gmra.mxu0 %v316
        %v1475 = vpop.f32.mrf.mxu0
        %v1476 = vadd.f32 %v1363, %v1475
        %1477 = vmatmul.f32.gmra.mxu0 %v319
        %v1478 = vpop.f32.mrf.mxu0
        %v1479 = vadd.f32 %v1366, %v1478
        %1480 = vmatmul.f32.gmra.mxu0 %v322
        %v1481 = vpop.f32.mrf.mxu0
        %v1482 = vadd.f32 %v1369, %v1481
        %1483 = vmatmul.f32.gmra.mxu0 %v325
        %v1484 = vpop.f32.mrf.mxu0
        %v1485 = vadd.f32 %v1372, %v1484
        %1486 = vmatmul.f32.gmra.mxu0 %v328
        %v1487 = vpop.f32.mrf.mxu0
        %v1488 = vadd.f32 %v1375, %v1487
        %1489 = vmatmul.f32.gmra.mxu0 %v331
        %v1490 = vpop.f32.mrf.mxu0
        %v1491 = vadd.f32 %v1378, %v1490
        %1492 = vmatmul.f32.gmra.mxu0 %v334
        %v1493 = vpop.f32.mrf.mxu0
        %v1494 = vadd.f32 %v1381, %v1493
        %1495 = vmatmul.f32.gmra.mxu0 %v337
        %v1496 = vpop.f32.mrf.mxu0
        %v1497 = vadd.f32 %v1384, %v1496
        %1498 = vmatmul.f32.gmra.mxu0 %v340
        %v1499 = vpop.f32.mrf.mxu0
        %v1500 = vadd.f32 %v1387, %v1499
        %1501 = vmatmul.f32.gmra.mxu0 %v343
        %v1502 = vpop.f32.mrf.mxu0
        %v1503 = vadd.f32 %v1390, %v1502
        %1504 = vmatmul.f32.gmra.mxu0 %v346
        %v1505 = vpop.f32.mrf.mxu0
        %v1506 = vadd.f32 %v1393, %v1505
        %1507 = vmatmul.f32.gmra.mxu0 %v349
        %v1508 = vpop.f32.mrf.mxu0
        %v1509 = vadd.f32 %v1396, %v1508
        %1510 = vmatmul.f32.gmra.mxu0 %v352
        %v1511 = vpop.f32.mrf.mxu0
        %v1512 = vadd.f32 %v1399, %v1511
        %1513 = vmatmul.f32.gmra.mxu0 %v355
        %v1514 = vpop.f32.mrf.mxu0
        %v1515 = vadd.f32 %v1402, %v1514
        %1516 = vmatmul.f32.gmra.mxu0 %v358
        %v1517 = vpop.f32.mrf.mxu0
        %v1518 = vadd.f32 %v1405, %v1517
        %1519 = vmatmul.f32.gmra.mxu0 %v361
        %v1520 = vpop.f32.mrf.mxu0
        %v1521 = vadd.f32 %v1408, %v1520
        %1522 = vmatmul.f32.gmra.mxu0 %v364
        %v1523 = vpop.f32.mrf.mxu0
        %v1524 = vadd.f32 %v1411, %v1523
        %1525 = vdwg.mxu0
        %v1526 = vlaneseq
        %v1527 = vshrl.u32 %v1526, 7
        %v1528 = vadd.s32 %v1527, 8
        %v1529 = vadd.s32 %v1527, 16
        %v1530 = vadd.s32 %v1527, 24
        %v1531 = vadd.s32 %v1527, 32
        %v1532 = vadd.s32 %v1527, 40
        %v1533 = vadd.s32 %v1527, 48
        %v1534 = vadd.s32 %v1527, 56
        %v1535 = vadd.s32 %v1527, 64
        %v1536 = vadd.s32 %v1527, 72
        %v1537 = vadd.s32 %v1527, 80
        %v1538 = vadd.s32 %v1527, 88
        %v1539 = vadd.s32 %v1527, 96
        %v1540 = vadd.s32 %v1527, 104
        %v1541 = vadd.s32 %v1527, 112
        %v1542 = vadd.s32 %v1527, 120
        %v1543 = vlaneseq
        %v1544 = vand.u32 %v1543, 127
        %vm1545 = vcmp.le.s32.totalorder %v1544, %v1527
        %vm1546 = vcmp.le.s32.totalorder %v1544, %v1528
        %vm1547 = vcmp.le.s32.totalorder %v1544, %v1529
        %vm1548 = vcmp.le.s32.totalorder %v1544, %v1530
        %vm1549 = vcmp.le.s32.totalorder %v1544, %v1531
        %vm1550 = vcmp.le.s32.totalorder %v1544, %v1532
        %vm1551 = vcmp.le.s32.totalorder %v1544, %v1533
        %vm1552 = vcmp.le.s32.totalorder %v1544, %v1534
        %vm1553 = vcmp.le.s32.totalorder %v1544, %v1535
        %vm1554 = vcmp.le.s32.totalorder %v1544, %v1536
        %vm1555 = vcmp.le.s32.totalorder %v1544, %v1537
        %vm1556 = vcmp.le.s32.totalorder %v1544, %v1538
        %vm1557 = vcmp.le.s32.totalorder %v1544, %v1539
        %vm1558 = vcmp.le.s32.totalorder %v1544, %v1540
        %vm1559 = vcmp.le.s32.totalorder %v1544, %v1541
        %vm1560 = vcmp.le.s32.totalorder %v1544, %v1542
        %vm1561 = vcmask 261120
        %v1563 = vsel %vm1561, %v753, 0
        %v1566 = vsel %vm1561, %v756, 0
        %v1569 = vsel %vm1561, %v759, 0
        %v1572 = vsel %vm1561, %v762, 0
        %v1575 = vsel %vm1561, %v765, 0
        %v1578 = vsel %vm1561, %v768, 0
        %v1581 = vsel %vm1561, %v771, 0
        %v1584 = vsel %vm1561, %v774, 0
        %v1587 = vsel %vm1561, %v777, 0
        %v1590 = vsel %vm1561, %v780, 0
        %v1593 = vsel %vm1561, %v783, 0
        %v1596 = vsel %vm1561, %v786, 0
        %v1599 = vsel %vm1561, %v789, 0
        %v1602 = vsel %vm1561, %v792, 0
        %v1605 = vsel %vm1561, %v795, 0
        %v1608 = vsel %vm1561, %v798, 0
        %v1611 = vsel %vm1561, %v1092, 0
        %v1614 = vsel %vm1561, %v1095, 0
        %v1617 = vsel %vm1561, %v1098, 0
        %v1620 = vsel %vm1561, %v1101, 0
        %v1623 = vsel %vm1561, %v1104, 0
        %v1626 = vsel %vm1561, %v1107, 0
        %v1629 = vsel %vm1561, %v1110, 0
        %v1632 = vsel %vm1561, %v1113, 0
        %v1635 = vsel %vm1561, %v1116, 0
        %v1638 = vsel %vm1561, %v1119, 0
        %v1641 = vsel %vm1561, %v1122, 0
        %v1644 = vsel %vm1561, %v1125, 0
        %v1647 = vsel %vm1561, %v1128, 0
        %v1650 = vsel %vm1561, %v1131, 0
        %v1653 = vsel %vm1561, %v1134, 0
        %v1656 = vsel %vm1561, %v1137, 0
        %1658 = vmatpush.xpose.msra.mxu0 %v1656
        %1659 = vmatpush.xpose.msra.mxu0 %v1653
        %1660 = vmatpush.xpose.msra.mxu0 %v1650
        %1661 = vmatpush.xpose.msra.mxu0 %v1647
        %1662 = vmatpush.xpose.msra.mxu0 %v1644
        %1663 = vmatpush.xpose.msra.mxu0 %v1641
        %1664 = vmatpush.xpose.msra.mxu0 %v1638
        %1665 = vmatpush.xpose.msra.mxu0 %v1635
        %1666 = vmatpush.xpose.msra.mxu0 %v1632
        %1667 = vmatpush.xpose.msra.mxu0 %v1629
        %1668 = vmatpush.xpose.msra.mxu0 %v1626
        %1669 = vmatpush.xpose.msra.mxu0 %v1623
        %1670 = vmatpush.xpose.msra.mxu0 %v1620
        %1671 = vmatpush.xpose.msra.mxu0 %v1617
        %1672 = vmatpush.xpose.msra.mxu0 %v1614
        %1673 = vmatpush.xpose.msra.mxu0 %v1611
        %1674 = vmatmul.f32.gmra.mxu0 %v1563
        %v1675 = vpop.f32.mrf.mxu0
        %v1676 = vadd.f32 0.0, %v1675
        %1677 = vmatmul.f32.gmra.mxu0 %v1566
        %v1678 = vpop.f32.mrf.mxu0
        %v1679 = vadd.f32 0.0, %v1678
        %1680 = vmatmul.f32.gmra.mxu0 %v1569
        %v1681 = vpop.f32.mrf.mxu0
        %v1682 = vadd.f32 0.0, %v1681
        %1683 = vmatmul.f32.gmra.mxu0 %v1572
        %v1684 = vpop.f32.mrf.mxu0
        %v1685 = vadd.f32 0.0, %v1684
        %1686 = vmatmul.f32.gmra.mxu0 %v1575
        %v1687 = vpop.f32.mrf.mxu0
        %v1688 = vadd.f32 0.0, %v1687
        %1689 = vmatmul.f32.gmra.mxu0 %v1578
        %v1690 = vpop.f32.mrf.mxu0
        %v1691 = vadd.f32 0.0, %v1690
        %1692 = vmatmul.f32.gmra.mxu0 %v1581
        %v1693 = vpop.f32.mrf.mxu0
        %v1694 = vadd.f32 0.0, %v1693
        %1695 = vmatmul.f32.gmra.mxu0 %v1584
        %v1696 = vpop.f32.mrf.mxu0
        %v1697 = vadd.f32 0.0, %v1696
        %1698 = vmatmul.f32.gmra.mxu0 %v1587
        %v1699 = vpop.f32.mrf.mxu0
        %v1700 = vadd.f32 0.0, %v1699
        %1701 = vmatmul.f32.gmra.mxu0 %v1590
        %v1702 = vpop.f32.mrf.mxu0
        %v1703 = vadd.f32 0.0, %v1702
        %1704 = vmatmul.f32.gmra.mxu0 %v1593
        %v1705 = vpop.f32.mrf.mxu0
        %v1706 = vadd.f32 0.0, %v1705
        %1707 = vmatmul.f32.gmra.mxu0 %v1596
        %v1708 = vpop.f32.mrf.mxu0
        %v1709 = vadd.f32 0.0, %v1708
        %1710 = vmatmul.f32.gmra.mxu0 %v1599
        %v1711 = vpop.f32.mrf.mxu0
        %v1712 = vadd.f32 0.0, %v1711
        %1713 = vmatmul.f32.gmra.mxu0 %v1602
        %v1714 = vpop.f32.mrf.mxu0
        %v1715 = vadd.f32 0.0, %v1714
        %1716 = vmatmul.f32.gmra.mxu0 %v1605
        %v1717 = vpop.f32.mrf.mxu0
        %v1718 = vadd.f32 0.0, %v1717
        %1719 = vmatmul.f32.gmra.mxu0 %v1608
        %v1720 = vpop.f32.mrf.mxu0
        %v1721 = vadd.f32 0.0, %v1720
        %1722 = vdwg.mxu0
        %v1724 = vsel %vm1561, %v801, 0
        %v1727 = vsel %vm1561, %v804, 0
        %v1730 = vsel %vm1561, %v807, 0
        %v1733 = vsel %vm1561, %v810, 0
        %v1736 = vsel %vm1561, %v813, 0
        %v1739 = vsel %vm1561, %v816, 0
        %v1742 = vsel %vm1561, %v819, 0
        %v1745 = vsel %vm1561, %v822, 0
        %v1748 = vsel %vm1561, %v825, 0
        %v1751 = vsel %vm1561, %v828, 0
        %v1754 = vsel %vm1561, %v831, 0
        %v1757 = vsel %vm1561, %v834, 0
        %v1760 = vsel %vm1561, %v837, 0
        %v1763 = vsel %vm1561, %v840, 0
        %v1766 = vsel %vm1561, %v843, 0
        %v1769 = vsel %vm1561, %v846, 0
        %v1772 = vsel %vm1561, %v1140, 0
        %v1775 = vsel %vm1561, %v1143, 0
        %v1778 = vsel %vm1561, %v1146, 0
        %v1781 = vsel %vm1561, %v1149, 0
        %v1784 = vsel %vm1561, %v1152, 0
        %v1787 = vsel %vm1561, %v1155, 0
        %v1790 = vsel %vm1561, %v1158, 0
        %v1793 = vsel %vm1561, %v1161, 0
        %v1796 = vsel %vm1561, %v1164, 0
        %v1799 = vsel %vm1561, %v1167, 0
        %v1802 = vsel %vm1561, %v1170, 0
        %v1805 = vsel %vm1561, %v1173, 0
        %v1808 = vsel %vm1561, %v1176, 0
        %v1811 = vsel %vm1561, %v1179, 0
        %v1814 = vsel %vm1561, %v1182, 0
        %v1817 = vsel %vm1561, %v1185, 0
        %1819 = vmatpush.xpose.msra.mxu0 %v1817
        %1820 = vmatpush.xpose.msra.mxu0 %v1814
        %1821 = vmatpush.xpose.msra.mxu0 %v1811
        %1822 = vmatpush.xpose.msra.mxu0 %v1808
        %1823 = vmatpush.xpose.msra.mxu0 %v1805
        %1824 = vmatpush.xpose.msra.mxu0 %v1802
        %1825 = vmatpush.xpose.msra.mxu0 %v1799
        %1826 = vmatpush.xpose.msra.mxu0 %v1796
        %1827 = vmatpush.xpose.msra.mxu0 %v1793
        %1828 = vmatpush.xpose.msra.mxu0 %v1790
        %1829 = vmatpush.xpose.msra.mxu0 %v1787
        %1830 = vmatpush.xpose.msra.mxu0 %v1784
        %1831 = vmatpush.xpose.msra.mxu0 %v1781
        %1832 = vmatpush.xpose.msra.mxu0 %v1778
        %1833 = vmatpush.xpose.msra.mxu0 %v1775
        %1834 = vmatpush.xpose.msra.mxu0 %v1772
        %1835 = vmatmul.f32.gmra.mxu0 %v1724
        %v1836 = vpop.f32.mrf.mxu0
        %v1837 = vadd.f32 0.0, %v1836
        %1838 = vmatmul.f32.gmra.mxu0 %v1727
        %v1839 = vpop.f32.mrf.mxu0
        %v1840 = vadd.f32 0.0, %v1839
        %1841 = vmatmul.f32.gmra.mxu0 %v1730
        %v1842 = vpop.f32.mrf.mxu0
        %v1843 = vadd.f32 0.0, %v1842
        %1844 = vmatmul.f32.gmra.mxu0 %v1733
        %v1845 = vpop.f32.mrf.mxu0
        %v1846 = vadd.f32 0.0, %v1845
        %1847 = vmatmul.f32.gmra.mxu0 %v1736
        %v1848 = vpop.f32.mrf.mxu0
        %v1849 = vadd.f32 0.0, %v1848
        %1850 = vmatmul.f32.gmra.mxu0 %v1739
        %v1851 = vpop.f32.mrf.mxu0
        %v1852 = vadd.f32 0.0, %v1851
        %1853 = vmatmul.f32.gmra.mxu0 %v1742
        %v1854 = vpop.f32.mrf.mxu0
        %v1855 = vadd.f32 0.0, %v1854
        %1856 = vmatmul.f32.gmra.mxu0 %v1745
        %v1857 = vpop.f32.mrf.mxu0
        %v1858 = vadd.f32 0.0, %v1857
        %1859 = vmatmul.f32.gmra.mxu0 %v1748
        %v1860 = vpop.f32.mrf.mxu0
        %v1861 = vadd.f32 0.0, %v1860
        %1862 = vmatmul.f32.gmra.mxu0 %v1751
        %v1863 = vpop.f32.mrf.mxu0
        %v1864 = vadd.f32 0.0, %v1863
        %1865 = vmatmul.f32.gmra.mxu0 %v1754
        %v1866 = vpop.f32.mrf.mxu0
        %v1867 = vadd.f32 0.0, %v1866
        %1868 = vmatmul.f32.gmra.mxu0 %v1757
        %v1869 = vpop.f32.mrf.mxu0
        %v1870 = vadd.f32 0.0, %v1869
        %1871 = vmatmul.f32.gmra.mxu0 %v1760
        %v1872 = vpop.f32.mrf.mxu0
        %v1873 = vadd.f32 0.0, %v1872
        %1874 = vmatmul.f32.gmra.mxu0 %v1763
        %v1875 = vpop.f32.mrf.mxu0
        %v1876 = vadd.f32 0.0, %v1875
        %1877 = vmatmul.f32.gmra.mxu0 %v1766
        %v1878 = vpop.f32.mrf.mxu0
        %v1879 = vadd.f32 0.0, %v1878
        %1880 = vmatmul.f32.gmra.mxu0 %v1769
        %v1881 = vpop.f32.mrf.mxu0
        %v1882 = vadd.f32 0.0, %v1881
        %1883 = vdwg.mxu0
        %v1884 = vsel %vm1545, 1, 0
        %v1885 = vsel %vm1546, 1, 0
        %v1886 = vsel %vm1547, 1, 0
        %v1887 = vsel %vm1548, 1, 0
        %v1888 = vsel %vm1549, 1, 0
        %v1889 = vsel %vm1550, 1, 0
        %v1890 = vsel %vm1551, 1, 0
        %v1891 = vsel %vm1552, 1, 0
        %v1892 = vsel %vm1553, 1, 0
        %v1893 = vsel %vm1554, 1, 0
        %v1894 = vsel %vm1555, 1, 0
        %v1895 = vsel %vm1556, 1, 0
        %v1896 = vsel %vm1557, 1, 0
        %v1897 = vsel %vm1558, 1, 0
        %v1898 = vsel %vm1559, 1, 0
        %v1899 = vsel %vm1560, 1, 0
        %vm1900 = vcmp.eq.s32.totalorder %v1884, 1
        %vm1901 = vcmp.eq.s32.totalorder %v1885, 1
        %vm1902 = vcmp.eq.s32.totalorder %v1886, 1
        %vm1903 = vcmp.eq.s32.totalorder %v1887, 1
        %vm1904 = vcmp.eq.s32.totalorder %v1888, 1
        %vm1905 = vcmp.eq.s32.totalorder %v1889, 1
        %vm1906 = vcmp.eq.s32.totalorder %v1890, 1
        %vm1907 = vcmp.eq.s32.totalorder %v1891, 1
        %vm1908 = vcmp.eq.s32.totalorder %v1892, 1
        %vm1909 = vcmp.eq.s32.totalorder %v1893, 1
        %vm1910 = vcmp.eq.s32.totalorder %v1894, 1
        %vm1911 = vcmp.eq.s32.totalorder %v1895, 1
        %vm1912 = vcmp.eq.s32.totalorder %v1896, 1
        %vm1913 = vcmp.eq.s32.totalorder %v1897, 1
        %vm1914 = vcmp.eq.s32.totalorder %v1898, 1
        %vm1915 = vcmp.eq.s32.totalorder %v1899, 1
        %v1916 = vsel %vm1900, %v1676, -inf
        %v1917 = vsel %vm1901, %v1679, -inf
        %v1918 = vsel %vm1902, %v1682, -inf
        %v1919 = vsel %vm1903, %v1685, -inf
        %v1920 = vsel %vm1904, %v1688, -inf
        %v1921 = vsel %vm1905, %v1691, -inf
        %v1922 = vsel %vm1906, %v1694, -inf
        %v1923 = vsel %vm1907, %v1697, -inf
        %v1924 = vsel %vm1908, %v1700, -inf
        %v1925 = vsel %vm1909, %v1703, -inf
        %v1926 = vsel %vm1910, %v1706, -inf
        %v1927 = vsel %vm1911, %v1709, -inf
        %v1928 = vsel %vm1912, %v1712, -inf
        %v1929 = vsel %vm1913, %v1715, -inf
        %v1930 = vsel %vm1914, %v1718, -inf
        %v1931 = vsel %vm1915, %v1721, -inf
        %v1932 = vsel %vm1900, %v1837, -inf
        %v1933 = vsel %vm1901, %v1840, -inf
        %v1934 = vsel %vm1902, %v1843, -inf
        %v1935 = vsel %vm1903, %v1846, -inf
        %v1936 = vsel %vm1904, %v1849, -inf
        %v1937 = vsel %vm1905, %v1852, -inf
        %v1938 = vsel %vm1906, %v1855, -inf
        %v1939 = vsel %vm1907, %v1858, -inf
        %v1940 = vsel %vm1908, %v1861, -inf
        %v1941 = vsel %vm1909, %v1864, -inf
        %v1942 = vsel %vm1910, %v1867, -inf
        %v1943 = vsel %vm1911, %v1870, -inf
        %v1944 = vsel %vm1912, %v1873, -inf
        %v1945 = vsel %vm1913, %v1876, -inf
        %v1946 = vsel %vm1914, %v1879, -inf
        %v1947 = vsel %vm1915, %v1882, -inf
        %1948 = vmax.xlane.f32.xlu0 %v1916
        %v1949 = vpop.xlane.xlu0 %1948
        %1950 = vmax.xlane.f32.xlu0 %v1917
        %v1951 = vpop.xlane.xlu0 %1950
        %1952 = vmax.xlane.f32.xlu0 %v1918
        %v1953 = vpop.xlane.xlu0 %1952
        %1954 = vmax.xlane.f32.xlu0 %v1919
        %v1955 = vpop.xlane.xlu0 %1954
        %1956 = vmax.xlane.f32.xlu0 %v1920
        %v1957 = vpop.xlane.xlu0 %1956
        %1958 = vmax.xlane.f32.xlu0 %v1921
        %v1959 = vpop.xlane.xlu0 %1958
        %1960 = vmax.xlane.f32.xlu0 %v1922
        %v1961 = vpop.xlane.xlu0 %1960
        %1962 = vmax.xlane.f32.xlu0 %v1923
        %v1963 = vpop.xlane.xlu0 %1962
        %1964 = vmax.xlane.f32.xlu0 %v1924
        %v1965 = vpop.xlane.xlu0 %1964
        %1966 = vmax.xlane.f32.xlu0 %v1925
        %v1967 = vpop.xlane.xlu0 %1966
        %1968 = vmax.xlane.f32.xlu0 %v1926
        %v1969 = vpop.xlane.xlu0 %1968
        %1970 = vmax.xlane.f32.xlu0 %v1927
        %v1971 = vpop.xlane.xlu0 %1970
        %1972 = vmax.xlane.f32.xlu0 %v1928
        %v1973 = vpop.xlane.xlu0 %1972
        %1974 = vmax.xlane.f32.xlu0 %v1929
        %v1975 = vpop.xlane.xlu0 %1974
        %1976 = vmax.xlane.f32.xlu0 %v1930
        %v1977 = vpop.xlane.xlu0 %1976
        %1978 = vmax.xlane.f32.xlu0 %v1931
        %v1979 = vpop.xlane.xlu0 %1978
        %1980 = vmax.xlane.f32.xlu0 %v1932
        %v1981 = vpop.xlane.xlu0 %1980
        %1982 = vmax.xlane.f32.xlu0 %v1933
        %v1983 = vpop.xlane.xlu0 %1982
        %1984 = vmax.xlane.f32.xlu0 %v1934
        %v1985 = vpop.xlane.xlu0 %1984
        %1986 = vmax.xlane.f32.xlu0 %v1935
        %v1987 = vpop.xlane.xlu0 %1986
        %1988 = vmax.xlane.f32.xlu0 %v1936
        %v1989 = vpop.xlane.xlu0 %1988
        %1990 = vmax.xlane.f32.xlu0 %v1937
        %v1991 = vpop.xlane.xlu0 %1990
        %1992 = vmax.xlane.f32.xlu0 %v1938
        %v1993 = vpop.xlane.xlu0 %1992
        %1994 = vmax.xlane.f32.xlu0 %v1939
        %v1995 = vpop.xlane.xlu0 %1994
        %1996 = vmax.xlane.f32.xlu0 %v1940
        %v1997 = vpop.xlane.xlu0 %1996
        %1998 = vmax.xlane.f32.xlu0 %v1941
        %v1999 = vpop.xlane.xlu0 %1998
        %2000 = vmax.xlane.f32.xlu0 %v1942
        %v2001 = vpop.xlane.xlu0 %2000
        %2002 = vmax.xlane.f32.xlu0 %v1943
        %v2003 = vpop.xlane.xlu0 %2002
        %2004 = vmax.xlane.f32.xlu0 %v1944
        %v2005 = vpop.xlane.xlu0 %2004
        %2006 = vmax.xlane.f32.xlu0 %v1945
        %v2007 = vpop.xlane.xlu0 %2006
        %2008 = vmax.xlane.f32.xlu0 %v1946
        %v2009 = vpop.xlane.xlu0 %2008
        %2010 = vmax.xlane.f32.xlu0 %v1947
        %v2011 = vpop.xlane.xlu0 %2010
        %v2012 = vsub.f32 %v1916, %v1949
        %v2013 = vsub.f32 %v1917, %v1951
        %v2014 = vsub.f32 %v1918, %v1953
        %v2015 = vsub.f32 %v1919, %v1955
        %v2016 = vsub.f32 %v1920, %v1957
        %v2017 = vsub.f32 %v1921, %v1959
        %v2018 = vsub.f32 %v1922, %v1961
        %v2019 = vsub.f32 %v1923, %v1963
        %v2020 = vsub.f32 %v1924, %v1965
        %v2021 = vsub.f32 %v1925, %v1967
        %v2022 = vsub.f32 %v1926, %v1969
        %v2023 = vsub.f32 %v1927, %v1971
        %v2024 = vsub.f32 %v1928, %v1973
        %v2025 = vsub.f32 %v1929, %v1975
        %v2026 = vsub.f32 %v1930, %v1977
        %v2027 = vsub.f32 %v1931, %v1979
        %v2028 = vsub.f32 %v1932, %v1981
        %v2029 = vsub.f32 %v1933, %v1983
        %v2030 = vsub.f32 %v1934, %v1985
        %v2031 = vsub.f32 %v1935, %v1987
        %v2032 = vsub.f32 %v1936, %v1989
        %v2033 = vsub.f32 %v1937, %v1991
        %v2034 = vsub.f32 %v1938, %v1993
        %v2035 = vsub.f32 %v1939, %v1995
        %v2036 = vsub.f32 %v1940, %v1997
        %v2037 = vsub.f32 %v1941, %v1999
        %v2038 = vsub.f32 %v1942, %v2001
        %v2039 = vsub.f32 %v1943, %v2003
        %v2040 = vsub.f32 %v1944, %v2005
        %v2041 = vsub.f32 %v1945, %v2007
        %v2042 = vsub.f32 %v1946, %v2009
        %v2043 = vsub.f32 %v1947, %v2011
        %v2044 = vmul.f32 %v2012, 1.442695
        %v2045 = vpow.pop %v2044
        %v2046 = vmul.f32 %v2013, 1.442695
        %v2047 = vpow.pop %v2046
        %v2048 = vmul.f32 %v2014, 1.442695
        %v2049 = vpow.pop %v2048
        %v2050 = vmul.f32 %v2015, 1.442695
        %v2051 = vpow.pop %v2050
        %v2052 = vmul.f32 %v2016, 1.442695
        %v2053 = vpow.pop %v2052
        %v2054 = vmul.f32 %v2017, 1.442695
        %v2055 = vpow.pop %v2054
        %v2056 = vmul.f32 %v2018, 1.442695
        %v2057 = vpow.pop %v2056
        %v2058 = vmul.f32 %v2019, 1.442695
        %v2059 = vpow.pop %v2058
        %v2060 = vmul.f32 %v2020, 1.442695
        %v2061 = vpow.pop %v2060
        %v2062 = vmul.f32 %v2021, 1.442695
        %v2063 = vpow.pop %v2062
        %v2064 = vmul.f32 %v2022, 1.442695
        %v2065 = vpow.pop %v2064
        %v2066 = vmul.f32 %v2023, 1.442695
        %v2067 = vpow.pop %v2066
        %v2068 = vmul.f32 %v2024, 1.442695
        %v2069 = vpow.pop %v2068
        %v2070 = vmul.f32 %v2025, 1.442695
        %v2071 = vpow.pop %v2070
        %v2072 = vmul.f32 %v2026, 1.442695
        %v2073 = vpow.pop %v2072
        %v2074 = vmul.f32 %v2027, 1.442695
        %v2075 = vpow.pop %v2074
        %v2076 = vmul.f32 %v2028, 1.442695
        %v2077 = vpow.pop %v2076
        %v2078 = vmul.f32 %v2029, 1.442695
        %v2079 = vpow.pop %v2078
        %v2080 = vmul.f32 %v2030, 1.442695
        %v2081 = vpow.pop %v2080
        %v2082 = vmul.f32 %v2031, 1.442695
        %v2083 = vpow.pop %v2082
        %v2084 = vmul.f32 %v2032, 1.442695
        %v2085 = vpow.pop %v2084
        %v2086 = vmul.f32 %v2033, 1.442695
        %v2087 = vpow.pop %v2086
        %v2088 = vmul.f32 %v2034, 1.442695
        %v2089 = vpow.pop %v2088
        %v2090 = vmul.f32 %v2035, 1.442695
        %v2091 = vpow.pop %v2090
        %v2092 = vmul.f32 %v2036, 1.442695
        %v2093 = vpow.pop %v2092
        %v2094 = vmul.f32 %v2037, 1.442695
        %v2095 = vpow.pop %v2094
        %v2096 = vmul.f32 %v2038, 1.442695
        %v2097 = vpow.pop %v2096
        %v2098 = vmul.f32 %v2039, 1.442695
        %v2099 = vpow.pop %v2098
        %v2100 = vmul.f32 %v2040, 1.442695
        %v2101 = vpow.pop %v2100
        %v2102 = vmul.f32 %v2041, 1.442695
        %v2103 = vpow.pop %v2102
        %v2104 = vmul.f32 %v2042, 1.442695
        %v2105 = vpow.pop %v2104
        %v2106 = vmul.f32 %v2043, 1.442695
        %v2107 = vpow.pop %v2106
        %2108 = vadd.xlane.f32.xlu0 %v2045
        %v2109 = vpop.xlane.xlu0 %2108
        %2110 = vadd.xlane.f32.xlu0 %v2047
        %v2111 = vpop.xlane.xlu0 %2110
        %2112 = vadd.xlane.f32.xlu0 %v2049
        %v2113 = vpop.xlane.xlu0 %2112
        %2114 = vadd.xlane.f32.xlu0 %v2051
        %v2115 = vpop.xlane.xlu0 %2114
        %2116 = vadd.xlane.f32.xlu0 %v2053
        %v2117 = vpop.xlane.xlu0 %2116
        %2118 = vadd.xlane.f32.xlu0 %v2055
        %v2119 = vpop.xlane.xlu0 %2118
        %2120 = vadd.xlane.f32.xlu0 %v2057
        %v2121 = vpop.xlane.xlu0 %2120
        %2122 = vadd.xlane.f32.xlu0 %v2059
        %v2123 = vpop.xlane.xlu0 %2122
        %2124 = vadd.xlane.f32.xlu0 %v2061
        %v2125 = vpop.xlane.xlu0 %2124
        %2126 = vadd.xlane.f32.xlu0 %v2063
        %v2127 = vpop.xlane.xlu0 %2126
        %2128 = vadd.xlane.f32.xlu0 %v2065
        %v2129 = vpop.xlane.xlu0 %2128
        %2130 = vadd.xlane.f32.xlu0 %v2067
        %v2131 = vpop.xlane.xlu0 %2130
        %2132 = vadd.xlane.f32.xlu0 %v2069
        %v2133 = vpop.xlane.xlu0 %2132
        %2134 = vadd.xlane.f32.xlu0 %v2071
        %v2135 = vpop.xlane.xlu0 %2134
        %2136 = vadd.xlane.f32.xlu0 %v2073
        %v2137 = vpop.xlane.xlu0 %2136
        %2138 = vadd.xlane.f32.xlu0 %v2075
        %v2139 = vpop.xlane.xlu0 %2138
        %2140 = vadd.xlane.f32.xlu0 %v2077
        %v2141 = vpop.xlane.xlu0 %2140
        %2142 = vadd.xlane.f32.xlu0 %v2079
        %v2143 = vpop.xlane.xlu0 %2142
        %2144 = vadd.xlane.f32.xlu0 %v2081
        %v2145 = vpop.xlane.xlu0 %2144
        %2146 = vadd.xlane.f32.xlu0 %v2083
        %v2147 = vpop.xlane.xlu0 %2146
        %2148 = vadd.xlane.f32.xlu0 %v2085
        %v2149 = vpop.xlane.xlu0 %2148
        %2150 = vadd.xlane.f32.xlu0 %v2087
        %v2151 = vpop.xlane.xlu0 %2150
        %2152 = vadd.xlane.f32.xlu0 %v2089
        %v2153 = vpop.xlane.xlu0 %2152
        %2154 = vadd.xlane.f32.xlu0 %v2091
        %v2155 = vpop.xlane.xlu0 %2154
        %2156 = vadd.xlane.f32.xlu0 %v2093
        %v2157 = vpop.xlane.xlu0 %2156
        %2158 = vadd.xlane.f32.xlu0 %v2095
        %v2159 = vpop.xlane.xlu0 %2158
        %2160 = vadd.xlane.f32.xlu0 %v2097
        %v2161 = vpop.xlane.xlu0 %2160
        %2162 = vadd.xlane.f32.xlu0 %v2099
        %v2163 = vpop.xlane.xlu0 %2162
        %2164 = vadd.xlane.f32.xlu0 %v2101
        %v2165 = vpop.xlane.xlu0 %2164
        %2166 = vadd.xlane.f32.xlu0 %v2103
        %v2167 = vpop.xlane.xlu0 %2166
        %2168 = vadd.xlane.f32.xlu0 %v2105
        %v2169 = vpop.xlane.xlu0 %2168
        %2170 = vadd.xlane.f32.xlu0 %v2107
        %v2171 = vpop.xlane.xlu0 %2170
        %v2172 = vrcp.pop %v2109
        %v2173 = vrcp.pop %v2111
        %v2174 = vrcp.pop %v2113
        %v2175 = vrcp.pop %v2115
        %v2176 = vrcp.pop %v2117
        %v2177 = vrcp.pop %v2119
        %v2178 = vrcp.pop %v2121
        %v2179 = vrcp.pop %v2123
        %v2180 = vrcp.pop %v2125
        %v2181 = vrcp.pop %v2127
        %v2182 = vrcp.pop %v2129
        %v2183 = vrcp.pop %v2131
        %v2184 = vrcp.pop %v2133
        %v2185 = vrcp.pop %v2135
        %v2186 = vrcp.pop %v2137
        %v2187 = vrcp.pop %v2139
        %v2188 = vrcp.pop %v2141
        %v2189 = vrcp.pop %v2143
        %v2190 = vrcp.pop %v2145
        %v2191 = vrcp.pop %v2147
        %v2192 = vrcp.pop %v2149
        %v2193 = vrcp.pop %v2151
        %v2194 = vrcp.pop %v2153
        %v2195 = vrcp.pop %v2155
        %v2196 = vrcp.pop %v2157
        %v2197 = vrcp.pop %v2159
        %v2198 = vrcp.pop %v2161
        %v2199 = vrcp.pop %v2163
        %v2200 = vrcp.pop %v2165
        %v2201 = vrcp.pop %v2167
        %v2202 = vrcp.pop %v2169
        %v2203 = vrcp.pop %v2171
        %v2204 = vmul.f32 %v2045, %v2172
        %v2205 = vmul.f32 %v2047, %v2173
        %v2206 = vmul.f32 %v2049, %v2174
        %v2207 = vmul.f32 %v2051, %v2175
        %v2208 = vmul.f32 %v2053, %v2176
        %v2209 = vmul.f32 %v2055, %v2177
        %v2210 = vmul.f32 %v2057, %v2178
        %v2211 = vmul.f32 %v2059, %v2179
        %v2212 = vmul.f32 %v2061, %v2180
        %v2213 = vmul.f32 %v2063, %v2181
        %v2214 = vmul.f32 %v2065, %v2182
        %v2215 = vmul.f32 %v2067, %v2183
        %v2216 = vmul.f32 %v2069, %v2184
        %v2217 = vmul.f32 %v2071, %v2185
        %v2218 = vmul.f32 %v2073, %v2186
        %v2219 = vmul.f32 %v2075, %v2187
        %v2220 = vmul.f32 %v2077, %v2188
        %v2221 = vmul.f32 %v2079, %v2189
        %v2222 = vmul.f32 %v2081, %v2190
        %v2223 = vmul.f32 %v2083, %v2191
        %v2224 = vmul.f32 %v2085, %v2192
        %v2225 = vmul.f32 %v2087, %v2193
        %v2226 = vmul.f32 %v2089, %v2194
        %v2227 = vmul.f32 %v2091, %v2195
        %v2228 = vmul.f32 %v2093, %v2196
        %v2229 = vmul.f32 %v2095, %v2197
        %v2230 = vmul.f32 %v2097, %v2198
        %v2231 = vmul.f32 %v2099, %v2199
        %v2232 = vmul.f32 %v2101, %v2200
        %v2233 = vmul.f32 %v2103, %v2201
        %v2234 = vmul.f32 %v2105, %v2202
        %v2235 = vmul.f32 %v2107, %v2203
        %2236 = vmatpush.msra.mxu0 %v1476
        %2237 = vmatpush.msra.mxu0 %v1473
        %2238 = vmatpush.msra.mxu0 %v1470
        %2239 = vmatpush.msra.mxu0 %v1467
        %2240 = vmatpush.msra.mxu0 %v1464
        %2241 = vmatpush.msra.mxu0 %v1461
        %2242 = vmatpush.msra.mxu0 %v1458
        %2243 = vmatpush.msra.mxu0 %v1455
        %2244 = vmatpush.msra.mxu0 %v1452
        %2245 = vmatpush.msra.mxu0 %v1449
        %2246 = vmatpush.msra.mxu0 %v1446
        %2247 = vmatpush.msra.mxu0 %v1443
        %2248 = vmatpush.msra.mxu0 %v1440
        %2249 = vmatpush.msra.mxu0 %v1437
        %2250 = vmatpush.msra.mxu0 %v1434
        %2251 = vmatpush.msra.mxu0 %v1431
        %2252 = vmatmul.f32.gmra.mxu0 %v2204
        %v2253 = vpop.f32.mrf.mxu0
        %v2254 = vadd.f32 0.0, %v2253
        %2255 = vmatmul.f32.gmra.mxu0 %v2205
        %v2256 = vpop.f32.mrf.mxu0
        %v2257 = vadd.f32 0.0, %v2256
        %2258 = vmatmul.f32.gmra.mxu0 %v2206
        %v2259 = vpop.f32.mrf.mxu0
        %v2260 = vadd.f32 0.0, %v2259
        %2261 = vmatmul.f32.gmra.mxu0 %v2207
        %v2262 = vpop.f32.mrf.mxu0
        %v2263 = vadd.f32 0.0, %v2262
        %2264 = vmatmul.f32.gmra.mxu0 %v2208
        %v2265 = vpop.f32.mrf.mxu0
        %v2266 = vadd.f32 0.0, %v2265
        %2267 = vmatmul.f32.gmra.mxu0 %v2209
        %v2268 = vpop.f32.mrf.mxu0
        %v2269 = vadd.f32 0.0, %v2268
        %2270 = vmatmul.f32.gmra.mxu0 %v2210
        %v2271 = vpop.f32.mrf.mxu0
        %v2272 = vadd.f32 0.0, %v2271
        %2273 = vmatmul.f32.gmra.mxu0 %v2211
        %v2274 = vpop.f32.mrf.mxu0
        %v2275 = vadd.f32 0.0, %v2274
        %2276 = vmatmul.f32.gmra.mxu0 %v2212
        %v2277 = vpop.f32.mrf.mxu0
        %v2278 = vadd.f32 0.0, %v2277
        %2279 = vmatmul.f32.gmra.mxu0 %v2213
        %v2280 = vpop.f32.mrf.mxu0
        %v2281 = vadd.f32 0.0, %v2280
        %2282 = vmatmul.f32.gmra.mxu0 %v2214
        %v2283 = vpop.f32.mrf.mxu0
        %v2284 = vadd.f32 0.0, %v2283
        %2285 = vmatmul.f32.gmra.mxu0 %v2215
        %v2286 = vpop.f32.mrf.mxu0
        %v2287 = vadd.f32 0.0, %v2286
        %2288 = vmatmul.f32.gmra.mxu0 %v2216
        %v2289 = vpop.f32.mrf.mxu0
        %v2290 = vadd.f32 0.0, %v2289
        %2291 = vmatmul.f32.gmra.mxu0 %v2217
        %v2292 = vpop.f32.mrf.mxu0
        %v2293 = vadd.f32 0.0, %v2292
        %2294 = vmatmul.f32.gmra.mxu0 %v2218
        %v2295 = vpop.f32.mrf.mxu0
        %v2296 = vadd.f32 0.0, %v2295
        %2297 = vmatmul.f32.gmra.mxu0 %v2219
        %v2298 = vpop.f32.mrf.mxu0
        %v2299 = vadd.f32 0.0, %v2298
        %2300 = vdwg.mxu0
        %2301 = vmatpush.msra.mxu0 %v1524
        %2302 = vmatpush.msra.mxu0 %v1521
        %2303 = vmatpush.msra.mxu0 %v1518
        %2304 = vmatpush.msra.mxu0 %v1515
        %2305 = vmatpush.msra.mxu0 %v1512
        %2306 = vmatpush.msra.mxu0 %v1509
        %2307 = vmatpush.msra.mxu0 %v1506
        %2308 = vmatpush.msra.mxu0 %v1503
        %2309 = vmatpush.msra.mxu0 %v1500
        %2310 = vmatpush.msra.mxu0 %v1497
        %2311 = vmatpush.msra.mxu0 %v1494
        %2312 = vmatpush.msra.mxu0 %v1491
        %2313 = vmatpush.msra.mxu0 %v1488
        %2314 = vmatpush.msra.mxu0 %v1485
        %2315 = vmatpush.msra.mxu0 %v1482
        %2316 = vmatpush.msra.mxu0 %v1479
        %2317 = vmatmul.f32.gmra.mxu0 %v2220
        %v2318 = vpop.f32.mrf.mxu0
        %v2319 = vadd.f32 0.0, %v2318
        %2320 = vmatmul.f32.gmra.mxu0 %v2221
        %v2321 = vpop.f32.mrf.mxu0
        %v2322 = vadd.f32 0.0, %v2321
        %2323 = vmatmul.f32.gmra.mxu0 %v2222
        %v2324 = vpop.f32.mrf.mxu0
        %v2325 = vadd.f32 0.0, %v2324
        %2326 = vmatmul.f32.gmra.mxu0 %v2223
        %v2327 = vpop.f32.mrf.mxu0
        %v2328 = vadd.f32 0.0, %v2327
        %2329 = vmatmul.f32.gmra.mxu0 %v2224
        %v2330 = vpop.f32.mrf.mxu0
        %v2331 = vadd.f32 0.0, %v2330
        %2332 = vmatmul.f32.gmra.mxu0 %v2225
        %v2333 = vpop.f32.mrf.mxu0
        %v2334 = vadd.f32 0.0, %v2333
        %2335 = vmatmul.f32.gmra.mxu0 %v2226
        %v2336 = vpop.f32.mrf.mxu0
        %v2337 = vadd.f32 0.0, %v2336
        %2338 = vmatmul.f32.gmra.mxu0 %v2227
        %v2339 = vpop.f32.mrf.mxu0
        %v2340 = vadd.f32 0.0, %v2339
        %2341 = vmatmul.f32.gmra.mxu0 %v2228
        %v2342 = vpop.f32.mrf.mxu0
        %v2343 = vadd.f32 0.0, %v2342
        %2344 = vmatmul.f32.gmra.mxu0 %v2229
        %v2345 = vpop.f32.mrf.mxu0
        %v2346 = vadd.f32 0.0, %v2345
        %2347 = vmatmul.f32.gmra.mxu0 %v2230
        %v2348 = vpop.f32.mrf.mxu0
        %v2349 = vadd.f32 0.0, %v2348
        %2350 = vmatmul.f32.gmra.mxu0 %v2231
        %v2351 = vpop.f32.mrf.mxu0
        %v2352 = vadd.f32 0.0, %v2351
        %2353 = vmatmul.f32.gmra.mxu0 %v2232
        %v2354 = vpop.f32.mrf.mxu0
        %v2355 = vadd.f32 0.0, %v2354
        %2356 = vmatmul.f32.gmra.mxu0 %v2233
        %v2357 = vpop.f32.mrf.mxu0
        %v2358 = vadd.f32 0.0, %v2357
        %2359 = vmatmul.f32.gmra.mxu0 %v2234
        %v2360 = vpop.f32.mrf.mxu0
        %v2361 = vadd.f32 0.0, %v2360
        %2362 = vmatmul.f32.gmra.mxu0 %v2235
        %v2363 = vpop.f32.mrf.mxu0
        %v2364 = vadd.f32 0.0, %v2363
        %2365 = vdwg.mxu0
        %2366 = vst.msk [vmem:[#allocation2] sm:$0xff] %vm1561, %v2254
        %2367 = vst.msk [vmem:[#allocation2 + $0x8] sm:$0xff] %vm1561, %v2257
        %2368 = vst.msk [vmem:[#allocation2 + $0x10] sm:$0xff] %vm1561, %v2260
        %2369 = vst.msk [vmem:[#allocation2 + $0x18] sm:$0xff] %vm1561, %v2263
        %2370 = vst.msk [vmem:[#allocation2 + $0x20] sm:$0xff] %vm1561, %v2266
        %2371 = vst.msk [vmem:[#allocation2 + $0x28] sm:$0xff] %vm1561, %v2269
        %2372 = vst.msk [vmem:[#allocation2 + $0x30] sm:$0xff] %vm1561, %v2272
        %2373 = vst.msk [vmem:[#allocation2 + $0x38] sm:$0xff] %vm1561, %v2275
        %2374 = vst.msk [vmem:[#allocation2 + $0x40] sm:$0xff] %vm1561, %v2278
        %2375 = vst.msk [vmem:[#allocation2 + $0x48] sm:$0xff] %vm1561, %v2281
        %2376 = vst.msk [vmem:[#allocation2 + $0x50] sm:$0xff] %vm1561, %v2284
        %2377 = vst.msk [vmem:[#allocation2 + $0x58] sm:$0xff] %vm1561, %v2287
        %2378 = vst.msk [vmem:[#allocation2 + $0x60] sm:$0xff] %vm1561, %v2290
        %2379 = vst.msk [vmem:[#allocation2 + $0x68] sm:$0xff] %vm1561, %v2293
        %2380 = vst.msk [vmem:[#allocation2 + $0x70] sm:$0xff] %vm1561, %v2296
        %2381 = vst.msk [vmem:[#allocation2 + $0x78] sm:$0xff] %vm1561, %v2299
        %2382 = vst.msk [vmem:[#allocation2 + $0x80] sm:$0xff] %vm1561, %v2319
        %2383 = vst.msk [vmem:[#allocation2 + $0x88] sm:$0xff] %vm1561, %v2322
        %2384 = vst.msk [vmem:[#allocation2 + $0x90] sm:$0xff] %vm1561, %v2325
        %2385 = vst.msk [vmem:[#allocation2 + $0x98] sm:$0xff] %vm1561, %v2328
        %2386 = vst.msk [vmem:[#allocation2 + $0xa0] sm:$0xff] %vm1561, %v2331
        %2387 = vst.msk [vmem:[#allocation2 + $0xa8] sm:$0xff] %vm1561, %v2334
        %2388 = vst.msk [vmem:[#allocation2 + $0xb0] sm:$0xff] %vm1561, %v2337
        %2389 = vst.msk [vmem:[#allocation2 + $0xb8] sm:$0xff] %vm1561, %v2340
        %2390 = vst.msk [vmem:[#allocation2 + $0xc0] sm:$0xff] %vm1561, %v2343
        %2391 = vst.msk [vmem:[#allocation2 + $0xc8] sm:$0xff] %vm1561, %v2346
        %2392 = vst.msk [vmem:[#allocation2 + $0xd0] sm:$0xff] %vm1561, %v2349
        %2393 = vst.msk [vmem:[#allocation2 + $0xd8] sm:$0xff] %vm1561, %v2352
        %2394 = vst.msk [vmem:[#allocation2 + $0xe0] sm:$0xff] %vm1561, %v2355
        %2395 = vst.msk [vmem:[#allocation2 + $0xe8] sm:$0xff] %vm1561, %v2358
        %2396 = vst.msk [vmem:[#allocation2 + $0xf0] sm:$0xff] %vm1561, %v2361
        %2397 = vst.msk [vmem:[#allocation2 + $0xf8] sm:$0xff] %vm1561, %v2364
        %2398 = vrot.lane.b32.xlu0 %v753, 96
        %v2399 = vpop.permute.xlu0 %2398
        %2400 = vrot.lane.b32.xlu0 %v756, 96
        %v2401 = vpop.permute.xlu0 %2400
        %2402 = vrot.lane.b32.xlu0 %v759, 96
        %v2403 = vpop.permute.xlu0 %2402
        %2404 = vrot.lane.b32.xlu0 %v762, 96
        %v2405 = vpop.permute.xlu0 %2404
        %2406 = vrot.lane.b32.xlu0 %v765, 96
        %v2407 = vpop.permute.xlu0 %2406
        %2408 = vrot.lane.b32.xlu0 %v768, 96
        %v2409 = vpop.permute.xlu0 %2408
        %2410 = vrot.lane.b32.xlu0 %v771, 96
        %v2411 = vpop.permute.xlu0 %2410
        %2412 = vrot.lane.b32.xlu0 %v774, 96
        %v2413 = vpop.permute.xlu0 %2412
        %2414 = vrot.lane.b32.xlu0 %v777, 96
        %v2415 = vpop.permute.xlu0 %2414
        %2416 = vrot.lane.b32.xlu0 %v780, 96
        %v2417 = vpop.permute.xlu0 %2416
        %2418 = vrot.lane.b32.xlu0 %v783, 96
        %v2419 = vpop.permute.xlu0 %2418
        %2420 = vrot.lane.b32.xlu0 %v786, 96
        %v2421 = vpop.permute.xlu0 %2420
        %2422 = vrot.lane.b32.xlu0 %v789, 96
        %v2423 = vpop.permute.xlu0 %2422
        %2424 = vrot.lane.b32.xlu0 %v792, 96
        %v2425 = vpop.permute.xlu0 %2424
        %2426 = vrot.lane.b32.xlu0 %v795, 96
        %v2427 = vpop.permute.xlu0 %2426
        %2428 = vrot.lane.b32.xlu0 %v798, 96
        %v2429 = vpop.permute.xlu0 %2428
        %2430 = vrot.lane.b32.xlu0 %v1092, 96
        %v2431 = vpop.permute.xlu0 %2430
        %2432 = vrot.lane.b32.xlu0 %v1095, 96
        %v2433 = vpop.permute.xlu0 %2432
        %2434 = vrot.lane.b32.xlu0 %v1098, 96
        %v2435 = vpop.permute.xlu0 %2434
        %2436 = vrot.lane.b32.xlu0 %v1101, 96
        %v2437 = vpop.permute.xlu0 %2436
        %2438 = vrot.lane.b32.xlu0 %v1104, 96
        %v2439 = vpop.permute.xlu0 %2438
        %2440 = vrot.lane.b32.xlu0 %v1107, 96
        %v2441 = vpop.permute.xlu0 %2440
        %2442 = vrot.lane.b32.xlu0 %v1110, 96
        %v2443 = vpop.permute.xlu0 %2442
        %2444 = vrot.lane.b32.xlu0 %v1113, 96
        %v2445 = vpop.permute.xlu0 %2444
        %2446 = vrot.lane.b32.xlu0 %v1116, 96
        %v2447 = vpop.permute.xlu0 %2446
        %2448 = vrot.lane.b32.xlu0 %v1119, 96
        %v2449 = vpop.permute.xlu0 %2448
        %2450 = vrot.lane.b32.xlu0 %v1122, 96
        %v2451 = vpop.permute.xlu0 %2450
        %2452 = vrot.lane.b32.xlu0 %v1125, 96
        %v2453 = vpop.permute.xlu0 %2452
        %2454 = vrot.lane.b32.xlu0 %v1128, 96
        %v2455 = vpop.permute.xlu0 %2454
        %2456 = vrot.lane.b32.xlu0 %v1131, 96
        %v2457 = vpop.permute.xlu0 %2456
        %2458 = vrot.lane.b32.xlu0 %v1134, 96
        %v2459 = vpop.permute.xlu0 %2458
        %2460 = vrot.lane.b32.xlu0 %v1137, 96
        %v2461 = vpop.permute.xlu0 %2460
        %v2462 = vsel %vm1561, %v2399, 0
        %v2464 = vsel %vm1561, %v2401, 0
        %v2466 = vsel %vm1561, %v2403, 0
        %v2468 = vsel %vm1561, %v2405, 0
        %v2470 = vsel %vm1561, %v2407, 0
        %v2472 = vsel %vm1561, %v2409, 0
        %v2474 = vsel %vm1561, %v2411, 0
        %v2476 = vsel %vm1561, %v2413, 0
        %v2478 = vsel %vm1561, %v2415, 0
        %v2480 = vsel %vm1561, %v2417, 0
        %v2482 = vsel %vm1561, %v2419, 0
        %v2484 = vsel %vm1561, %v2421, 0
        %v2486 = vsel %vm1561, %v2423, 0
        %v2488 = vsel %vm1561, %v2425, 0
        %v2490 = vsel %vm1561, %v2427, 0
        %v2492 = vsel %vm1561, %v2429, 0
        %v2494 = vsel %vm1561, %v2431, 0
        %v2496 = vsel %vm1561, %v2433, 0
        %v2498 = vsel %vm1561, %v2435, 0
        %v2500 = vsel %vm1561, %v2437, 0
        %v2502 = vsel %vm1561, %v2439, 0
        %v2504 = vsel %vm1561, %v2441, 0
        %v2506 = vsel %vm1561, %v2443, 0
        %v2508 = vsel %vm1561, %v2445, 0
        %v2510 = vsel %vm1561, %v2447, 0
        %v2512 = vsel %vm1561, %v2449, 0
        %v2514 = vsel %vm1561, %v2451, 0
        %v2516 = vsel %vm1561, %v2453, 0
        %v2518 = vsel %vm1561, %v2455, 0
        %v2520 = vsel %vm1561, %v2457, 0
        %v2522 = vsel %vm1561, %v2459, 0
        %v2524 = vsel %vm1561, %v2461, 0
        %2526 = vmatpush.xpose.msra.mxu0 %v2524
        %2527 = vmatpush.xpose.msra.mxu0 %v2522
        %2528 = vmatpush.xpose.msra.mxu0 %v2520
        %2529 = vmatpush.xpose.msra.mxu0 %v2518
        %2530 = vmatpush.xpose.msra.mxu0 %v2516
        %2531 = vmatpush.xpose.msra.mxu0 %v2514
        %2532 = vmatpush.xpose.msra.mxu0 %v2512
        %2533 = vmatpush.xpose.msra.mxu0 %v2510
        %2534 = vmatpush.xpose.msra.mxu0 %v2508
        %2535 = vmatpush.xpose.msra.mxu0 %v2506
        %2536 = vmatpush.xpose.msra.mxu0 %v2504
        %2537 = vmatpush.xpose.msra.mxu0 %v2502
        %2538 = vmatpush.xpose.msra.mxu0 %v2500
        %2539 = vmatpush.xpose.msra.mxu0 %v2498
        %2540 = vmatpush.xpose.msra.mxu0 %v2496
        %2541 = vmatpush.xpose.msra.mxu0 %v2494
        %2542 = vmatmul.f32.gmra.mxu0 %v2462
        %v2543 = vpop.f32.mrf.mxu0
        %v2544 = vadd.f32 0.0, %v2543
        %2545 = vmatmul.f32.gmra.mxu0 %v2464
        %v2546 = vpop.f32.mrf.mxu0
        %v2547 = vadd.f32 0.0, %v2546
        %2548 = vmatmul.f32.gmra.mxu0 %v2466
        %v2549 = vpop.f32.mrf.mxu0
        %v2550 = vadd.f32 0.0, %v2549
        %2551 = vmatmul.f32.gmra.mxu0 %v2468
        %v2552 = vpop.f32.mrf.mxu0
        %v2553 = vadd.f32 0.0, %v2552
        %2554 = vmatmul.f32.gmra.mxu0 %v2470
        %v2555 = vpop.f32.mrf.mxu0
        %v2556 = vadd.f32 0.0, %v2555
        %2557 = vmatmul.f32.gmra.mxu0 %v2472
        %v2558 = vpop.f32.mrf.mxu0
        %v2559 = vadd.f32 0.0, %v2558
        %2560 = vmatmul.f32.gmra.mxu0 %v2474
        %v2561 = vpop.f32.mrf.mxu0
        %v2562 = vadd.f32 0.0, %v2561
        %2563 = vmatmul.f32.gmra.mxu0 %v2476
        %v2564 = vpop.f32.mrf.mxu0
        %v2565 = vadd.f32 0.0, %v2564
        %2566 = vmatmul.f32.gmra.mxu0 %v2478
        %v2567 = vpop.f32.mrf.mxu0
        %v2568 = vadd.f32 0.0, %v2567
        %2569 = vmatmul.f32.gmra.mxu0 %v2480
        %v2570 = vpop.f32.mrf.mxu0
        %v2571 = vadd.f32 0.0, %v2570
        %2572 = vmatmul.f32.gmra.mxu0 %v2482
        %v2573 = vpop.f32.mrf.mxu0
        %v2574 = vadd.f32 0.0, %v2573
        %2575 = vmatmul.f32.gmra.mxu0 %v2484
        %v2576 = vpop.f32.mrf.mxu0
        %v2577 = vadd.f32 0.0, %v2576
        %2578 = vmatmul.f32.gmra.mxu0 %v2486
        %v2579 = vpop.f32.mrf.mxu0
        %v2580 = vadd.f32 0.0, %v2579
        %2581 = vmatmul.f32.gmra.mxu0 %v2488
        %v2582 = vpop.f32.mrf.mxu0
        %v2583 = vadd.f32 0.0, %v2582
        %2584 = vmatmul.f32.gmra.mxu0 %v2490
        %v2585 = vpop.f32.mrf.mxu0
        %v2586 = vadd.f32 0.0, %v2585
        %2587 = vmatmul.f32.gmra.mxu0 %v2492
        %v2588 = vpop.f32.mrf.mxu0
        %v2589 = vadd.f32 0.0, %v2588
        %2590 = vdwg.mxu0
        %2591 = vrot.lane.b32.xlu0 %v801, 96
        %v2592 = vpop.permute.xlu0 %2591
        %2593 = vrot.lane.b32.xlu0 %v804, 96
        %v2594 = vpop.permute.xlu0 %2593
        %2595 = vrot.lane.b32.xlu0 %v807, 96
        %v2596 = vpop.permute.xlu0 %2595
        %2597 = vrot.lane.b32.xlu0 %v810, 96
        %v2598 = vpop.permute.xlu0 %2597
        %2599 = vrot.lane.b32.xlu0 %v813, 96
        %v2600 = vpop.permute.xlu0 %2599
        %2601 = vrot.lane.b32.xlu0 %v816, 96
        %v2602 = vpop.permute.xlu0 %2601
        %2603 = vrot.lane.b32.xlu0 %v819, 96
        %v2604 = vpop.permute.xlu0 %2603
        %2605 = vrot.lane.b32.xlu0 %v822, 96
        %v2606 = vpop.permute.xlu0 %2605
        %2607 = vrot.lane.b32.xlu0 %v825, 96
        %v2608 = vpop.permute.xlu0 %2607
        %2609 = vrot.lane.b32.xlu0 %v828, 96
        %v2610 = vpop.permute.xlu0 %2609
        %2611 = vrot.lane.b32.xlu0 %v831, 96
        %v2612 = vpop.permute.xlu0 %2611
        %2613 = vrot.lane.b32.xlu0 %v834, 96
        %v2614 = vpop.permute.xlu0 %2613
        %2615 = vrot.lane.b32.xlu0 %v837, 96
        %v2616 = vpop.permute.xlu0 %2615
        %2617 = vrot.lane.b32.xlu0 %v840, 96
        %v2618 = vpop.permute.xlu0 %2617
        %2619 = vrot.lane.b32.xlu0 %v843, 96
        %v2620 = vpop.permute.xlu0 %2619
        %2621 = vrot.lane.b32.xlu0 %v846, 96
        %v2622 = vpop.permute.xlu0 %2621
        %2623 = vrot.lane.b32.xlu0 %v1140, 96
        %v2624 = vpop.permute.xlu0 %2623
        %2625 = vrot.lane.b32.xlu0 %v1143, 96
        %v2626 = vpop.permute.xlu0 %2625
        %2627 = vrot.lane.b32.xlu0 %v1146, 96
        %v2628 = vpop.permute.xlu0 %2627
        %2629 = vrot.lane.b32.xlu0 %v1149, 96
        %v2630 = vpop.permute.xlu0 %2629
        %2631 = vrot.lane.b32.xlu0 %v1152, 96
        %v2632 = vpop.permute.xlu0 %2631
        %2633 = vrot.lane.b32.xlu0 %v1155, 96
        %v2634 = vpop.permute.xlu0 %2633
        %2635 = vrot.lane.b32.xlu0 %v1158, 96
        %v2636 = vpop.permute.xlu0 %2635
        %2637 = vrot.lane.b32.xlu0 %v1161, 96
        %v2638 = vpop.permute.xlu0 %2637
        %2639 = vrot.lane.b32.xlu0 %v1164, 96
        %v2640 = vpop.permute.xlu0 %2639
        %2641 = vrot.lane.b32.xlu0 %v1167, 96
        %v2642 = vpop.permute.xlu0 %2641
        %2643 = vrot.lane.b32.xlu0 %v1170, 96
        %v2644 = vpop.permute.xlu0 %2643
        %2645 = vrot.lane.b32.xlu0 %v1173, 96
        %v2646 = vpop.permute.xlu0 %2645
        %2647 = vrot.lane.b32.xlu0 %v1176, 96
        %v2648 = vpop.permute.xlu0 %2647
        %2649 = vrot.lane.b32.xlu0 %v1179, 96
        %v2650 = vpop.permute.xlu0 %2649
        %2651 = vrot.lane.b32.xlu0 %v1182, 96
        %v2652 = vpop.permute.xlu0 %2651
        %2653 = vrot.lane.b32.xlu0 %v1185, 96
        %v2654 = vpop.permute.xlu0 %2653
        %v2655 = vsel %vm1561, %v2592, 0
        %v2657 = vsel %vm1561, %v2594, 0
        %v2659 = vsel %vm1561, %v2596, 0
        %v2661 = vsel %vm1561, %v2598, 0
        %v2663 = vsel %vm1561, %v2600, 0
        %v2665 = vsel %vm1561, %v2602, 0
        %v2667 = vsel %vm1561, %v2604, 0
        %v2669 = vsel %vm1561, %v2606, 0
        %v2671 = vsel %vm1561, %v2608, 0
        %v2673 = vsel %vm1561, %v2610, 0
        %v2675 = vsel %vm1561, %v2612, 0
        %v2677 = vsel %vm1561, %v2614, 0
        %v2679 = vsel %vm1561, %v2616, 0
        %v2681 = vsel %vm1561, %v2618, 0
        %v2683 = vsel %vm1561, %v2620, 0
        %v2685 = vsel %vm1561, %v2622, 0
        %v2687 = vsel %vm1561, %v2624, 0
        %v2689 = vsel %vm1561, %v2626, 0
        %v2691 = vsel %vm1561, %v2628, 0
        %v2693 = vsel %vm1561, %v2630, 0
        %v2695 = vsel %vm1561, %v2632, 0
        %v2697 = vsel %vm1561, %v2634, 0
        %v2699 = vsel %vm1561, %v2636, 0
        %v2701 = vsel %vm1561, %v2638, 0
        %v2703 = vsel %vm1561, %v2640, 0
        %v2705 = vsel %vm1561, %v2642, 0
        %v2707 = vsel %vm1561, %v2644, 0
        %v2709 = vsel %vm1561, %v2646, 0
        %v2711 = vsel %vm1561, %v2648, 0
        %v2713 = vsel %vm1561, %v2650, 0
        %v2715 = vsel %vm1561, %v2652, 0
        %v2717 = vsel %vm1561, %v2654, 0
        %2719 = vmatpush.xpose.msra.mxu0 %v2717
        %2720 = vmatpush.xpose.msra.mxu0 %v2715
        %2721 = vmatpush.xpose.msra.mxu0 %v2713
        %2722 = vmatpush.xpose.msra.mxu0 %v2711
        %2723 = vmatpush.xpose.msra.mxu0 %v2709
        %2724 = vmatpush.xpose.msra.mxu0 %v2707
        %2725 = vmatpush.xpose.msra.mxu0 %v2705
        %2726 = vmatpush.xpose.msra.mxu0 %v2703
        %2727 = vmatpush.xpose.msra.mxu0 %v2701
        %2728 = vmatpush.xpose.msra.mxu0 %v2699
        %2729 = vmatpush.xpose.msra.mxu0 %v2697
        %2730 = vmatpush.xpose.msra.mxu0 %v2695
        %2731 = vmatpush.xpose.msra.mxu0 %v2693
        %2732 = vmatpush.xpose.msra.mxu0 %v2691
        %2733 = vmatpush.xpose.msra.mxu0 %v2689
        %2734 = vmatpush.xpose.msra.mxu0 %v2687
        %2735 = vmatmul.f32.gmra.mxu0 %v2655
        %v2736 = vpop.f32.mrf.mxu0
        %v2737 = vadd.f32 0.0, %v2736
        %2738 = vmatmul.f32.gmra.mxu0 %v2657
        %v2739 = vpop.f32.mrf.mxu0
        %v2740 = vadd.f32 0.0, %v2739
        %2741 = vmatmul.f32.gmra.mxu0 %v2659
        %v2742 = vpop.f32.mrf.mxu0
        %v2743 = vadd.f32 0.0, %v2742
        %2744 = vmatmul.f32.gmra.mxu0 %v2661
        %v2745 = vpop.f32.mrf.mxu0
        %v2746 = vadd.f32 0.0, %v2745
        %2747 = vmatmul.f32.gmra.mxu0 %v2663
        %v2748 = vpop.f32.mrf.mxu0
        %v2749 = vadd.f32 0.0, %v2748
        %2750 = vmatmul.f32.gmra.mxu0 %v2665
        %v2751 = vpop.f32.mrf.mxu0
        %v2752 = vadd.f32 0.0, %v2751
        %2753 = vmatmul.f32.gmra.mxu0 %v2667
        %v2754 = vpop.f32.mrf.mxu0
        %v2755 = vadd.f32 0.0, %v2754
        %2756 = vmatmul.f32.gmra.mxu0 %v2669
        %v2757 = vpop.f32.mrf.mxu0
        %v2758 = vadd.f32 0.0, %v2757
        %2759 = vmatmul.f32.gmra.mxu0 %v2671
        %v2760 = vpop.f32.mrf.mxu0
        %v2761 = vadd.f32 0.0, %v2760
        %2762 = vmatmul.f32.gmra.mxu0 %v2673
        %v2763 = vpop.f32.mrf.mxu0
        %v2764 = vadd.f32 0.0, %v2763
        %2765 = vmatmul.f32.gmra.mxu0 %v2675
        %v2766 = vpop.f32.mrf.mxu0
        %v2767 = vadd.f32 0.0, %v2766
        %2768 = vmatmul.f32.gmra.mxu0 %v2677
        %v2769 = vpop.f32.mrf.mxu0
        %v2770 = vadd.f32 0.0, %v2769
        %2771 = vmatmul.f32.gmra.mxu0 %v2679
        %v2772 = vpop.f32.mrf.mxu0
        %v2773 = vadd.f32 0.0, %v2772
        %2774 = vmatmul.f32.gmra.mxu0 %v2681
        %v2775 = vpop.f32.mrf.mxu0
        %v2776 = vadd.f32 0.0, %v2775
        %2777 = vmatmul.f32.gmra.mxu0 %v2683
        %v2778 = vpop.f32.mrf.mxu0
        %v2779 = vadd.f32 0.0, %v2778
        %2780 = vmatmul.f32.gmra.mxu0 %v2685
        %v2781 = vpop.f32.mrf.mxu0
        %v2782 = vadd.f32 0.0, %v2781
        %2783 = vdwg.mxu0
        %v2784 = vsel %vm1900, %v2544, -inf
        %v2785 = vsel %vm1901, %v2547, -inf
        %v2786 = vsel %vm1902, %v2550, -inf
        %v2787 = vsel %vm1903, %v2553, -inf
        %v2788 = vsel %vm1904, %v2556, -inf
        %v2789 = vsel %vm1905, %v2559, -inf
        %v2790 = vsel %vm1906, %v2562, -inf
        %v2791 = vsel %vm1907, %v2565, -inf
        %v2792 = vsel %vm1908, %v2568, -inf
        %v2793 = vsel %vm1909, %v2571, -inf
        %v2794 = vsel %vm1910, %v2574, -inf
        %v2795 = vsel %vm1911, %v2577, -inf
        %v2796 = vsel %vm1912, %v2580, -inf
        %v2797 = vsel %vm1913, %v2583, -inf
        %v2798 = vsel %vm1914, %v2586, -inf
        %v2799 = vsel %vm1915, %v2589, -inf
        %v2800 = vsel %vm1900, %v2737, -inf
        %v2801 = vsel %vm1901, %v2740, -inf
        %v2802 = vsel %vm1902, %v2743, -inf
        %v2803 = vsel %vm1903, %v2746, -inf
        %v2804 = vsel %vm1904, %v2749, -inf
        %v2805 = vsel %vm1905, %v2752, -inf
        %v2806 = vsel %vm1906, %v2755, -inf
        %v2807 = vsel %vm1907, %v2758, -inf
        %v2808 = vsel %vm1908, %v2761, -inf
        %v2809 = vsel %vm1909, %v2764, -inf
        %v2810 = vsel %vm1910, %v2767, -inf
        %v2811 = vsel %vm1911, %v2770, -inf
        %v2812 = vsel %vm1912, %v2773, -inf
        %v2813 = vsel %vm1913, %v2776, -inf
        %v2814 = vsel %vm1914, %v2779, -inf
        %v2815 = vsel %vm1915, %v2782, -inf
        %2816 = vmax.xlane.f32.xlu0 %v2784
        %v2817 = vpop.xlane.xlu0 %2816
        %2818 = vmax.xlane.f32.xlu0 %v2785
        %v2819 = vpop.xlane.xlu0 %2818
        %2820 = vmax.xlane.f32.xlu0 %v2786
        %v2821 = vpop.xlane.xlu0 %2820
        %2822 = vmax.xlane.f32.xlu0 %v2787
        %v2823 = vpop.xlane.xlu0 %2822
        %2824 = vmax.xlane.f32.xlu0 %v2788
        %v2825 = vpop.xlane.xlu0 %2824
        %2826 = vmax.xlane.f32.xlu0 %v2789
        %v2827 = vpop.xlane.xlu0 %2826
        %2828 = vmax.xlane.f32.xlu0 %v2790
        %v2829 = vpop.xlane.xlu0 %2828
        %2830 = vmax.xlane.f32.xlu0 %v2791
        %v2831 = vpop.xlane.xlu0 %2830
        %2832 = vmax.xlane.f32.xlu0 %v2792
        %v2833 = vpop.xlane.xlu0 %2832
        %2834 = vmax.xlane.f32.xlu0 %v2793
        %v2835 = vpop.xlane.xlu0 %2834
        %2836 = vmax.xlane.f32.xlu0 %v2794
        %v2837 = vpop.xlane.xlu0 %2836
        %2838 = vmax.xlane.f32.xlu0 %v2795
        %v2839 = vpop.xlane.xlu0 %2838
        %2840 = vmax.xlane.f32.xlu0 %v2796
        %v2841 = vpop.xlane.xlu0 %2840
        %2842 = vmax.xlane.f32.xlu0 %v2797
        %v2843 = vpop.xlane.xlu0 %2842
        %2844 = vmax.xlane.f32.xlu0 %v2798
        %v2845 = vpop.xlane.xlu0 %2844
        %2846 = vmax.xlane.f32.xlu0 %v2799
        %v2847 = vpop.xlane.xlu0 %2846
        %2848 = vmax.xlane.f32.xlu0 %v2800
        %v2849 = vpop.xlane.xlu0 %2848
        %2850 = vmax.xlane.f32.xlu0 %v2801
        %v2851 = vpop.xlane.xlu0 %2850
        %2852 = vmax.xlane.f32.xlu0 %v2802
        %v2853 = vpop.xlane.xlu0 %2852
        %2854 = vmax.xlane.f32.xlu0 %v2803
        %v2855 = vpop.xlane.xlu0 %2854
        %2856 = vmax.xlane.f32.xlu0 %v2804
        %v2857 = vpop.xlane.xlu0 %2856
        %2858 = vmax.xlane.f32.xlu0 %v2805
        %v2859 = vpop.xlane.xlu0 %2858
        %2860 = vmax.xlane.f32.xlu0 %v2806
        %v2861 = vpop.xlane.xlu0 %2860
        %2862 = vmax.xlane.f32.xlu0 %v2807
        %v2863 = vpop.xlane.xlu0 %2862
        %2864 = vmax.xlane.f32.xlu0 %v2808
        %v2865 = vpop.xlane.xlu0 %2864
        %2866 = vmax.xlane.f32.xlu0 %v2809
        %v2867 = vpop.xlane.xlu0 %2866
        %2868 = vmax.xlane.f32.xlu0 %v2810
        %v2869 = vpop.xlane.xlu0 %2868
        %2870 = vmax.xlane.f32.xlu0 %v2811
        %v2871 = vpop.xlane.xlu0 %2870
        %2872 = vmax.xlane.f32.xlu0 %v2812
        %v2873 = vpop.xlane.xlu0 %2872
        %2874 = vmax.xlane.f32.xlu0 %v2813
        %v2875 = vpop.xlane.xlu0 %2874
        %2876 = vmax.xlane.f32.xlu0 %v2814
        %v2877 = vpop.xlane.xlu0 %2876
        %2878 = vmax.xlane.f32.xlu0 %v2815
        %v2879 = vpop.xlane.xlu0 %2878
        %v2880 = vsub.f32 %v2784, %v2817
        %v2881 = vsub.f32 %v2785, %v2819
        %v2882 = vsub.f32 %v2786, %v2821
        %v2883 = vsub.f32 %v2787, %v2823
        %v2884 = vsub.f32 %v2788, %v2825
        %v2885 = vsub.f32 %v2789, %v2827
        %v2886 = vsub.f32 %v2790, %v2829
        %v2887 = vsub.f32 %v2791, %v2831
        %v2888 = vsub.f32 %v2792, %v2833
        %v2889 = vsub.f32 %v2793, %v2835
        %v2890 = vsub.f32 %v2794, %v2837
        %v2891 = vsub.f32 %v2795, %v2839
        %v2892 = vsub.f32 %v2796, %v2841
        %v2893 = vsub.f32 %v2797, %v2843
        %v2894 = vsub.f32 %v2798, %v2845
        %v2895 = vsub.f32 %v2799, %v2847
        %v2896 = vsub.f32 %v2800, %v2849
        %v2897 = vsub.f32 %v2801, %v2851
        %v2898 = vsub.f32 %v2802, %v2853
        %v2899 = vsub.f32 %v2803, %v2855
        %v2900 = vsub.f32 %v2804, %v2857
        %v2901 = vsub.f32 %v2805, %v2859
        %v2902 = vsub.f32 %v2806, %v2861
        %v2903 = vsub.f32 %v2807, %v2863
        %v2904 = vsub.f32 %v2808, %v2865
        %v2905 = vsub.f32 %v2809, %v2867
        %v2906 = vsub.f32 %v2810, %v2869
        %v2907 = vsub.f32 %v2811, %v2871
        %v2908 = vsub.f32 %v2812, %v2873
        %v2909 = vsub.f32 %v2813, %v2875
        %v2910 = vsub.f32 %v2814, %v2877
        %v2911 = vsub.f32 %v2815, %v2879
        %v2912 = vmul.f32 %v2880, 1.442695
        %v2913 = vpow.pop %v2912
        %v2914 = vmul.f32 %v2881, 1.442695
        %v2915 = vpow.pop %v2914
        %v2916 = vmul.f32 %v2882, 1.442695
        %v2917 = vpow.pop %v2916
        %v2918 = vmul.f32 %v2883, 1.442695
        %v2919 = vpow.pop %v2918
        %v2920 = vmul.f32 %v2884, 1.442695
        %v2921 = vpow.pop %v2920
        %v2922 = vmul.f32 %v2885, 1.442695
        %v2923 = vpow.pop %v2922
        %v2924 = vmul.f32 %v2886, 1.442695
        %v2925 = vpow.pop %v2924
        %v2926 = vmul.f32 %v2887, 1.442695
        %v2927 = vpow.pop %v2926
        %v2928 = vmul.f32 %v2888, 1.442695
        %v2929 = vpow.pop %v2928
        %v2930 = vmul.f32 %v2889, 1.442695
        %v2931 = vpow.pop %v2930
        %v2932 = vmul.f32 %v2890, 1.442695
        %v2933 = vpow.pop %v2932
        %v2934 = vmul.f32 %v2891, 1.442695
        %v2935 = vpow.pop %v2934
        %v2936 = vmul.f32 %v2892, 1.442695
        %v2937 = vpow.pop %v2936
        %v2938 = vmul.f32 %v2893, 1.442695
        %v2939 = vpow.pop %v2938
        %v2940 = vmul.f32 %v2894, 1.442695
        %v2941 = vpow.pop %v2940
        %v2942 = vmul.f32 %v2895, 1.442695
        %v2943 = vpow.pop %v2942
        %v2944 = vmul.f32 %v2896, 1.442695
        %v2945 = vpow.pop %v2944
        %v2946 = vmul.f32 %v2897, 1.442695
        %v2947 = vpow.pop %v2946
        %v2948 = vmul.f32 %v2898, 1.442695
        %v2949 = vpow.pop %v2948
        %v2950 = vmul.f32 %v2899, 1.442695
        %v2951 = vpow.pop %v2950
        %v2952 = vmul.f32 %v2900, 1.442695
        %v2953 = vpow.pop %v2952
        %v2954 = vmul.f32 %v2901, 1.442695
        %v2955 = vpow.pop %v2954
        %v2956 = vmul.f32 %v2902, 1.442695
        %v2957 = vpow.pop %v2956
        %v2958 = vmul.f32 %v2903, 1.442695
        %v2959 = vpow.pop %v2958
        %v2960 = vmul.f32 %v2904, 1.442695
        %v2961 = vpow.pop %v2960
        %v2962 = vmul.f32 %v2905, 1.442695
        %v2963 = vpow.pop %v2962
        %v2964 = vmul.f32 %v2906, 1.442695
        %v2965 = vpow.pop %v2964
        %v2966 = vmul.f32 %v2907, 1.442695
        %v2967 = vpow.pop %v2966
        %v2968 = vmul.f32 %v2908, 1.442695
        %v2969 = vpow.pop %v2968
        %v2970 = vmul.f32 %v2909, 1.442695
        %v2971 = vpow.pop %v2970
        %v2972 = vmul.f32 %v2910, 1.442695
        %v2973 = vpow.pop %v2972
        %v2974 = vmul.f32 %v2911, 1.442695
        %v2975 = vpow.pop %v2974
        %2976 = vadd.xlane.f32.xlu0 %v2913
        %v2977 = vpop.xlane.xlu0 %2976
        %2978 = vadd.xlane.f32.xlu0 %v2915
        %v2979 = vpop.xlane.xlu0 %2978
        %2980 = vadd.xlane.f32.xlu0 %v2917
        %v2981 = vpop.xlane.xlu0 %2980
        %2982 = vadd.xlane.f32.xlu0 %v2919
        %v2983 = vpop.xlane.xlu0 %2982
        %2984 = vadd.xlane.f32.xlu0 %v2921
        %v2985 = vpop.xlane.xlu0 %2984
        %2986 = vadd.xlane.f32.xlu0 %v2923
        %v2987 = vpop.xlane.xlu0 %2986
        %2988 = vadd.xlane.f32.xlu0 %v2925
        %v2989 = vpop.xlane.xlu0 %2988
        %2990 = vadd.xlane.f32.xlu0 %v2927
        %v2991 = vpop.xlane.xlu0 %2990
        %2992 = vadd.xlane.f32.xlu0 %v2929
        %v2993 = vpop.xlane.xlu0 %2992
        %2994 = vadd.xlane.f32.xlu0 %v2931
        %v2995 = vpop.xlane.xlu0 %2994
        %2996 = vadd.xlane.f32.xlu0 %v2933
        %v2997 = vpop.xlane.xlu0 %2996
        %2998 = vadd.xlane.f32.xlu0 %v2935
        %v2999 = vpop.xlane.xlu0 %2998
        %3000 = vadd.xlane.f32.xlu0 %v2937
        %v3001 = vpop.xlane.xlu0 %3000
        %3002 = vadd.xlane.f32.xlu0 %v2939
        %v3003 = vpop.xlane.xlu0 %3002
        %3004 = vadd.xlane.f32.xlu0 %v2941
        %v3005 = vpop.xlane.xlu0 %3004
        %3006 = vadd.xlane.f32.xlu0 %v2943
        %v3007 = vpop.xlane.xlu0 %3006
        %3008 = vadd.xlane.f32.xlu0 %v2945
        %v3009 = vpop.xlane.xlu0 %3008
        %3010 = vadd.xlane.f32.xlu0 %v2947
        %v3011 = vpop.xlane.xlu0 %3010
        %3012 = vadd.xlane.f32.xlu0 %v2949
        %v3013 = vpop.xlane.xlu0 %3012
        %3014 = vadd.xlane.f32.xlu0 %v2951
        %v3015 = vpop.xlane.xlu0 %3014
        %3016 = vadd.xlane.f32.xlu0 %v2953
        %v3017 = vpop.xlane.xlu0 %3016
        %3018 = vadd.xlane.f32.xlu0 %v2955
        %v3019 = vpop.xlane.xlu0 %3018
        %3020 = vadd.xlane.f32.xlu0 %v2957
        %v3021 = vpop.xlane.xlu0 %3020
        %3022 = vadd.xlane.f32.xlu0 %v2959
        %v3023 = vpop.xlane.xlu0 %3022
        %3024 = vadd.xlane.f32.xlu0 %v2961
        %v3025 = vpop.xlane.xlu0 %3024
        %3026 = vadd.xlane.f32.xlu0 %v2963
        %v3027 = vpop.xlane.xlu0 %3026
        %3028 = vadd.xlane.f32.xlu0 %v2965
        %v3029 = vpop.xlane.xlu0 %3028
        %3030 = vadd.xlane.f32.xlu0 %v2967
        %v3031 = vpop.xlane.xlu0 %3030
        %3032 = vadd.xlane.f32.xlu0 %v2969
        %v3033 = vpop.xlane.xlu0 %3032
        %3034 = vadd.xlane.f32.xlu0 %v2971
        %v3035 = vpop.xlane.xlu0 %3034
        %3036 = vadd.xlane.f32.xlu0 %v2973
        %v3037 = vpop.xlane.xlu0 %3036
        %3038 = vadd.xlane.f32.xlu0 %v2975
        %v3039 = vpop.xlane.xlu0 %3038
        %v3040 = vrcp.pop %v2977
        %v3041 = vrcp.pop %v2979
        %v3042 = vrcp.pop %v2981
        %v3043 = vrcp.pop %v2983
        %v3044 = vrcp.pop %v2985
        %v3045 = vrcp.pop %v2987
        %v3046 = vrcp.pop %v2989
        %v3047 = vrcp.pop %v2991
        %v3048 = vrcp.pop %v2993
        %v3049 = vrcp.pop %v2995
        %v3050 = vrcp.pop %v2997
        %v3051 = vrcp.pop %v2999
        %v3052 = vrcp.pop %v3001
        %v3053 = vrcp.pop %v3003
        %v3054 = vrcp.pop %v3005
        %v3055 = vrcp.pop %v3007
        %v3056 = vrcp.pop %v3009
        %v3057 = vrcp.pop %v3011
        %v3058 = vrcp.pop %v3013
        %v3059 = vrcp.pop %v3015
        %v3060 = vrcp.pop %v3017
        %v3061 = vrcp.pop %v3019
        %v3062 = vrcp.pop %v3021
        %v3063 = vrcp.pop %v3023
        %v3064 = vrcp.pop %v3025
        %v3065 = vrcp.pop %v3027
        %v3066 = vrcp.pop %v3029
        %v3067 = vrcp.pop %v3031
        %v3068 = vrcp.pop %v3033
        %v3069 = vrcp.pop %v3035
        %v3070 = vrcp.pop %v3037
        %v3071 = vrcp.pop %v3039
        %v3072 = vmul.f32 %v2913, %v3040
        %v3073 = vmul.f32 %v2915, %v3041
        %v3074 = vmul.f32 %v2917, %v3042
        %v3075 = vmul.f32 %v2919, %v3043
        %v3076 = vmul.f32 %v2921, %v3044
        %v3077 = vmul.f32 %v2923, %v3045
        %v3078 = vmul.f32 %v2925, %v3046
        %v3079 = vmul.f32 %v2927, %v3047
        %v3080 = vmul.f32 %v2929, %v3048
        %v3081 = vmul.f32 %v2931, %v3049
        %v3082 = vmul.f32 %v2933, %v3050
        %v3083 = vmul.f32 %v2935, %v3051
        %v3084 = vmul.f32 %v2937, %v3052
        %v3085 = vmul.f32 %v2939, %v3053
        %v3086 = vmul.f32 %v2941, %v3054
        %v3087 = vmul.f32 %v2943, %v3055
        %v3088 = vmul.f32 %v2945, %v3056
        %v3089 = vmul.f32 %v2947, %v3057
        %v3090 = vmul.f32 %v2949, %v3058
        %v3091 = vmul.f32 %v2951, %v3059
        %v3092 = vmul.f32 %v2953, %v3060
        %v3093 = vmul.f32 %v2955, %v3061
        %v3094 = vmul.f32 %v2957, %v3062
        %v3095 = vmul.f32 %v2959, %v3063
        %v3096 = vmul.f32 %v2961, %v3064
        %v3097 = vmul.f32 %v2963, %v3065
        %v3098 = vmul.f32 %v2965, %v3066
        %v3099 = vmul.f32 %v2967, %v3067
        %v3100 = vmul.f32 %v2969, %v3068
        %v3101 = vmul.f32 %v2971, %v3069
        %v3102 = vmul.f32 %v2973, %v3070
        %v3103 = vmul.f32 %v2975, %v3071
        %3120 = vrot.lane.b32.xlu0 %v1431, 96
        %v3121 = vpop.permute.xlu0 %3120
        %3122 = vrot.lane.b32.xlu0 %v1434, 96
        %v3123 = vpop.permute.xlu0 %3122
        %3124 = vrot.lane.b32.xlu0 %v1437, 96
        %v3125 = vpop.permute.xlu0 %3124
        %3126 = vrot.lane.b32.xlu0 %v1440, 96
        %v3127 = vpop.permute.xlu0 %3126
        %3128 = vrot.lane.b32.xlu0 %v1443, 96
        %v3129 = vpop.permute.xlu0 %3128
        %3130 = vrot.lane.b32.xlu0 %v1446, 96
        %v3131 = vpop.permute.xlu0 %3130
        %3132 = vrot.lane.b32.xlu0 %v1449, 96
        %v3133 = vpop.permute.xlu0 %3132
        %3134 = vrot.lane.b32.xlu0 %v1452, 96
        %v3135 = vpop.permute.xlu0 %3134
        %3136 = vrot.lane.b32.xlu0 %v1455, 96
        %v3137 = vpop.permute.xlu0 %3136
        %3138 = vrot.lane.b32.xlu0 %v1458, 96
        %v3139 = vpop.permute.xlu0 %3138
        %3140 = vrot.lane.b32.xlu0 %v1461, 96
        %v3141 = vpop.permute.xlu0 %3140
        %3142 = vrot.lane.b32.xlu0 %v1464, 96
        %v3143 = vpop.permute.xlu0 %3142
        %3144 = vrot.lane.b32.xlu0 %v1467, 96
        %v3145 = vpop.permute.xlu0 %3144
        %3146 = vrot.lane.b32.xlu0 %v1470, 96
        %v3147 = vpop.permute.xlu0 %3146
        %3148 = vrot.lane.b32.xlu0 %v1473, 96
        %v3149 = vpop.permute.xlu0 %3148
        %3150 = vrot.lane.b32.xlu0 %v1476, 96
        %v3151 = vpop.permute.xlu0 %3150
        %3168 = vmatpush.msra.mxu0 %v3151
        %3169 = vmatpush.msra.mxu0 %v3149
        %3170 = vmatpush.msra.mxu0 %v3147
        %3171 = vmatpush.msra.mxu0 %v3145
        %3172 = vmatpush.msra.mxu0 %v3143
        %3173 = vmatpush.msra.mxu0 %v3141
        %3174 = vmatpush.msra.mxu0 %v3139
        %3175 = vmatpush.msra.mxu0 %v3137
        %3176 = vmatpush.msra.mxu0 %v3135
        %3177 = vmatpush.msra.mxu0 %v3133
        %3178 = vmatpush.msra.mxu0 %v3131
        %3179 = vmatpush.msra.mxu0 %v3129
        %3180 = vmatpush.msra.mxu0 %v3127
        %3181 = vmatpush.msra.mxu0 %v3125
        %3182 = vmatpush.msra.mxu0 %v3123
        %3183 = vmatpush.msra.mxu0 %v3121
        %3184 = vmatmul.f32.gmra.mxu0 %v3072
        %v3185 = vpop.f32.mrf.mxu0
        %v3186 = vadd.f32 0.0, %v3185
        %3187 = vmatmul.f32.gmra.mxu0 %v3073
        %v3188 = vpop.f32.mrf.mxu0
        %v3189 = vadd.f32 0.0, %v3188
        %3190 = vmatmul.f32.gmra.mxu0 %v3074
        %v3191 = vpop.f32.mrf.mxu0
        %v3192 = vadd.f32 0.0, %v3191
        %3193 = vmatmul.f32.gmra.mxu0 %v3075
        %v3194 = vpop.f32.mrf.mxu0
        %v3195 = vadd.f32 0.0, %v3194
        %3196 = vmatmul.f32.gmra.mxu0 %v3076
        %v3197 = vpop.f32.mrf.mxu0
        %v3198 = vadd.f32 0.0, %v3197
        %3199 = vmatmul.f32.gmra.mxu0 %v3077
        %v3200 = vpop.f32.mrf.mxu0
        %v3201 = vadd.f32 0.0, %v3200
        %3202 = vmatmul.f32.gmra.mxu0 %v3078
        %v3203 = vpop.f32.mrf.mxu0
        %v3204 = vadd.f32 0.0, %v3203
        %3205 = vmatmul.f32.gmra.mxu0 %v3079
        %v3206 = vpop.f32.mrf.mxu0
        %v3207 = vadd.f32 0.0, %v3206
        %3208 = vmatmul.f32.gmra.mxu0 %v3080
        %v3209 = vpop.f32.mrf.mxu0
        %v3210 = vadd.f32 0.0, %v3209
        %3211 = vmatmul.f32.gmra.mxu0 %v3081
        %v3212 = vpop.f32.mrf.mxu0
        %v3213 = vadd.f32 0.0, %v3212
        %3214 = vmatmul.f32.gmra.mxu0 %v3082
        %v3215 = vpop.f32.mrf.mxu0
        %v3216 = vadd.f32 0.0, %v3215
        %3217 = vmatmul.f32.gmra.mxu0 %v3083
        %v3218 = vpop.f32.mrf.mxu0
        %v3219 = vadd.f32 0.0, %v3218
        %3220 = vmatmul.f32.gmra.mxu0 %v3084
        %v3221 = vpop.f32.mrf.mxu0
        %v3222 = vadd.f32 0.0, %v3221
        %3223 = vmatmul.f32.gmra.mxu0 %v3085
        %v3224 = vpop.f32.mrf.mxu0
        %v3225 = vadd.f32 0.0, %v3224
        %3226 = vmatmul.f32.gmra.mxu0 %v3086
        %v3227 = vpop.f32.mrf.mxu0
        %v3228 = vadd.f32 0.0, %v3227
        %3229 = vmatmul.f32.gmra.mxu0 %v3087
        %v3230 = vpop.f32.mrf.mxu0
        %v3231 = vadd.f32 0.0, %v3230
        %3232 = vdwg.mxu0
        %3249 = vrot.lane.b32.xlu0 %v1479, 96
        %v3250 = vpop.permute.xlu0 %3249
        %3251 = vrot.lane.b32.xlu0 %v1482, 96
        %v3252 = vpop.permute.xlu0 %3251
        %3253 = vrot.lane.b32.xlu0 %v1485, 96
        %v3254 = vpop.permute.xlu0 %3253
        %3255 = vrot.lane.b32.xlu0 %v1488, 96
        %v3256 = vpop.permute.xlu0 %3255
        %3257 = vrot.lane.b32.xlu0 %v1491, 96
        %v3258 = vpop.permute.xlu0 %3257
        %3259 = vrot.lane.b32.xlu0 %v1494, 96
        %v3260 = vpop.permute.xlu0 %3259
        %3261 = vrot.lane.b32.xlu0 %v1497, 96
        %v3262 = vpop.permute.xlu0 %3261
        %3263 = vrot.lane.b32.xlu0 %v1500, 96
        %v3264 = vpop.permute.xlu0 %3263
        %3265 = vrot.lane.b32.xlu0 %v1503, 96
        %v3266 = vpop.permute.xlu0 %3265
        %3267 = vrot.lane.b32.xlu0 %v1506, 96
        %v3268 = vpop.permute.xlu0 %3267
        %3269 = vrot.lane.b32.xlu0 %v1509, 96
        %v3270 = vpop.permute.xlu0 %3269
        %3271 = vrot.lane.b32.xlu0 %v1512, 96
        %v3272 = vpop.permute.xlu0 %3271
        %3273 = vrot.lane.b32.xlu0 %v1515, 96
        %v3274 = vpop.permute.xlu0 %3273
        %3275 = vrot.lane.b32.xlu0 %v1518, 96
        %v3276 = vpop.permute.xlu0 %3275
        %3277 = vrot.lane.b32.xlu0 %v1521, 96
        %v3278 = vpop.permute.xlu0 %3277
        %3279 = vrot.lane.b32.xlu0 %v1524, 96
        %v3280 = vpop.permute.xlu0 %3279
        %3297 = vmatpush.msra.mxu0 %v3280
        %3298 = vmatpush.msra.mxu0 %v3278
        %3299 = vmatpush.msra.mxu0 %v3276
        %3300 = vmatpush.msra.mxu0 %v3274
        %3301 = vmatpush.msra.mxu0 %v3272
        %3302 = vmatpush.msra.mxu0 %v3270
        %3303 = vmatpush.msra.mxu0 %v3268
        %3304 = vmatpush.msra.mxu0 %v3266
        %3305 = vmatpush.msra.mxu0 %v3264
        %3306 = vmatpush.msra.mxu0 %v3262
        %3307 = vmatpush.msra.mxu0 %v3260
        %3308 = vmatpush.msra.mxu0 %v3258
        %3309 = vmatpush.msra.mxu0 %v3256
        %3310 = vmatpush.msra.mxu0 %v3254
        %3311 = vmatpush.msra.mxu0 %v3252
        %3312 = vmatpush.msra.mxu0 %v3250
        %3313 = vmatmul.f32.gmra.mxu0 %v3088
        %v3314 = vpop.f32.mrf.mxu0
        %v3315 = vadd.f32 0.0, %v3314
        %3316 = vmatmul.f32.gmra.mxu0 %v3089
        %v3317 = vpop.f32.mrf.mxu0
        %v3318 = vadd.f32 0.0, %v3317
        %3319 = vmatmul.f32.gmra.mxu0 %v3090
        %v3320 = vpop.f32.mrf.mxu0
        %v3321 = vadd.f32 0.0, %v3320
        %3322 = vmatmul.f32.gmra.mxu0 %v3091
        %v3323 = vpop.f32.mrf.mxu0
        %v3324 = vadd.f32 0.0, %v3323
        %3325 = vmatmul.f32.gmra.mxu0 %v3092
        %v3326 = vpop.f32.mrf.mxu0
        %v3327 = vadd.f32 0.0, %v3326
        %3328 = vmatmul.f32.gmra.mxu0 %v3093
        %v3329 = vpop.f32.mrf.mxu0
        %v3330 = vadd.f32 0.0, %v3329
        %3331 = vmatmul.f32.gmra.mxu0 %v3094
        %v3332 = vpop.f32.mrf.mxu0
        %v3333 = vadd.f32 0.0, %v3332
        %3334 = vmatmul.f32.gmra.mxu0 %v3095
        %v3335 = vpop.f32.mrf.mxu0
        %v3336 = vadd.f32 0.0, %v3335
        %3337 = vmatmul.f32.gmra.mxu0 %v3096
        %v3338 = vpop.f32.mrf.mxu0
        %v3339 = vadd.f32 0.0, %v3338
        %3340 = vmatmul.f32.gmra.mxu0 %v3097
        %v3341 = vpop.f32.mrf.mxu0
        %v3342 = vadd.f32 0.0, %v3341
        %3343 = vmatmul.f32.gmra.mxu0 %v3098
        %v3344 = vpop.f32.mrf.mxu0
        %v3345 = vadd.f32 0.0, %v3344
        %3346 = vmatmul.f32.gmra.mxu0 %v3099
        %v3347 = vpop.f32.mrf.mxu0
        %v3348 = vadd.f32 0.0, %v3347
        %3349 = vmatmul.f32.gmra.mxu0 %v3100
        %v3350 = vpop.f32.mrf.mxu0
        %v3351 = vadd.f32 0.0, %v3350
        %3352 = vmatmul.f32.gmra.mxu0 %v3101
        %v3353 = vpop.f32.mrf.mxu0
        %v3354 = vadd.f32 0.0, %v3353
        %3355 = vmatmul.f32.gmra.mxu0 %v3102
        %v3356 = vpop.f32.mrf.mxu0
        %v3357 = vadd.f32 0.0, %v3356
        %3358 = vmatmul.f32.gmra.mxu0 %v3103
        %v3359 = vpop.f32.mrf.mxu0
        %v3360 = vadd.f32 0.0, %v3359
        %3361 = vdwg.mxu0
        %3394 = vrot.lane.b32.xlu0 %v3186, 32
        %v3395 = vpop.permute.xlu0 %3394
        %3396 = vrot.lane.b32.xlu0 %v3189, 32
        %v3397 = vpop.permute.xlu0 %3396
        %3398 = vrot.lane.b32.xlu0 %v3192, 32
        %v3399 = vpop.permute.xlu0 %3398
        %3400 = vrot.lane.b32.xlu0 %v3195, 32
        %v3401 = vpop.permute.xlu0 %3400
        %3402 = vrot.lane.b32.xlu0 %v3198, 32
        %v3403 = vpop.permute.xlu0 %3402
        %3404 = vrot.lane.b32.xlu0 %v3201, 32
        %v3405 = vpop.permute.xlu0 %3404
        %3406 = vrot.lane.b32.xlu0 %v3204, 32
        %v3407 = vpop.permute.xlu0 %3406
        %3408 = vrot.lane.b32.xlu0 %v3207, 32
        %v3409 = vpop.permute.xlu0 %3408
        %3410 = vrot.lane.b32.xlu0 %v3210, 32
        %v3411 = vpop.permute.xlu0 %3410
        %3412 = vrot.lane.b32.xlu0 %v3213, 32
        %v3413 = vpop.permute.xlu0 %3412
        %3414 = vrot.lane.b32.xlu0 %v3216, 32
        %v3415 = vpop.permute.xlu0 %3414
        %3416 = vrot.lane.b32.xlu0 %v3219, 32
        %v3417 = vpop.permute.xlu0 %3416
        %3418 = vrot.lane.b32.xlu0 %v3222, 32
        %v3419 = vpop.permute.xlu0 %3418
        %3420 = vrot.lane.b32.xlu0 %v3225, 32
        %v3421 = vpop.permute.xlu0 %3420
        %3422 = vrot.lane.b32.xlu0 %v3228, 32
        %v3423 = vpop.permute.xlu0 %3422
        %3424 = vrot.lane.b32.xlu0 %v3231, 32
        %v3425 = vpop.permute.xlu0 %3424
        %3426 = vrot.lane.b32.xlu0 %v3315, 32
        %v3427 = vpop.permute.xlu0 %3426
        %3428 = vrot.lane.b32.xlu0 %v3318, 32
        %v3429 = vpop.permute.xlu0 %3428
        %3430 = vrot.lane.b32.xlu0 %v3321, 32
        %v3431 = vpop.permute.xlu0 %3430
        %3432 = vrot.lane.b32.xlu0 %v3324, 32
        %v3433 = vpop.permute.xlu0 %3432
        %3434 = vrot.lane.b32.xlu0 %v3327, 32
        %v3435 = vpop.permute.xlu0 %3434
        %3436 = vrot.lane.b32.xlu0 %v3330, 32
        %v3437 = vpop.permute.xlu0 %3436
        %3438 = vrot.lane.b32.xlu0 %v3333, 32
        %v3439 = vpop.permute.xlu0 %3438
        %3440 = vrot.lane.b32.xlu0 %v3336, 32
        %v3441 = vpop.permute.xlu0 %3440
        %3442 = vrot.lane.b32.xlu0 %v3339, 32
        %v3443 = vpop.permute.xlu0 %3442
        %3444 = vrot.lane.b32.xlu0 %v3342, 32
        %v3445 = vpop.permute.xlu0 %3444
        %3446 = vrot.lane.b32.xlu0 %v3345, 32
        %v3447 = vpop.permute.xlu0 %3446
        %3448 = vrot.lane.b32.xlu0 %v3348, 32
        %v3449 = vpop.permute.xlu0 %3448
        %3450 = vrot.lane.b32.xlu0 %v3351, 32
        %v3451 = vpop.permute.xlu0 %3450
        %3452 = vrot.lane.b32.xlu0 %v3354, 32
        %v3453 = vpop.permute.xlu0 %3452
        %3454 = vrot.lane.b32.xlu0 %v3357, 32
        %v3455 = vpop.permute.xlu0 %3454
        %3456 = vrot.lane.b32.xlu0 %v3360, 32
        %v3457 = vpop.permute.xlu0 %3456
        %vm3490 = vcmask 523520
        %3491 = vst.msk [vmem:[#allocation2] sm:$0xff] %vm3490, %v3395
        %3492 = vst.msk [vmem:[#allocation2 + $0x8] sm:$0xff] %vm3490, %v3397
        %3493 = vst.msk [vmem:[#allocation2 + $0x10] sm:$0xff] %vm3490, %v3399
        %3494 = vst.msk [vmem:[#allocation2 + $0x18] sm:$0xff] %vm3490, %v3401
        %3495 = vst.msk [vmem:[#allocation2 + $0x20] sm:$0xff] %vm3490, %v3403
        %3496 = vst.msk [vmem:[#allocation2 + $0x28] sm:$0xff] %vm3490, %v3405
        %3497 = vst.msk [vmem:[#allocation2 + $0x30] sm:$0xff] %vm3490, %v3407
        %3498 = vst.msk [vmem:[#allocation2 + $0x38] sm:$0xff] %vm3490, %v3409
        %3499 = vst.msk [vmem:[#allocation2 + $0x40] sm:$0xff] %vm3490, %v3411
        %3500 = vst.msk [vmem:[#allocation2 + $0x48] sm:$0xff] %vm3490, %v3413
        %3501 = vst.msk [vmem:[#allocation2 + $0x50] sm:$0xff] %vm3490, %v3415
        %3502 = vst.msk [vmem:[#allocation2 + $0x58] sm:$0xff] %vm3490, %v3417
        %3503 = vst.msk [vmem:[#allocation2 + $0x60] sm:$0xff] %vm3490, %v3419
        %3504 = vst.msk [vmem:[#allocation2 + $0x68] sm:$0xff] %vm3490, %v3421
        %3505 = vst.msk [vmem:[#allocation2 + $0x70] sm:$0xff] %vm3490, %v3423
        %3506 = vst.msk [vmem:[#allocation2 + $0x78] sm:$0xff] %vm3490, %v3425
        %3507 = vst.msk [vmem:[#allocation2 + $0x80] sm:$0xff] %vm3490, %v3427
        %3508 = vst.msk [vmem:[#allocation2 + $0x88] sm:$0xff] %vm3490, %v3429
        %3509 = vst.msk [vmem:[#allocation2 + $0x90] sm:$0xff] %vm3490, %v3431
        %3510 = vst.msk [vmem:[#allocation2 + $0x98] sm:$0xff] %vm3490, %v3433
        %3511 = vst.msk [vmem:[#allocation2 + $0xa0] sm:$0xff] %vm3490, %v3435
        %3512 = vst.msk [vmem:[#allocation2 + $0xa8] sm:$0xff] %vm3490, %v3437
        %3513 = vst.msk [vmem:[#allocation2 + $0xb0] sm:$0xff] %vm3490, %v3439
        %3514 = vst.msk [vmem:[#allocation2 + $0xb8] sm:$0xff] %vm3490, %v3441
        %3515 = vst.msk [vmem:[#allocation2 + $0xc0] sm:$0xff] %vm3490, %v3443
        %3516 = vst.msk [vmem:[#allocation2 + $0xc8] sm:$0xff] %vm3490, %v3445
        %3517 = vst.msk [vmem:[#allocation2 + $0xd0] sm:$0xff] %vm3490, %v3447
        %3518 = vst.msk [vmem:[#allocation2 + $0xd8] sm:$0xff] %vm3490, %v3449
        %3519 = vst.msk [vmem:[#allocation2 + $0xe0] sm:$0xff] %vm3490, %v3451
        %3520 = vst.msk [vmem:[#allocation2 + $0xe8] sm:$0xff] %vm3490, %v3453
        %3521 = vst.msk [vmem:[#allocation2 + $0xf0] sm:$0xff] %vm3490, %v3455
        %3522 = vst.msk [vmem:[#allocation2 + $0xf8] sm:$0xff] %vm3490, %v3457
        %3523 = vrot.lane.b32.xlu0 %v753, 64
        %v3524 = vpop.permute.xlu0 %3523
        %3525 = vrot.lane.b32.xlu0 %v756, 64
        %v3526 = vpop.permute.xlu0 %3525
        %3527 = vrot.lane.b32.xlu0 %v759, 64
        %v3528 = vpop.permute.xlu0 %3527
        %3529 = vrot.lane.b32.xlu0 %v762, 64
        %v3530 = vpop.permute.xlu0 %3529
        %3531 = vrot.lane.b32.xlu0 %v765, 64
        %v3532 = vpop.permute.xlu0 %3531
        %3533 = vrot.lane.b32.xlu0 %v768, 64
        %v3534 = vpop.permute.xlu0 %3533
        %3535 = vrot.lane.b32.xlu0 %v771, 64
        %v3536 = vpop.permute.xlu0 %3535
        %3537 = vrot.lane.b32.xlu0 %v774, 64
        %v3538 = vpop.permute.xlu0 %3537
        %3539 = vrot.lane.b32.xlu0 %v777, 64
        %v3540 = vpop.permute.xlu0 %3539
        %3541 = vrot.lane.b32.xlu0 %v780, 64
        %v3542 = vpop.permute.xlu0 %3541
        %3543 = vrot.lane.b32.xlu0 %v783, 64
        %v3544 = vpop.permute.xlu0 %3543
        %3545 = vrot.lane.b32.xlu0 %v786, 64
        %v3546 = vpop.permute.xlu0 %3545
        %3547 = vrot.lane.b32.xlu0 %v789, 64
        %v3548 = vpop.permute.xlu0 %3547
        %3549 = vrot.lane.b32.xlu0 %v792, 64
        %v3550 = vpop.permute.xlu0 %3549
        %3551 = vrot.lane.b32.xlu0 %v795, 64
        %v3552 = vpop.permute.xlu0 %3551
        %3553 = vrot.lane.b32.xlu0 %v798, 64
        %v3554 = vpop.permute.xlu0 %3553
        %3555 = vrot.lane.b32.xlu0 %v1092, 64
        %v3556 = vpop.permute.xlu0 %3555
        %3557 = vrot.lane.b32.xlu0 %v1095, 64
        %v3558 = vpop.permute.xlu0 %3557
        %3559 = vrot.lane.b32.xlu0 %v1098, 64
        %v3560 = vpop.permute.xlu0 %3559
        %3561 = vrot.lane.b32.xlu0 %v1101, 64
        %v3562 = vpop.permute.xlu0 %3561
        %3563 = vrot.lane.b32.xlu0 %v1104, 64
        %v3564 = vpop.permute.xlu0 %3563
        %3565 = vrot.lane.b32.xlu0 %v1107, 64
        %v3566 = vpop.permute.xlu0 %3565
        %3567 = vrot.lane.b32.xlu0 %v1110, 64
        %v3568 = vpop.permute.xlu0 %3567
        %3569 = vrot.lane.b32.xlu0 %v1113, 64
        %v3570 = vpop.permute.xlu0 %3569
        %3571 = vrot.lane.b32.xlu0 %v1116, 64
        %v3572 = vpop.permute.xlu0 %3571
        %3573 = vrot.lane.b32.xlu0 %v1119, 64
        %v3574 = vpop.permute.xlu0 %3573
        %3575 = vrot.lane.b32.xlu0 %v1122, 64
        %v3576 = vpop.permute.xlu0 %3575
        %3577 = vrot.lane.b32.xlu0 %v1125, 64
        %v3578 = vpop.permute.xlu0 %3577
        %3579 = vrot.lane.b32.xlu0 %v1128, 64
        %v3580 = vpop.permute.xlu0 %3579
        %3581 = vrot.lane.b32.xlu0 %v1131, 64
        %v3582 = vpop.permute.xlu0 %3581
        %3583 = vrot.lane.b32.xlu0 %v1134, 64
        %v3584 = vpop.permute.xlu0 %3583
        %3585 = vrot.lane.b32.xlu0 %v1137, 64
        %v3586 = vpop.permute.xlu0 %3585
        %v3587 = vsel %vm1561, %v3524, 0
        %v3589 = vsel %vm1561, %v3526, 0
        %v3591 = vsel %vm1561, %v3528, 0
        %v3593 = vsel %vm1561, %v3530, 0
        %v3595 = vsel %vm1561, %v3532, 0
        %v3597 = vsel %vm1561, %v3534, 0
        %v3599 = vsel %vm1561, %v3536, 0
        %v3601 = vsel %vm1561, %v3538, 0
        %v3603 = vsel %vm1561, %v3540, 0
        %v3605 = vsel %vm1561, %v3542, 0
        %v3607 = vsel %vm1561, %v3544, 0
        %v3609 = vsel %vm1561, %v3546, 0
        %v3611 = vsel %vm1561, %v3548, 0
        %v3613 = vsel %vm1561, %v3550, 0
        %v3615 = vsel %vm1561, %v3552, 0
        %v3617 = vsel %vm1561, %v3554, 0
        %v3619 = vsel %vm1561, %v3556, 0
        %v3621 = vsel %vm1561, %v3558, 0
        %v3623 = vsel %vm1561, %v3560, 0
        %v3625 = vsel %vm1561, %v3562, 0
        %v3627 = vsel %vm1561, %v3564, 0
        %v3629 = vsel %vm1561, %v3566, 0
        %v3631 = vsel %vm1561, %v3568, 0
        %v3633 = vsel %vm1561, %v3570, 0
        %v3635 = vsel %vm1561, %v3572, 0
        %v3637 = vsel %vm1561, %v3574, 0
        %v3639 = vsel %vm1561, %v3576, 0
        %v3641 = vsel %vm1561, %v3578, 0
        %v3643 = vsel %vm1561, %v3580, 0
        %v3645 = vsel %vm1561, %v3582, 0
        %v3647 = vsel %vm1561, %v3584, 0
        %v3649 = vsel %vm1561, %v3586, 0
        %3651 = vmatpush.xpose.msra.mxu0 %v3649
        %3652 = vmatpush.xpose.msra.mxu0 %v3647
        %3653 = vmatpush.xpose.msra.mxu0 %v3645
        %3654 = vmatpush.xpose.msra.mxu0 %v3643
        %3655 = vmatpush.xpose.msra.mxu0 %v3641
        %3656 = vmatpush.xpose.msra.mxu0 %v3639
        %3657 = vmatpush.xpose.msra.mxu0 %v3637
        %3658 = vmatpush.xpose.msra.mxu0 %v3635
        %3659 = vmatpush.xpose.msra.mxu0 %v3633
        %3660 = vmatpush.xpose.msra.mxu0 %v3631
        %3661 = vmatpush.xpose.msra.mxu0 %v3629
        %3662 = vmatpush.xpose.msra.mxu0 %v3627
        %3663 = vmatpush.xpose.msra.mxu0 %v3625
        %3664 = vmatpush.xpose.msra.mxu0 %v3623
        %3665 = vmatpush.xpose.msra.mxu0 %v3621
        %3666 = vmatpush.xpose.msra.mxu0 %v3619
        %3667 = vmatmul.f32.gmra.mxu0 %v3587
        %v3668 = vpop.f32.mrf.mxu0
        %v3669 = vadd.f32 0.0, %v3668
        %3670 = vmatmul.f32.gmra.mxu0 %v3589
        %v3671 = vpop.f32.mrf.mxu0
        %v3672 = vadd.f32 0.0, %v3671
        %3673 = vmatmul.f32.gmra.mxu0 %v3591
        %v3674 = vpop.f32.mrf.mxu0
        %v3675 = vadd.f32 0.0, %v3674
        %3676 = vmatmul.f32.gmra.mxu0 %v3593
        %v3677 = vpop.f32.mrf.mxu0
        %v3678 = vadd.f32 0.0, %v3677
        %3679 = vmatmul.f32.gmra.mxu0 %v3595
        %v3680 = vpop.f32.mrf.mxu0
        %v3681 = vadd.f32 0.0, %v3680
        %3682 = vmatmul.f32.gmra.mxu0 %v3597
        %v3683 = vpop.f32.mrf.mxu0
        %v3684 = vadd.f32 0.0, %v3683
        %3685 = vmatmul.f32.gmra.mxu0 %v3599
        %v3686 = vpop.f32.mrf.mxu0
        %v3687 = vadd.f32 0.0, %v3686
        %3688 = vmatmul.f32.gmra.mxu0 %v3601
        %v3689 = vpop.f32.mrf.mxu0
        %v3690 = vadd.f32 0.0, %v3689
        %3691 = vmatmul.f32.gmra.mxu0 %v3603
        %v3692 = vpop.f32.mrf.mxu0
        %v3693 = vadd.f32 0.0, %v3692
        %3694 = vmatmul.f32.gmra.mxu0 %v3605
        %v3695 = vpop.f32.mrf.mxu0
        %v3696 = vadd.f32 0.0, %v3695
        %3697 = vmatmul.f32.gmra.mxu0 %v3607
        %v3698 = vpop.f32.mrf.mxu0
        %v3699 = vadd.f32 0.0, %v3698
        %3700 = vmatmul.f32.gmra.mxu0 %v3609
        %v3701 = vpop.f32.mrf.mxu0
        %v3702 = vadd.f32 0.0, %v3701
        %3703 = vmatmul.f32.gmra.mxu0 %v3611
        %v3704 = vpop.f32.mrf.mxu0
        %v3705 = vadd.f32 0.0, %v3704
        %3706 = vmatmul.f32.gmra.mxu0 %v3613
        %v3707 = vpop.f32.mrf.mxu0
        %v3708 = vadd.f32 0.0, %v3707
        %3709 = vmatmul.f32.gmra.mxu0 %v3615
        %v3710 = vpop.f32.mrf.mxu0
        %v3711 = vadd.f32 0.0, %v3710
        %3712 = vmatmul.f32.gmra.mxu0 %v3617
        %v3713 = vpop.f32.mrf.mxu0
        %v3714 = vadd.f32 0.0, %v3713
        %3715 = vdwg.mxu0
        %3716 = vrot.lane.b32.xlu0 %v801, 64
        %v3717 = vpop.permute.xlu0 %3716
        %3718 = vrot.lane.b32.xlu0 %v804, 64
        %v3719 = vpop.permute.xlu0 %3718
        %3720 = vrot.lane.b32.xlu0 %v807, 64
        %v3721 = vpop.permute.xlu0 %3720
        %3722 = vrot.lane.b32.xlu0 %v810, 64
        %v3723 = vpop.permute.xlu0 %3722
        %3724 = vrot.lane.b32.xlu0 %v813, 64
        %v3725 = vpop.permute.xlu0 %3724
        %3726 = vrot.lane.b32.xlu0 %v816, 64
        %v3727 = vpop.permute.xlu0 %3726
        %3728 = vrot.lane.b32.xlu0 %v819, 64
        %v3729 = vpop.permute.xlu0 %3728
        %3730 = vrot.lane.b32.xlu0 %v822, 64
        %v3731 = vpop.permute.xlu0 %3730
        %3732 = vrot.lane.b32.xlu0 %v825, 64
        %v3733 = vpop.permute.xlu0 %3732
        %3734 = vrot.lane.b32.xlu0 %v828, 64
        %v3735 = vpop.permute.xlu0 %3734
        %3736 = vrot.lane.b32.xlu0 %v831, 64
        %v3737 = vpop.permute.xlu0 %3736
        %3738 = vrot.lane.b32.xlu0 %v834, 64
        %v3739 = vpop.permute.xlu0 %3738
        %3740 = vrot.lane.b32.xlu0 %v837, 64
        %v3741 = vpop.permute.xlu0 %3740
        %3742 = vrot.lane.b32.xlu0 %v840, 64
        %v3743 = vpop.permute.xlu0 %3742
        %3744 = vrot.lane.b32.xlu0 %v843, 64
        %v3745 = vpop.permute.xlu0 %3744
        %3746 = vrot.lane.b32.xlu0 %v846, 64
        %v3747 = vpop.permute.xlu0 %3746
        %3748 = vrot.lane.b32.xlu0 %v1140, 64
        %v3749 = vpop.permute.xlu0 %3748
        %3750 = vrot.lane.b32.xlu0 %v1143, 64
        %v3751 = vpop.permute.xlu0 %3750
        %3752 = vrot.lane.b32.xlu0 %v1146, 64
        %v3753 = vpop.permute.xlu0 %3752
        %3754 = vrot.lane.b32.xlu0 %v1149, 64
        %v3755 = vpop.permute.xlu0 %3754
        %3756 = vrot.lane.b32.xlu0 %v1152, 64
        %v3757 = vpop.permute.xlu0 %3756
        %3758 = vrot.lane.b32.xlu0 %v1155, 64
        %v3759 = vpop.permute.xlu0 %3758
        %3760 = vrot.lane.b32.xlu0 %v1158, 64
        %v3761 = vpop.permute.xlu0 %3760
        %3762 = vrot.lane.b32.xlu0 %v1161, 64
        %v3763 = vpop.permute.xlu0 %3762
        %3764 = vrot.lane.b32.xlu0 %v1164, 64
        %v3765 = vpop.permute.xlu0 %3764
        %3766 = vrot.lane.b32.xlu0 %v1167, 64
        %v3767 = vpop.permute.xlu0 %3766
        %3768 = vrot.lane.b32.xlu0 %v1170, 64
        %v3769 = vpop.permute.xlu0 %3768
        %3770 = vrot.lane.b32.xlu0 %v1173, 64
        %v3771 = vpop.permute.xlu0 %3770
        %3772 = vrot.lane.b32.xlu0 %v1176, 64
        %v3773 = vpop.permute.xlu0 %3772
        %3774 = vrot.lane.b32.xlu0 %v1179, 64
        %v3775 = vpop.permute.xlu0 %3774
        %3776 = vrot.lane.b32.xlu0 %v1182, 64
        %v3777 = vpop.permute.xlu0 %3776
        %3778 = vrot.lane.b32.xlu0 %v1185, 64
        %v3779 = vpop.permute.xlu0 %3778
        %v3780 = vsel %vm1561, %v3717, 0
        %v3782 = vsel %vm1561, %v3719, 0
        %v3784 = vsel %vm1561, %v3721, 0
        %v3786 = vsel %vm1561, %v3723, 0
        %v3788 = vsel %vm1561, %v3725, 0
        %v3790 = vsel %vm1561, %v3727, 0
        %v3792 = vsel %vm1561, %v3729, 0
        %v3794 = vsel %vm1561, %v3731, 0
        %v3796 = vsel %vm1561, %v3733, 0
        %v3798 = vsel %vm1561, %v3735, 0
        %v3800 = vsel %vm1561, %v3737, 0
        %v3802 = vsel %vm1561, %v3739, 0
        %v3804 = vsel %vm1561, %v3741, 0
        %v3806 = vsel %vm1561, %v3743, 0
        %v3808 = vsel %vm1561, %v3745, 0
        %v3810 = vsel %vm1561, %v3747, 0
        %v3812 = vsel %vm1561, %v3749, 0
        %v3814 = vsel %vm1561, %v3751, 0
        %v3816 = vsel %vm1561, %v3753, 0
        %v3818 = vsel %vm1561, %v3755, 0
        %v3820 = vsel %vm1561, %v3757, 0
        %v3822 = vsel %vm1561, %v3759, 0
        %v3824 = vsel %vm1561, %v3761, 0
        %v3826 = vsel %vm1561, %v3763, 0
        %v3828 = vsel %vm1561, %v3765, 0
        %v3830 = vsel %vm1561, %v3767, 0
        %v3832 = vsel %vm1561, %v3769, 0
        %v3834 = vsel %vm1561, %v3771, 0
        %v3836 = vsel %vm1561, %v3773, 0
        %v3838 = vsel %vm1561, %v3775, 0
        %v3840 = vsel %vm1561, %v3777, 0
        %v3842 = vsel %vm1561, %v3779, 0
        %3844 = vmatpush.xpose.msra.mxu0 %v3842
        %3845 = vmatpush.xpose.msra.mxu0 %v3840
        %3846 = vmatpush.xpose.msra.mxu0 %v3838
        %3847 = vmatpush.xpose.msra.mxu0 %v3836
        %3848 = vmatpush.xpose.msra.mxu0 %v3834
        %3849 = vmatpush.xpose.msra.mxu0 %v3832
        %3850 = vmatpush.xpose.msra.mxu0 %v3830
        %3851 = vmatpush.xpose.msra.mxu0 %v3828
        %3852 = vmatpush.xpose.msra.mxu0 %v3826
        %3853 = vmatpush.xpose.msra.mxu0 %v3824
        %3854 = vmatpush.xpose.msra.mxu0 %v3822
        %3855 = vmatpush.xpose.msra.mxu0 %v3820
        %3856 = vmatpush.xpose.msra.mxu0 %v3818
        %3857 = vmatpush.xpose.msra.mxu0 %v3816
        %3858 = vmatpush.xpose.msra.mxu0 %v3814
        %3859 = vmatpush.xpose.msra.mxu0 %v3812
        %3860 = vmatmul.f32.gmra.mxu0 %v3780
        %v3861 = vpop.f32.mrf.mxu0
        %v3862 = vadd.f32 0.0, %v3861
        %3863 = vmatmul.f32.gmra.mxu0 %v3782
        %v3864 = vpop.f32.mrf.mxu0
        %v3865 = vadd.f32 0.0, %v3864
        %3866 = vmatmul.f32.gmra.mxu0 %v3784
        %v3867 = vpop.f32.mrf.mxu0
        %v3868 = vadd.f32 0.0, %v3867
        %3869 = vmatmul.f32.gmra.mxu0 %v3786
        %v3870 = vpop.f32.mrf.mxu0
        %v3871 = vadd.f32 0.0, %v3870
        %3872 = vmatmul.f32.gmra.mxu0 %v3788
        %v3873 = vpop.f32.mrf.mxu0
        %v3874 = vadd.f32 0.0, %v3873
        %3875 = vmatmul.f32.gmra.mxu0 %v3790
        %v3876 = vpop.f32.mrf.mxu0
        %v3877 = vadd.f32 0.0, %v3876
        %3878 = vmatmul.f32.gmra.mxu0 %v3792
        %v3879 = vpop.f32.mrf.mxu0
        %v3880 = vadd.f32 0.0, %v3879
        %3881 = vmatmul.f32.gmra.mxu0 %v3794
        %v3882 = vpop.f32.mrf.mxu0
        %v3883 = vadd.f32 0.0, %v3882
        %3884 = vmatmul.f32.gmra.mxu0 %v3796
        %v3885 = vpop.f32.mrf.mxu0
        %v3886 = vadd.f32 0.0, %v3885
        %3887 = vmatmul.f32.gmra.mxu0 %v3798
        %v3888 = vpop.f32.mrf.mxu0
        %v3889 = vadd.f32 0.0, %v3888
        %3890 = vmatmul.f32.gmra.mxu0 %v3800
        %v3891 = vpop.f32.mrf.mxu0
        %v3892 = vadd.f32 0.0, %v3891
        %3893 = vmatmul.f32.gmra.mxu0 %v3802
        %v3894 = vpop.f32.mrf.mxu0
        %v3895 = vadd.f32 0.0, %v3894
        %3896 = vmatmul.f32.gmra.mxu0 %v3804
        %v3897 = vpop.f32.mrf.mxu0
        %v3898 = vadd.f32 0.0, %v3897
        %3899 = vmatmul.f32.gmra.mxu0 %v3806
        %v3900 = vpop.f32.mrf.mxu0
        %v3901 = vadd.f32 0.0, %v3900
        %3902 = vmatmul.f32.gmra.mxu0 %v3808
        %v3903 = vpop.f32.mrf.mxu0
        %v3904 = vadd.f32 0.0, %v3903
        %3905 = vmatmul.f32.gmra.mxu0 %v3810
        %v3906 = vpop.f32.mrf.mxu0
        %v3907 = vadd.f32 0.0, %v3906
        %3908 = vdwg.mxu0
        %v3909 = vsel %vm1900, %v3669, -inf
        %v3910 = vsel %vm1901, %v3672, -inf
        %v3911 = vsel %vm1902, %v3675, -inf
        %v3912 = vsel %vm1903, %v3678, -inf
        %v3913 = vsel %vm1904, %v3681, -inf
        %v3914 = vsel %vm1905, %v3684, -inf
        %v3915 = vsel %vm1906, %v3687, -inf
        %v3916 = vsel %vm1907, %v3690, -inf
        %v3917 = vsel %vm1908, %v3693, -inf
        %v3918 = vsel %vm1909, %v3696, -inf
        %v3919 = vsel %vm1910, %v3699, -inf
        %v3920 = vsel %vm1911, %v3702, -inf
        %v3921 = vsel %vm1912, %v3705, -inf
        %v3922 = vsel %vm1913, %v3708, -inf
        %v3923 = vsel %vm1914, %v3711, -inf
        %v3924 = vsel %vm1915, %v3714, -inf
        %v3925 = vsel %vm1900, %v3862, -inf
        %v3926 = vsel %vm1901, %v3865, -inf
        %v3927 = vsel %vm1902, %v3868, -inf
        %v3928 = vsel %vm1903, %v3871, -inf
        %v3929 = vsel %vm1904, %v3874, -inf
        %v3930 = vsel %vm1905, %v3877, -inf
        %v3931 = vsel %vm1906, %v3880, -inf
        %v3932 = vsel %vm1907, %v3883, -inf
        %v3933 = vsel %vm1908, %v3886, -inf
        %v3934 = vsel %vm1909, %v3889, -inf
        %v3935 = vsel %vm1910, %v3892, -inf
        %v3936 = vsel %vm1911, %v3895, -inf
        %v3937 = vsel %vm1912, %v3898, -inf
        %v3938 = vsel %vm1913, %v3901, -inf
        %v3939 = vsel %vm1914, %v3904, -inf
        %v3940 = vsel %vm1915, %v3907, -inf
        %3941 = vmax.xlane.f32.xlu0 %v3909
        %v3942 = vpop.xlane.xlu0 %3941
        %3943 = vmax.xlane.f32.xlu0 %v3910
        %v3944 = vpop.xlane.xlu0 %3943
        %3945 = vmax.xlane.f32.xlu0 %v3911
        %v3946 = vpop.xlane.xlu0 %3945
        %3947 = vmax.xlane.f32.xlu0 %v3912
        %v3948 = vpop.xlane.xlu0 %3947
        %3949 = vmax.xlane.f32.xlu0 %v3913
        %v3950 = vpop.xlane.xlu0 %3949
        %3951 = vmax.xlane.f32.xlu0 %v3914
        %v3952 = vpop.xlane.xlu0 %3951
        %3953 = vmax.xlane.f32.xlu0 %v3915
        %v3954 = vpop.xlane.xlu0 %3953
        %3955 = vmax.xlane.f32.xlu0 %v3916
        %v3956 = vpop.xlane.xlu0 %3955
        %3957 = vmax.xlane.f32.xlu0 %v3917
        %v3958 = vpop.xlane.xlu0 %3957
        %3959 = vmax.xlane.f32.xlu0 %v3918
        %v3960 = vpop.xlane.xlu0 %3959
        %3961 = vmax.xlane.f32.xlu0 %v3919
        %v3962 = vpop.xlane.xlu0 %3961
        %3963 = vmax.xlane.f32.xlu0 %v3920
        %v3964 = vpop.xlane.xlu0 %3963
        %3965 = vmax.xlane.f32.xlu0 %v3921
        %v3966 = vpop.xlane.xlu0 %3965
        %3967 = vmax.xlane.f32.xlu0 %v3922
        %v3968 = vpop.xlane.xlu0 %3967
        %3969 = vmax.xlane.f32.xlu0 %v3923
        %v3970 = vpop.xlane.xlu0 %3969
        %3971 = vmax.xlane.f32.xlu0 %v3924
        %v3972 = vpop.xlane.xlu0 %3971
        %3973 = vmax.xlane.f32.xlu0 %v3925
        %v3974 = vpop.xlane.xlu0 %3973
        %3975 = vmax.xlane.f32.xlu0 %v3926
        %v3976 = vpop.xlane.xlu0 %3975
        %3977 = vmax.xlane.f32.xlu0 %v3927
        %v3978 = vpop.xlane.xlu0 %3977
        %3979 = vmax.xlane.f32.xlu0 %v3928
        %v3980 = vpop.xlane.xlu0 %3979
        %3981 = vmax.xlane.f32.xlu0 %v3929
        %v3982 = vpop.xlane.xlu0 %3981
        %3983 = vmax.xlane.f32.xlu0 %v3930
        %v3984 = vpop.xlane.xlu0 %3983
        %3985 = vmax.xlane.f32.xlu0 %v3931
        %v3986 = vpop.xlane.xlu0 %3985
        %3987 = vmax.xlane.f32.xlu0 %v3932
        %v3988 = vpop.xlane.xlu0 %3987
        %3989 = vmax.xlane.f32.xlu0 %v3933
        %v3990 = vpop.xlane.xlu0 %3989
        %3991 = vmax.xlane.f32.xlu0 %v3934
        %v3992 = vpop.xlane.xlu0 %3991
        %3993 = vmax.xlane.f32.xlu0 %v3935
        %v3994 = vpop.xlane.xlu0 %3993
        %3995 = vmax.xlane.f32.xlu0 %v3936
        %v3996 = vpop.xlane.xlu0 %3995
        %3997 = vmax.xlane.f32.xlu0 %v3937
        %v3998 = vpop.xlane.xlu0 %3997
        %3999 = vmax.xlane.f32.xlu0 %v3938
        %v4000 = vpop.xlane.xlu0 %3999
        %4001 = vmax.xlane.f32.xlu0 %v3939
        %v4002 = vpop.xlane.xlu0 %4001
        %4003 = vmax.xlane.f32.xlu0 %v3940
        %v4004 = vpop.xlane.xlu0 %4003
        %v4005 = vsub.f32 %v3909, %v3942
        %v4006 = vsub.f32 %v3910, %v3944
        %v4007 = vsub.f32 %v3911, %v3946
        %v4008 = vsub.f32 %v3912, %v3948
        %v4009 = vsub.f32 %v3913, %v3950
        %v4010 = vsub.f32 %v3914, %v3952
        %v4011 = vsub.f32 %v3915, %v3954
        %v4012 = vsub.f32 %v3916, %v3956
        %v4013 = vsub.f32 %v3917, %v3958
        %v4014 = vsub.f32 %v3918, %v3960
        %v4015 = vsub.f32 %v3919, %v3962
        %v4016 = vsub.f32 %v3920, %v3964
        %v4017 = vsub.f32 %v3921, %v3966
        %v4018 = vsub.f32 %v3922, %v3968
        %v4019 = vsub.f32 %v3923, %v3970
        %v4020 = vsub.f32 %v3924, %v3972
        %v4021 = vsub.f32 %v3925, %v3974
        %v4022 = vsub.f32 %v3926, %v3976
        %v4023 = vsub.f32 %v3927, %v3978
        %v4024 = vsub.f32 %v3928, %v3980
        %v4025 = vsub.f32 %v3929, %v3982
        %v4026 = vsub.f32 %v3930, %v3984
        %v4027 = vsub.f32 %v3931, %v3986
        %v4028 = vsub.f32 %v3932, %v3988
        %v4029 = vsub.f32 %v3933, %v3990
        %v4030 = vsub.f32 %v3934, %v3992
        %v4031 = vsub.f32 %v3935, %v3994
        %v4032 = vsub.f32 %v3936, %v3996
        %v4033 = vsub.f32 %v3937, %v3998
        %v4034 = vsub.f32 %v3938, %v4000
        %v4035 = vsub.f32 %v3939, %v4002
        %v4036 = vsub.f32 %v3940, %v4004
        %v4037 = vmul.f32 %v4005, 1.442695
        %v4038 = vpow.pop %v4037
        %v4039 = vmul.f32 %v4006, 1.442695
        %v4040 = vpow.pop %v4039
        %v4041 = vmul.f32 %v4007, 1.442695
        %v4042 = vpow.pop %v4041
        %v4043 = vmul.f32 %v4008, 1.442695
        %v4044 = vpow.pop %v4043
        %v4045 = vmul.f32 %v4009, 1.442695
        %v4046 = vpow.pop %v4045
        %v4047 = vmul.f32 %v4010, 1.442695
        %v4048 = vpow.pop %v4047
        %v4049 = vmul.f32 %v4011, 1.442695
        %v4050 = vpow.pop %v4049
        %v4051 = vmul.f32 %v4012, 1.442695
        %v4052 = vpow.pop %v4051
        %v4053 = vmul.f32 %v4013, 1.442695
        %v4054 = vpow.pop %v4053
        %v4055 = vmul.f32 %v4014, 1.442695
        %v4056 = vpow.pop %v4055
        %v4057 = vmul.f32 %v4015, 1.442695
        %v4058 = vpow.pop %v4057
        %v4059 = vmul.f32 %v4016, 1.442695
        %v4060 = vpow.pop %v4059
        %v4061 = vmul.f32 %v4017, 1.442695
        %v4062 = vpow.pop %v4061
        %v4063 = vmul.f32 %v4018, 1.442695
        %v4064 = vpow.pop %v4063
        %v4065 = vmul.f32 %v4019, 1.442695
        %v4066 = vpow.pop %v4065
        %v4067 = vmul.f32 %v4020, 1.442695
        %v4068 = vpow.pop %v4067
        %v4069 = vmul.f32 %v4021, 1.442695
        %v4070 = vpow.pop %v4069
        %v4071 = vmul.f32 %v4022, 1.442695
        %v4072 = vpow.pop %v4071
        %v4073 = vmul.f32 %v4023, 1.442695
        %v4074 = vpow.pop %v4073
        %v4075 = vmul.f32 %v4024, 1.442695
        %v4076 = vpow.pop %v4075
        %v4077 = vmul.f32 %v4025, 1.442695
        %v4078 = vpow.pop %v4077
        %v4079 = vmul.f32 %v4026, 1.442695
        %v4080 = vpow.pop %v4079
        %v4081 = vmul.f32 %v4027, 1.442695
        %v4082 = vpow.pop %v4081
        %v4083 = vmul.f32 %v4028, 1.442695
        %v4084 = vpow.pop %v4083
        %v4085 = vmul.f32 %v4029, 1.442695
        %v4086 = vpow.pop %v4085
        %v4087 = vmul.f32 %v4030, 1.442695
        %v4088 = vpow.pop %v4087
        %v4089 = vmul.f32 %v4031, 1.442695
        %v4090 = vpow.pop %v4089
        %v4091 = vmul.f32 %v4032, 1.442695
        %v4092 = vpow.pop %v4091
        %v4093 = vmul.f32 %v4033, 1.442695
        %v4094 = vpow.pop %v4093
        %v4095 = vmul.f32 %v4034, 1.442695
        %v4096 = vpow.pop %v4095
        %v4097 = vmul.f32 %v4035, 1.442695
        %v4098 = vpow.pop %v4097
        %v4099 = vmul.f32 %v4036, 1.442695
        %v4100 = vpow.pop %v4099
        %4101 = vadd.xlane.f32.xlu0 %v4038
        %v4102 = vpop.xlane.xlu0 %4101
        %4103 = vadd.xlane.f32.xlu0 %v4040
        %v4104 = vpop.xlane.xlu0 %4103
        %4105 = vadd.xlane.f32.xlu0 %v4042
        %v4106 = vpop.xlane.xlu0 %4105
        %4107 = vadd.xlane.f32.xlu0 %v4044
        %v4108 = vpop.xlane.xlu0 %4107
        %4109 = vadd.xlane.f32.xlu0 %v4046
        %v4110 = vpop.xlane.xlu0 %4109
        %4111 = vadd.xlane.f32.xlu0 %v4048
        %v4112 = vpop.xlane.xlu0 %4111
        %4113 = vadd.xlane.f32.xlu0 %v4050
        %v4114 = vpop.xlane.xlu0 %4113
        %4115 = vadd.xlane.f32.xlu0 %v4052
        %v4116 = vpop.xlane.xlu0 %4115
        %4117 = vadd.xlane.f32.xlu0 %v4054
        %v4118 = vpop.xlane.xlu0 %4117
        %4119 = vadd.xlane.f32.xlu0 %v4056
        %v4120 = vpop.xlane.xlu0 %4119
        %4121 = vadd.xlane.f32.xlu0 %v4058
        %v4122 = vpop.xlane.xlu0 %4121
        %4123 = vadd.xlane.f32.xlu0 %v4060
        %v4124 = vpop.xlane.xlu0 %4123
        %4125 = vadd.xlane.f32.xlu0 %v4062
        %v4126 = vpop.xlane.xlu0 %4125
        %4127 = vadd.xlane.f32.xlu0 %v4064
        %v4128 = vpop.xlane.xlu0 %4127
        %4129 = vadd.xlane.f32.xlu0 %v4066
        %v4130 = vpop.xlane.xlu0 %4129
        %4131 = vadd.xlane.f32.xlu0 %v4068
        %v4132 = vpop.xlane.xlu0 %4131
        %4133 = vadd.xlane.f32.xlu0 %v4070
        %v4134 = vpop.xlane.xlu0 %4133
        %4135 = vadd.xlane.f32.xlu0 %v4072
        %v4136 = vpop.xlane.xlu0 %4135
        %4137 = vadd.xlane.f32.xlu0 %v4074
        %v4138 = vpop.xlane.xlu0 %4137
        %4139 = vadd.xlane.f32.xlu0 %v4076
        %v4140 = vpop.xlane.xlu0 %4139
        %4141 = vadd.xlane.f32.xlu0 %v4078
        %v4142 = vpop.xlane.xlu0 %4141
        %4143 = vadd.xlane.f32.xlu0 %v4080
        %v4144 = vpop.xlane.xlu0 %4143
        %4145 = vadd.xlane.f32.xlu0 %v4082
        %v4146 = vpop.xlane.xlu0 %4145
        %4147 = vadd.xlane.f32.xlu0 %v4084
        %v4148 = vpop.xlane.xlu0 %4147
        %4149 = vadd.xlane.f32.xlu0 %v4086
        %v4150 = vpop.xlane.xlu0 %4149
        %4151 = vadd.xlane.f32.xlu0 %v4088
        %v4152 = vpop.xlane.xlu0 %4151
        %4153 = vadd.xlane.f32.xlu0 %v4090
        %v4154 = vpop.xlane.xlu0 %4153
        %4155 = vadd.xlane.f32.xlu0 %v4092
        %v4156 = vpop.xlane.xlu0 %4155
        %4157 = vadd.xlane.f32.xlu0 %v4094
        %v4158 = vpop.xlane.xlu0 %4157
        %4159 = vadd.xlane.f32.xlu0 %v4096
        %v4160 = vpop.xlane.xlu0 %4159
        %4161 = vadd.xlane.f32.xlu0 %v4098
        %v4162 = vpop.xlane.xlu0 %4161
        %4163 = vadd.xlane.f32.xlu0 %v4100
        %v4164 = vpop.xlane.xlu0 %4163
        %v4165 = vrcp.pop %v4102
        %v4166 = vrcp.pop %v4104
        %v4167 = vrcp.pop %v4106
        %v4168 = vrcp.pop %v4108
        %v4169 = vrcp.pop %v4110
        %v4170 = vrcp.pop %v4112
        %v4171 = vrcp.pop %v4114
        %v4172 = vrcp.pop %v4116
        %v4173 = vrcp.pop %v4118
        %v4174 = vrcp.pop %v4120
        %v4175 = vrcp.pop %v4122
        %v4176 = vrcp.pop %v4124
        %v4177 = vrcp.pop %v4126
        %v4178 = vrcp.pop %v4128
        %v4179 = vrcp.pop %v4130
        %v4180 = vrcp.pop %v4132
        %v4181 = vrcp.pop %v4134
        %v4182 = vrcp.pop %v4136
        %v4183 = vrcp.pop %v4138
        %v4184 = vrcp.pop %v4140
        %v4185 = vrcp.pop %v4142
        %v4186 = vrcp.pop %v4144
        %v4187 = vrcp.pop %v4146
        %v4188 = vrcp.pop %v4148
        %v4189 = vrcp.pop %v4150
        %v4190 = vrcp.pop %v4152
        %v4191 = vrcp.pop %v4154
        %v4192 = vrcp.pop %v4156
        %v4193 = vrcp.pop %v4158
        %v4194 = vrcp.pop %v4160
        %v4195 = vrcp.pop %v4162
        %v4196 = vrcp.pop %v4164
        %v4197 = vmul.f32 %v4038, %v4165
        %v4198 = vmul.f32 %v4040, %v4166
        %v4199 = vmul.f32 %v4042, %v4167
        %v4200 = vmul.f32 %v4044, %v4168
        %v4201 = vmul.f32 %v4046, %v4169
        %v4202 = vmul.f32 %v4048, %v4170
        %v4203 = vmul.f32 %v4050, %v4171
        %v4204 = vmul.f32 %v4052, %v4172
        %v4205 = vmul.f32 %v4054, %v4173
        %v4206 = vmul.f32 %v4056, %v4174
        %v4207 = vmul.f32 %v4058, %v4175
        %v4208 = vmul.f32 %v4060, %v4176
        %v4209 = vmul.f32 %v4062, %v4177
        %v4210 = vmul.f32 %v4064, %v4178
        %v4211 = vmul.f32 %v4066, %v4179
        %v4212 = vmul.f32 %v4068, %v4180
        %v4213 = vmul.f32 %v4070, %v4181
        %v4214 = vmul.f32 %v4072, %v4182
        %v4215 = vmul.f32 %v4074, %v4183
        %v4216 = vmul.f32 %v4076, %v4184
        %v4217 = vmul.f32 %v4078, %v4185
        %v4218 = vmul.f32 %v4080, %v4186
        %v4219 = vmul.f32 %v4082, %v4187
        %v4220 = vmul.f32 %v4084, %v4188
        %v4221 = vmul.f32 %v4086, %v4189
        %v4222 = vmul.f32 %v4088, %v4190
        %v4223 = vmul.f32 %v4090, %v4191
        %v4224 = vmul.f32 %v4092, %v4192
        %v4225 = vmul.f32 %v4094, %v4193
        %v4226 = vmul.f32 %v4096, %v4194
        %v4227 = vmul.f32 %v4098, %v4195
        %v4228 = vmul.f32 %v4100, %v4196
        %4229 = vrot.lane.b32.xlu0 %v1431, 64
        %v4230 = vpop.permute.xlu0 %4229
        %4231 = vrot.lane.b32.xlu0 %v1434, 64
        %v4232 = vpop.permute.xlu0 %4231
        %4233 = vrot.lane.b32.xlu0 %v1437, 64
        %v4234 = vpop.permute.xlu0 %4233
        %4235 = vrot.lane.b32.xlu0 %v1440, 64
        %v4236 = vpop.permute.xlu0 %4235
        %4237 = vrot.lane.b32.xlu0 %v1443, 64
        %v4238 = vpop.permute.xlu0 %4237
        %4239 = vrot.lane.b32.xlu0 %v1446, 64
        %v4240 = vpop.permute.xlu0 %4239
        %4241 = vrot.lane.b32.xlu0 %v1449, 64
        %v4242 = vpop.permute.xlu0 %4241
        %4243 = vrot.lane.b32.xlu0 %v1452, 64
        %v4244 = vpop.permute.xlu0 %4243
        %4245 = vrot.lane.b32.xlu0 %v1455, 64
        %v4246 = vpop.permute.xlu0 %4245
        %4247 = vrot.lane.b32.xlu0 %v1458, 64
        %v4248 = vpop.permute.xlu0 %4247
        %4249 = vrot.lane.b32.xlu0 %v1461, 64
        %v4250 = vpop.permute.xlu0 %4249
        %4251 = vrot.lane.b32.xlu0 %v1464, 64
        %v4252 = vpop.permute.xlu0 %4251
        %4253 = vrot.lane.b32.xlu0 %v1467, 64
        %v4254 = vpop.permute.xlu0 %4253
        %4255 = vrot.lane.b32.xlu0 %v1470, 64
        %v4256 = vpop.permute.xlu0 %4255
        %4257 = vrot.lane.b32.xlu0 %v1473, 64
        %v4258 = vpop.permute.xlu0 %4257
        %4259 = vrot.lane.b32.xlu0 %v1476, 64
        %v4260 = vpop.permute.xlu0 %4259
        %4277 = vmatpush.msra.mxu0 %v4260
        %4278 = vmatpush.msra.mxu0 %v4258
        %4279 = vmatpush.msra.mxu0 %v4256
        %4280 = vmatpush.msra.mxu0 %v4254
        %4281 = vmatpush.msra.mxu0 %v4252
        %4282 = vmatpush.msra.mxu0 %v4250
        %4283 = vmatpush.msra.mxu0 %v4248
        %4284 = vmatpush.msra.mxu0 %v4246
        %4285 = vmatpush.msra.mxu0 %v4244
        %4286 = vmatpush.msra.mxu0 %v4242
        %4287 = vmatpush.msra.mxu0 %v4240
        %4288 = vmatpush.msra.mxu0 %v4238
        %4289 = vmatpush.msra.mxu0 %v4236
        %4290 = vmatpush.msra.mxu0 %v4234
        %4291 = vmatpush.msra.mxu0 %v4232
        %4292 = vmatpush.msra.mxu0 %v4230
        %4293 = vmatmul.f32.gmra.mxu0 %v4197
        %v4294 = vpop.f32.mrf.mxu0
        %v4295 = vadd.f32 0.0, %v4294
        %4296 = vmatmul.f32.gmra.mxu0 %v4198
        %v4297 = vpop.f32.mrf.mxu0
        %v4298 = vadd.f32 0.0, %v4297
        %4299 = vmatmul.f32.gmra.mxu0 %v4199
        %v4300 = vpop.f32.mrf.mxu0
        %v4301 = vadd.f32 0.0, %v4300
        %4302 = vmatmul.f32.gmra.mxu0 %v4200
        %v4303 = vpop.f32.mrf.mxu0
        %v4304 = vadd.f32 0.0, %v4303
        %4305 = vmatmul.f32.gmra.mxu0 %v4201
        %v4306 = vpop.f32.mrf.mxu0
        %v4307 = vadd.f32 0.0, %v4306
        %4308 = vmatmul.f32.gmra.mxu0 %v4202
        %v4309 = vpop.f32.mrf.mxu0
        %v4310 = vadd.f32 0.0, %v4309
        %4311 = vmatmul.f32.gmra.mxu0 %v4203
        %v4312 = vpop.f32.mrf.mxu0
        %v4313 = vadd.f32 0.0, %v4312
        %4314 = vmatmul.f32.gmra.mxu0 %v4204
        %v4315 = vpop.f32.mrf.mxu0
        %v4316 = vadd.f32 0.0, %v4315
        %4317 = vmatmul.f32.gmra.mxu0 %v4205
        %v4318 = vpop.f32.mrf.mxu0
        %v4319 = vadd.f32 0.0, %v4318
        %4320 = vmatmul.f32.gmra.mxu0 %v4206
        %v4321 = vpop.f32.mrf.mxu0
        %v4322 = vadd.f32 0.0, %v4321
        %4323 = vmatmul.f32.gmra.mxu0 %v4207
        %v4324 = vpop.f32.mrf.mxu0
        %v4325 = vadd.f32 0.0, %v4324
        %4326 = vmatmul.f32.gmra.mxu0 %v4208
        %v4327 = vpop.f32.mrf.mxu0
        %v4328 = vadd.f32 0.0, %v4327
        %4329 = vmatmul.f32.gmra.mxu0 %v4209
        %v4330 = vpop.f32.mrf.mxu0
        %v4331 = vadd.f32 0.0, %v4330
        %4332 = vmatmul.f32.gmra.mxu0 %v4210
        %v4333 = vpop.f32.mrf.mxu0
        %v4334 = vadd.f32 0.0, %v4333
        %4335 = vmatmul.f32.gmra.mxu0 %v4211
        %v4336 = vpop.f32.mrf.mxu0
        %v4337 = vadd.f32 0.0, %v4336
        %4338 = vmatmul.f32.gmra.mxu0 %v4212
        %v4339 = vpop.f32.mrf.mxu0
        %v4340 = vadd.f32 0.0, %v4339
        %4341 = vdwg.mxu0
        %4342 = vrot.lane.b32.xlu0 %v1479, 64
        %v4343 = vpop.permute.xlu0 %4342
        %4344 = vrot.lane.b32.xlu0 %v1482, 64
        %v4345 = vpop.permute.xlu0 %4344
        %4346 = vrot.lane.b32.xlu0 %v1485, 64
        %v4347 = vpop.permute.xlu0 %4346
        %4348 = vrot.lane.b32.xlu0 %v1488, 64
        %v4349 = vpop.permute.xlu0 %4348
        %4350 = vrot.lane.b32.xlu0 %v1491, 64
        %v4351 = vpop.permute.xlu0 %4350
        %4352 = vrot.lane.b32.xlu0 %v1494, 64
        %v4353 = vpop.permute.xlu0 %4352
        %4354 = vrot.lane.b32.xlu0 %v1497, 64
        %v4355 = vpop.permute.xlu0 %4354
        %4356 = vrot.lane.b32.xlu0 %v1500, 64
        %v4357 = vpop.permute.xlu0 %4356
        %4358 = vrot.lane.b32.xlu0 %v1503, 64
        %v4359 = vpop.permute.xlu0 %4358
        %4360 = vrot.lane.b32.xlu0 %v1506, 64
        %v4361 = vpop.permute.xlu0 %4360
        %4362 = vrot.lane.b32.xlu0 %v1509, 64
        %v4363 = vpop.permute.xlu0 %4362
        %4364 = vrot.lane.b32.xlu0 %v1512, 64
        %v4365 = vpop.permute.xlu0 %4364
        %4366 = vrot.lane.b32.xlu0 %v1515, 64
        %v4367 = vpop.permute.xlu0 %4366
        %4368 = vrot.lane.b32.xlu0 %v1518, 64
        %v4369 = vpop.permute.xlu0 %4368
        %4370 = vrot.lane.b32.xlu0 %v1521, 64
        %v4371 = vpop.permute.xlu0 %4370
        %4372 = vrot.lane.b32.xlu0 %v1524, 64
        %v4373 = vpop.permute.xlu0 %4372
        %4390 = vmatpush.msra.mxu0 %v4373
        %4391 = vmatpush.msra.mxu0 %v4371
        %4392 = vmatpush.msra.mxu0 %v4369
        %4393 = vmatpush.msra.mxu0 %v4367
        %4394 = vmatpush.msra.mxu0 %v4365
        %4395 = vmatpush.msra.mxu0 %v4363
        %4396 = vmatpush.msra.mxu0 %v4361
        %4397 = vmatpush.msra.mxu0 %v4359
        %4398 = vmatpush.msra.mxu0 %v4357
        %4399 = vmatpush.msra.mxu0 %v4355
        %4400 = vmatpush.msra.mxu0 %v4353
        %4401 = vmatpush.msra.mxu0 %v4351
        %4402 = vmatpush.msra.mxu0 %v4349
        %4403 = vmatpush.msra.mxu0 %v4347
        %4404 = vmatpush.msra.mxu0 %v4345
        %4405 = vmatpush.msra.mxu0 %v4343
        %4406 = vmatmul.f32.gmra.mxu0 %v4213
        %v4407 = vpop.f32.mrf.mxu0
        %v4408 = vadd.f32 0.0, %v4407
        %4409 = vmatmul.f32.gmra.mxu0 %v4214
        %v4410 = vpop.f32.mrf.mxu0
        %v4411 = vadd.f32 0.0, %v4410
        %4412 = vmatmul.f32.gmra.mxu0 %v4215
        %v4413 = vpop.f32.mrf.mxu0
        %v4414 = vadd.f32 0.0, %v4413
        %4415 = vmatmul.f32.gmra.mxu0 %v4216
        %v4416 = vpop.f32.mrf.mxu0
        %v4417 = vadd.f32 0.0, %v4416
        %4418 = vmatmul.f32.gmra.mxu0 %v4217
        %v4419 = vpop.f32.mrf.mxu0
        %v4420 = vadd.f32 0.0, %v4419
        %4421 = vmatmul.f32.gmra.mxu0 %v4218
        %v4422 = vpop.f32.mrf.mxu0
        %v4423 = vadd.f32 0.0, %v4422
        %4424 = vmatmul.f32.gmra.mxu0 %v4219
        %v4425 = vpop.f32.mrf.mxu0
        %v4426 = vadd.f32 0.0, %v4425
        %4427 = vmatmul.f32.gmra.mxu0 %v4220
        %v4428 = vpop.f32.mrf.mxu0
        %v4429 = vadd.f32 0.0, %v4428
        %4430 = vmatmul.f32.gmra.mxu0 %v4221
        %v4431 = vpop.f32.mrf.mxu0
        %v4432 = vadd.f32 0.0, %v4431
        %4433 = vmatmul.f32.gmra.mxu0 %v4222
        %v4434 = vpop.f32.mrf.mxu0
        %v4435 = vadd.f32 0.0, %v4434
        %4436 = vmatmul.f32.gmra.mxu0 %v4223
        %v4437 = vpop.f32.mrf.mxu0
        %v4438 = vadd.f32 0.0, %v4437
        %4439 = vmatmul.f32.gmra.mxu0 %v4224
        %v4440 = vpop.f32.mrf.mxu0
        %v4441 = vadd.f32 0.0, %v4440
        %4442 = vmatmul.f32.gmra.mxu0 %v4225
        %v4443 = vpop.f32.mrf.mxu0
        %v4444 = vadd.f32 0.0, %v4443
        %4445 = vmatmul.f32.gmra.mxu0 %v4226
        %v4446 = vpop.f32.mrf.mxu0
        %v4447 = vadd.f32 0.0, %v4446
        %4448 = vmatmul.f32.gmra.mxu0 %v4227
        %v4449 = vpop.f32.mrf.mxu0
        %v4450 = vadd.f32 0.0, %v4449
        %4451 = vmatmul.f32.gmra.mxu0 %v4228
        %v4452 = vpop.f32.mrf.mxu0
        %v4453 = vadd.f32 0.0, %v4452
        %4454 = vdwg.mxu0
        %4487 = vrot.lane.b32.xlu0 %v4295, 64
        %v4488 = vpop.permute.xlu0 %4487
        %4489 = vrot.lane.b32.xlu0 %v4298, 64
        %v4490 = vpop.permute.xlu0 %4489
        %4491 = vrot.lane.b32.xlu0 %v4301, 64
        %v4492 = vpop.permute.xlu0 %4491
        %4493 = vrot.lane.b32.xlu0 %v4304, 64
        %v4494 = vpop.permute.xlu0 %4493
        %4495 = vrot.lane.b32.xlu0 %v4307, 64
        %v4496 = vpop.permute.xlu0 %4495
        %4497 = vrot.lane.b32.xlu0 %v4310, 64
        %v4498 = vpop.permute.xlu0 %4497
        %4499 = vrot.lane.b32.xlu0 %v4313, 64
        %v4500 = vpop.permute.xlu0 %4499
        %4501 = vrot.lane.b32.xlu0 %v4316, 64
        %v4502 = vpop.permute.xlu0 %4501
        %4503 = vrot.lane.b32.xlu0 %v4319, 64
        %v4504 = vpop.permute.xlu0 %4503
        %4505 = vrot.lane.b32.xlu0 %v4322, 64
        %v4506 = vpop.permute.xlu0 %4505
        %4507 = vrot.lane.b32.xlu0 %v4325, 64
        %v4508 = vpop.permute.xlu0 %4507
        %4509 = vrot.lane.b32.xlu0 %v4328, 64
        %v4510 = vpop.permute.xlu0 %4509
        %4511 = vrot.lane.b32.xlu0 %v4331, 64
        %v4512 = vpop.permute.xlu0 %4511
        %4513 = vrot.lane.b32.xlu0 %v4334, 64
        %v4514 = vpop.permute.xlu0 %4513
        %4515 = vrot.lane.b32.xlu0 %v4337, 64
        %v4516 = vpop.permute.xlu0 %4515
        %4517 = vrot.lane.b32.xlu0 %v4340, 64
        %v4518 = vpop.permute.xlu0 %4517
        %4519 = vrot.lane.b32.xlu0 %v4408, 64
        %v4520 = vpop.permute.xlu0 %4519
        %4521 = vrot.lane.b32.xlu0 %v4411, 64
        %v4522 = vpop.permute.xlu0 %4521
        %4523 = vrot.lane.b32.xlu0 %v4414, 64
        %v4524 = vpop.permute.xlu0 %4523
        %4525 = vrot.lane.b32.xlu0 %v4417, 64
        %v4526 = vpop.permute.xlu0 %4525
        %4527 = vrot.lane.b32.xlu0 %v4420, 64
        %v4528 = vpop.permute.xlu0 %4527
        %4529 = vrot.lane.b32.xlu0 %v4423, 64
        %v4530 = vpop.permute.xlu0 %4529
        %4531 = vrot.lane.b32.xlu0 %v4426, 64
        %v4532 = vpop.permute.xlu0 %4531
        %4533 = vrot.lane.b32.xlu0 %v4429, 64
        %v4534 = vpop.permute.xlu0 %4533
        %4535 = vrot.lane.b32.xlu0 %v4432, 64
        %v4536 = vpop.permute.xlu0 %4535
        %4537 = vrot.lane.b32.xlu0 %v4435, 64
        %v4538 = vpop.permute.xlu0 %4537
        %4539 = vrot.lane.b32.xlu0 %v4438, 64
        %v4540 = vpop.permute.xlu0 %4539
        %4541 = vrot.lane.b32.xlu0 %v4441, 64
        %v4542 = vpop.permute.xlu0 %4541
        %4543 = vrot.lane.b32.xlu0 %v4444, 64
        %v4544 = vpop.permute.xlu0 %4543
        %4545 = vrot.lane.b32.xlu0 %v4447, 64
        %v4546 = vpop.permute.xlu0 %4545
        %4547 = vrot.lane.b32.xlu0 %v4450, 64
        %v4548 = vpop.permute.xlu0 %4547
        %4549 = vrot.lane.b32.xlu0 %v4453, 64
        %v4550 = vpop.permute.xlu0 %4549
        %vm4583 = vcmask 785920
        %4584 = vst.msk [vmem:[#allocation2] sm:$0xff] %vm4583, %v4488
        %4585 = vst.msk [vmem:[#allocation2 + $0x8] sm:$0xff] %vm4583, %v4490
        %4586 = vst.msk [vmem:[#allocation2 + $0x10] sm:$0xff] %vm4583, %v4492
        %4587 = vst.msk [vmem:[#allocation2 + $0x18] sm:$0xff] %vm4583, %v4494
        %4588 = vst.msk [vmem:[#allocation2 + $0x20] sm:$0xff] %vm4583, %v4496
        %4589 = vst.msk [vmem:[#allocation2 + $0x28] sm:$0xff] %vm4583, %v4498
        %4590 = vst.msk [vmem:[#allocation2 + $0x30] sm:$0xff] %vm4583, %v4500
        %4591 = vst.msk [vmem:[#allocation2 + $0x38] sm:$0xff] %vm4583, %v4502
        %4592 = vst.msk [vmem:[#allocation2 + $0x40] sm:$0xff] %vm4583, %v4504
        %4593 = vst.msk [vmem:[#allocation2 + $0x48] sm:$0xff] %vm4583, %v4506
        %4594 = vst.msk [vmem:[#allocation2 + $0x50] sm:$0xff] %vm4583, %v4508
        %4595 = vst.msk [vmem:[#allocation2 + $0x58] sm:$0xff] %vm4583, %v4510
        %4596 = vst.msk [vmem:[#allocation2 + $0x60] sm:$0xff] %vm4583, %v4512
        %4597 = vst.msk [vmem:[#allocation2 + $0x68] sm:$0xff] %vm4583, %v4514
        %4598 = vst.msk [vmem:[#allocation2 + $0x70] sm:$0xff] %vm4583, %v4516
        %4599 = vst.msk [vmem:[#allocation2 + $0x78] sm:$0xff] %vm4583, %v4518
        %4600 = vst.msk [vmem:[#allocation2 + $0x80] sm:$0xff] %vm4583, %v4520
        %4601 = vst.msk [vmem:[#allocation2 + $0x88] sm:$0xff] %vm4583, %v4522
        %4602 = vst.msk [vmem:[#allocation2 + $0x90] sm:$0xff] %vm4583, %v4524
        %4603 = vst.msk [vmem:[#allocation2 + $0x98] sm:$0xff] %vm4583, %v4526
        %4604 = vst.msk [vmem:[#allocation2 + $0xa0] sm:$0xff] %vm4583, %v4528
        %4605 = vst.msk [vmem:[#allocation2 + $0xa8] sm:$0xff] %vm4583, %v4530
        %4606 = vst.msk [vmem:[#allocation2 + $0xb0] sm:$0xff] %vm4583, %v4532
        %4607 = vst.msk [vmem:[#allocation2 + $0xb8] sm:$0xff] %vm4583, %v4534
        %4608 = vst.msk [vmem:[#allocation2 + $0xc0] sm:$0xff] %vm4583, %v4536
        %4609 = vst.msk [vmem:[#allocation2 + $0xc8] sm:$0xff] %vm4583, %v4538
        %4610 = vst.msk [vmem:[#allocation2 + $0xd0] sm:$0xff] %vm4583, %v4540
        %4611 = vst.msk [vmem:[#allocation2 + $0xd8] sm:$0xff] %vm4583, %v4542
        %4612 = vst.msk [vmem:[#allocation2 + $0xe0] sm:$0xff] %vm4583, %v4544
        %4613 = vst.msk [vmem:[#allocation2 + $0xe8] sm:$0xff] %vm4583, %v4546
        %4614 = vst.msk [vmem:[#allocation2 + $0xf0] sm:$0xff] %vm4583, %v4548
        %4615 = vst.msk [vmem:[#allocation2 + $0xf8] sm:$0xff] %vm4583, %v4550
        %4616 = vrot.lane.b32.xlu0 %v753, 32
        %v4617 = vpop.permute.xlu0 %4616
        %4618 = vrot.lane.b32.xlu0 %v756, 32
        %v4619 = vpop.permute.xlu0 %4618
        %4620 = vrot.lane.b32.xlu0 %v759, 32
        %v4621 = vpop.permute.xlu0 %4620
        %4622 = vrot.lane.b32.xlu0 %v762, 32
        %v4623 = vpop.permute.xlu0 %4622
        %4624 = vrot.lane.b32.xlu0 %v765, 32
        %v4625 = vpop.permute.xlu0 %4624
        %4626 = vrot.lane.b32.xlu0 %v768, 32
        %v4627 = vpop.permute.xlu0 %4626
        %4628 = vrot.lane.b32.xlu0 %v771, 32
        %v4629 = vpop.permute.xlu0 %4628
        %4630 = vrot.lane.b32.xlu0 %v774, 32
        %v4631 = vpop.permute.xlu0 %4630
        %4632 = vrot.lane.b32.xlu0 %v777, 32
        %v4633 = vpop.permute.xlu0 %4632
        %4634 = vrot.lane.b32.xlu0 %v780, 32
        %v4635 = vpop.permute.xlu0 %4634
        %4636 = vrot.lane.b32.xlu0 %v783, 32
        %v4637 = vpop.permute.xlu0 %4636
        %4638 = vrot.lane.b32.xlu0 %v786, 32
        %v4639 = vpop.permute.xlu0 %4638
        %4640 = vrot.lane.b32.xlu0 %v789, 32
        %v4641 = vpop.permute.xlu0 %4640
        %4642 = vrot.lane.b32.xlu0 %v792, 32
        %v4643 = vpop.permute.xlu0 %4642
        %4644 = vrot.lane.b32.xlu0 %v795, 32
        %v4645 = vpop.permute.xlu0 %4644
        %4646 = vrot.lane.b32.xlu0 %v798, 32
        %v4647 = vpop.permute.xlu0 %4646
        %4648 = vrot.lane.b32.xlu0 %v1092, 32
        %v4649 = vpop.permute.xlu0 %4648
        %4650 = vrot.lane.b32.xlu0 %v1095, 32
        %v4651 = vpop.permute.xlu0 %4650
        %4652 = vrot.lane.b32.xlu0 %v1098, 32
        %v4653 = vpop.permute.xlu0 %4652
        %4654 = vrot.lane.b32.xlu0 %v1101, 32
        %v4655 = vpop.permute.xlu0 %4654
        %4656 = vrot.lane.b32.xlu0 %v1104, 32
        %v4657 = vpop.permute.xlu0 %4656
        %4658 = vrot.lane.b32.xlu0 %v1107, 32
        %v4659 = vpop.permute.xlu0 %4658
        %4660 = vrot.lane.b32.xlu0 %v1110, 32
        %v4661 = vpop.permute.xlu0 %4660
        %4662 = vrot.lane.b32.xlu0 %v1113, 32
        %v4663 = vpop.permute.xlu0 %4662
        %4664 = vrot.lane.b32.xlu0 %v1116, 32
        %v4665 = vpop.permute.xlu0 %4664
        %4666 = vrot.lane.b32.xlu0 %v1119, 32
        %v4667 = vpop.permute.xlu0 %4666
        %4668 = vrot.lane.b32.xlu0 %v1122, 32
        %v4669 = vpop.permute.xlu0 %4668
        %4670 = vrot.lane.b32.xlu0 %v1125, 32
        %v4671 = vpop.permute.xlu0 %4670
        %4672 = vrot.lane.b32.xlu0 %v1128, 32
        %v4673 = vpop.permute.xlu0 %4672
        %4674 = vrot.lane.b32.xlu0 %v1131, 32
        %v4675 = vpop.permute.xlu0 %4674
        %4676 = vrot.lane.b32.xlu0 %v1134, 32
        %v4677 = vpop.permute.xlu0 %4676
        %4678 = vrot.lane.b32.xlu0 %v1137, 32
        %v4679 = vpop.permute.xlu0 %4678
        %v4680 = vsel %vm1561, %v4617, 0
        %v4682 = vsel %vm1561, %v4619, 0
        %v4684 = vsel %vm1561, %v4621, 0
        %v4686 = vsel %vm1561, %v4623, 0
        %v4688 = vsel %vm1561, %v4625, 0
        %v4690 = vsel %vm1561, %v4627, 0
        %v4692 = vsel %vm1561, %v4629, 0
        %v4694 = vsel %vm1561, %v4631, 0
        %v4696 = vsel %vm1561, %v4633, 0
        %v4698 = vsel %vm1561, %v4635, 0
        %v4700 = vsel %vm1561, %v4637, 0
        %v4702 = vsel %vm1561, %v4639, 0
        %v4704 = vsel %vm1561, %v4641, 0
        %v4706 = vsel %vm1561, %v4643, 0
        %v4708 = vsel %vm1561, %v4645, 0
        %v4710 = vsel %vm1561, %v4647, 0
        %v4712 = vsel %vm1561, %v4649, 0
        %v4714 = vsel %vm1561, %v4651, 0
        %v4716 = vsel %vm1561, %v4653, 0
        %v4718 = vsel %vm1561, %v4655, 0
        %v4720 = vsel %vm1561, %v4657, 0
        %v4722 = vsel %vm1561, %v4659, 0
        %v4724 = vsel %vm1561, %v4661, 0
        %v4726 = vsel %vm1561, %v4663, 0
        %v4728 = vsel %vm1561, %v4665, 0
        %v4730 = vsel %vm1561, %v4667, 0
        %v4732 = vsel %vm1561, %v4669, 0
        %v4734 = vsel %vm1561, %v4671, 0
        %v4736 = vsel %vm1561, %v4673, 0
        %v4738 = vsel %vm1561, %v4675, 0
        %v4740 = vsel %vm1561, %v4677, 0
        %v4742 = vsel %vm1561, %v4679, 0
        %4744 = vmatpush.xpose.msra.mxu0 %v4742
        %4745 = vmatpush.xpose.msra.mxu0 %v4740
        %4746 = vmatpush.xpose.msra.mxu0 %v4738
        %4747 = vmatpush.xpose.msra.mxu0 %v4736
        %4748 = vmatpush.xpose.msra.mxu0 %v4734
        %4749 = vmatpush.xpose.msra.mxu0 %v4732
        %4750 = vmatpush.xpose.msra.mxu0 %v4730
        %4751 = vmatpush.xpose.msra.mxu0 %v4728
        %4752 = vmatpush.xpose.msra.mxu0 %v4726
        %4753 = vmatpush.xpose.msra.mxu0 %v4724
        %4754 = vmatpush.xpose.msra.mxu0 %v4722
        %4755 = vmatpush.xpose.msra.mxu0 %v4720
        %4756 = vmatpush.xpose.msra.mxu0 %v4718
        %4757 = vmatpush.xpose.msra.mxu0 %v4716
        %4758 = vmatpush.xpose.msra.mxu0 %v4714
        %4759 = vmatpush.xpose.msra.mxu0 %v4712
        %4760 = vmatmul.f32.gmra.mxu0 %v4680
        %v4761 = vpop.f32.mrf.mxu0
        %v4762 = vadd.f32 0.0, %v4761
        %4763 = vmatmul.f32.gmra.mxu0 %v4682
        %v4764 = vpop.f32.mrf.mxu0
        %v4765 = vadd.f32 0.0, %v4764
        %4766 = vmatmul.f32.gmra.mxu0 %v4684
        %v4767 = vpop.f32.mrf.mxu0
        %v4768 = vadd.f32 0.0, %v4767
        %4769 = vmatmul.f32.gmra.mxu0 %v4686
        %v4770 = vpop.f32.mrf.mxu0
        %v4771 = vadd.f32 0.0, %v4770
        %4772 = vmatmul.f32.gmra.mxu0 %v4688
        %v4773 = vpop.f32.mrf.mxu0
        %v4774 = vadd.f32 0.0, %v4773
        %4775 = vmatmul.f32.gmra.mxu0 %v4690
        %v4776 = vpop.f32.mrf.mxu0
        %v4777 = vadd.f32 0.0, %v4776
        %4778 = vmatmul.f32.gmra.mxu0 %v4692
        %v4779 = vpop.f32.mrf.mxu0
        %v4780 = vadd.f32 0.0, %v4779
        %4781 = vmatmul.f32.gmra.mxu0 %v4694
        %v4782 = vpop.f32.mrf.mxu0
        %v4783 = vadd.f32 0.0, %v4782
        %4784 = vmatmul.f32.gmra.mxu0 %v4696
        %v4785 = vpop.f32.mrf.mxu0
        %v4786 = vadd.f32 0.0, %v4785
        %4787 = vmatmul.f32.gmra.mxu0 %v4698
        %v4788 = vpop.f32.mrf.mxu0
        %v4789 = vadd.f32 0.0, %v4788
        %4790 = vmatmul.f32.gmra.mxu0 %v4700
        %v4791 = vpop.f32.mrf.mxu0
        %v4792 = vadd.f32 0.0, %v4791
        %4793 = vmatmul.f32.gmra.mxu0 %v4702
        %v4794 = vpop.f32.mrf.mxu0
        %v4795 = vadd.f32 0.0, %v4794
        %4796 = vmatmul.f32.gmra.mxu0 %v4704
        %v4797 = vpop.f32.mrf.mxu0
        %v4798 = vadd.f32 0.0, %v4797
        %4799 = vmatmul.f32.gmra.mxu0 %v4706
        %v4800 = vpop.f32.mrf.mxu0
        %v4801 = vadd.f32 0.0, %v4800
        %4802 = vmatmul.f32.gmra.mxu0 %v4708
        %v4803 = vpop.f32.mrf.mxu0
        %v4804 = vadd.f32 0.0, %v4803
        %4805 = vmatmul.f32.gmra.mxu0 %v4710
        %v4806 = vpop.f32.mrf.mxu0
        %v4807 = vadd.f32 0.0, %v4806
        %4808 = vdwg.mxu0
        %4809 = vrot.lane.b32.xlu0 %v801, 32
        %v4810 = vpop.permute.xlu0 %4809
        %4811 = vrot.lane.b32.xlu0 %v804, 32
        %v4812 = vpop.permute.xlu0 %4811
        %4813 = vrot.lane.b32.xlu0 %v807, 32
        %v4814 = vpop.permute.xlu0 %4813
        %4815 = vrot.lane.b32.xlu0 %v810, 32
        %v4816 = vpop.permute.xlu0 %4815
        %4817 = vrot.lane.b32.xlu0 %v813, 32
        %v4818 = vpop.permute.xlu0 %4817
        %4819 = vrot.lane.b32.xlu0 %v816, 32
        %v4820 = vpop.permute.xlu0 %4819
        %4821 = vrot.lane.b32.xlu0 %v819, 32
        %v4822 = vpop.permute.xlu0 %4821
        %4823 = vrot.lane.b32.xlu0 %v822, 32
        %v4824 = vpop.permute.xlu0 %4823
        %4825 = vrot.lane.b32.xlu0 %v825, 32
        %v4826 = vpop.permute.xlu0 %4825
        %4827 = vrot.lane.b32.xlu0 %v828, 32
        %v4828 = vpop.permute.xlu0 %4827
        %4829 = vrot.lane.b32.xlu0 %v831, 32
        %v4830 = vpop.permute.xlu0 %4829
        %4831 = vrot.lane.b32.xlu0 %v834, 32
        %v4832 = vpop.permute.xlu0 %4831
        %4833 = vrot.lane.b32.xlu0 %v837, 32
        %v4834 = vpop.permute.xlu0 %4833
        %4835 = vrot.lane.b32.xlu0 %v840, 32
        %v4836 = vpop.permute.xlu0 %4835
        %4837 = vrot.lane.b32.xlu0 %v843, 32
        %v4838 = vpop.permute.xlu0 %4837
        %4839 = vrot.lane.b32.xlu0 %v846, 32
        %v4840 = vpop.permute.xlu0 %4839
        %4841 = vrot.lane.b32.xlu0 %v1140, 32
        %v4842 = vpop.permute.xlu0 %4841
        %4843 = vrot.lane.b32.xlu0 %v1143, 32
        %v4844 = vpop.permute.xlu0 %4843
        %4845 = vrot.lane.b32.xlu0 %v1146, 32
        %v4846 = vpop.permute.xlu0 %4845
        %4847 = vrot.lane.b32.xlu0 %v1149, 32
        %v4848 = vpop.permute.xlu0 %4847
        %4849 = vrot.lane.b32.xlu0 %v1152, 32
        %v4850 = vpop.permute.xlu0 %4849
        %4851 = vrot.lane.b32.xlu0 %v1155, 32
        %v4852 = vpop.permute.xlu0 %4851
        %4853 = vrot.lane.b32.xlu0 %v1158, 32
        %v4854 = vpop.permute.xlu0 %4853
        %4855 = vrot.lane.b32.xlu0 %v1161, 32
        %v4856 = vpop.permute.xlu0 %4855
        %4857 = vrot.lane.b32.xlu0 %v1164, 32
        %v4858 = vpop.permute.xlu0 %4857
        %4859 = vrot.lane.b32.xlu0 %v1167, 32
        %v4860 = vpop.permute.xlu0 %4859
        %4861 = vrot.lane.b32.xlu0 %v1170, 32
        %v4862 = vpop.permute.xlu0 %4861
        %4863 = vrot.lane.b32.xlu0 %v1173, 32
        %v4864 = vpop.permute.xlu0 %4863
        %4865 = vrot.lane.b32.xlu0 %v1176, 32
        %v4866 = vpop.permute.xlu0 %4865
        %4867 = vrot.lane.b32.xlu0 %v1179, 32
        %v4868 = vpop.permute.xlu0 %4867
        %4869 = vrot.lane.b32.xlu0 %v1182, 32
        %v4870 = vpop.permute.xlu0 %4869
        %4871 = vrot.lane.b32.xlu0 %v1185, 32
        %v4872 = vpop.permute.xlu0 %4871
        %v4873 = vsel %vm1561, %v4810, 0
        %v4875 = vsel %vm1561, %v4812, 0
        %v4877 = vsel %vm1561, %v4814, 0
        %v4879 = vsel %vm1561, %v4816, 0
        %v4881 = vsel %vm1561, %v4818, 0
        %v4883 = vsel %vm1561, %v4820, 0
        %v4885 = vsel %vm1561, %v4822, 0
        %v4887 = vsel %vm1561, %v4824, 0
        %v4889 = vsel %vm1561, %v4826, 0
        %v4891 = vsel %vm1561, %v4828, 0
        %v4893 = vsel %vm1561, %v4830, 0
        %v4895 = vsel %vm1561, %v4832, 0
        %v4897 = vsel %vm1561, %v4834, 0
        %v4899 = vsel %vm1561, %v4836, 0
        %v4901 = vsel %vm1561, %v4838, 0
        %v4903 = vsel %vm1561, %v4840, 0
        %v4905 = vsel %vm1561, %v4842, 0
        %v4907 = vsel %vm1561, %v4844, 0
        %v4909 = vsel %vm1561, %v4846, 0
        %v4911 = vsel %vm1561, %v4848, 0
        %v4913 = vsel %vm1561, %v4850, 0
        %v4915 = vsel %vm1561, %v4852, 0
        %v4917 = vsel %vm1561, %v4854, 0
        %v4919 = vsel %vm1561, %v4856, 0
        %v4921 = vsel %vm1561, %v4858, 0
        %v4923 = vsel %vm1561, %v4860, 0
        %v4925 = vsel %vm1561, %v4862, 0
        %v4927 = vsel %vm1561, %v4864, 0
        %v4929 = vsel %vm1561, %v4866, 0
        %v4931 = vsel %vm1561, %v4868, 0
        %v4933 = vsel %vm1561, %v4870, 0
        %v4935 = vsel %vm1561, %v4872, 0
        %4937 = vmatpush.xpose.msra.mxu0 %v4935
        %4938 = vmatpush.xpose.msra.mxu0 %v4933
        %4939 = vmatpush.xpose.msra.mxu0 %v4931
        %4940 = vmatpush.xpose.msra.mxu0 %v4929
        %4941 = vmatpush.xpose.msra.mxu0 %v4927
        %4942 = vmatpush.xpose.msra.mxu0 %v4925
        %4943 = vmatpush.xpose.msra.mxu0 %v4923
        %4944 = vmatpush.xpose.msra.mxu0 %v4921
        %4945 = vmatpush.xpose.msra.mxu0 %v4919
        %4946 = vmatpush.xpose.msra.mxu0 %v4917
        %4947 = vmatpush.xpose.msra.mxu0 %v4915
        %4948 = vmatpush.xpose.msra.mxu0 %v4913
        %4949 = vmatpush.xpose.msra.mxu0 %v4911
        %4950 = vmatpush.xpose.msra.mxu0 %v4909
        %4951 = vmatpush.xpose.msra.mxu0 %v4907
        %4952 = vmatpush.xpose.msra.mxu0 %v4905
        %4953 = vmatmul.f32.gmra.mxu0 %v4873
        %v4954 = vpop.f32.mrf.mxu0
        %v4955 = vadd.f32 0.0, %v4954
        %4956 = vmatmul.f32.gmra.mxu0 %v4875
        %v4957 = vpop.f32.mrf.mxu0
        %v4958 = vadd.f32 0.0, %v4957
        %4959 = vmatmul.f32.gmra.mxu0 %v4877
        %v4960 = vpop.f32.mrf.mxu0
        %v4961 = vadd.f32 0.0, %v4960
        %4962 = vmatmul.f32.gmra.mxu0 %v4879
        %v4963 = vpop.f32.mrf.mxu0
        %v4964 = vadd.f32 0.0, %v4963
        %4965 = vmatmul.f32.gmra.mxu0 %v4881
        %v4966 = vpop.f32.mrf.mxu0
        %v4967 = vadd.f32 0.0, %v4966
        %4968 = vmatmul.f32.gmra.mxu0 %v4883
        %v4969 = vpop.f32.mrf.mxu0
        %v4970 = vadd.f32 0.0, %v4969
        %4971 = vmatmul.f32.gmra.mxu0 %v4885
        %v4972 = vpop.f32.mrf.mxu0
        %v4973 = vadd.f32 0.0, %v4972
        %4974 = vmatmul.f32.gmra.mxu0 %v4887
        %v4975 = vpop.f32.mrf.mxu0
        %v4976 = vadd.f32 0.0, %v4975
        %4977 = vmatmul.f32.gmra.mxu0 %v4889
        %v4978 = vpop.f32.mrf.mxu0
        %v4979 = vadd.f32 0.0, %v4978
        %4980 = vmatmul.f32.gmra.mxu0 %v4891
        %v4981 = vpop.f32.mrf.mxu0
        %v4982 = vadd.f32 0.0, %v4981
        %4983 = vmatmul.f32.gmra.mxu0 %v4893
        %v4984 = vpop.f32.mrf.mxu0
        %v4985 = vadd.f32 0.0, %v4984
        %4986 = vmatmul.f32.gmra.mxu0 %v4895
        %v4987 = vpop.f32.mrf.mxu0
        %v4988 = vadd.f32 0.0, %v4987
        %4989 = vmatmul.f32.gmra.mxu0 %v4897
        %v4990 = vpop.f32.mrf.mxu0
        %v4991 = vadd.f32 0.0, %v4990
        %4992 = vmatmul.f32.gmra.mxu0 %v4899
        %v4993 = vpop.f32.mrf.mxu0
        %v4994 = vadd.f32 0.0, %v4993
        %4995 = vmatmul.f32.gmra.mxu0 %v4901
        %v4996 = vpop.f32.mrf.mxu0
        %v4997 = vadd.f32 0.0, %v4996
        %4998 = vmatmul.f32.gmra.mxu0 %v4903
        %v4999 = vpop.f32.mrf.mxu0
        %v5000 = vadd.f32 0.0, %v4999
        %5001 = vdwg.mxu0
        %v5002 = vsel %vm1900, %v4762, -inf
        %v5003 = vsel %vm1901, %v4765, -inf
        %v5004 = vsel %vm1902, %v4768, -inf
        %v5005 = vsel %vm1903, %v4771, -inf
        %v5006 = vsel %vm1904, %v4774, -inf
        %v5007 = vsel %vm1905, %v4777, -inf
        %v5008 = vsel %vm1906, %v4780, -inf
        %v5009 = vsel %vm1907, %v4783, -inf
        %v5010 = vsel %vm1908, %v4786, -inf
        %v5011 = vsel %vm1909, %v4789, -inf
        %v5012 = vsel %vm1910, %v4792, -inf
        %v5013 = vsel %vm1911, %v4795, -inf
        %v5014 = vsel %vm1912, %v4798, -inf
        %v5015 = vsel %vm1913, %v4801, -inf
        %v5016 = vsel %vm1914, %v4804, -inf
        %v5017 = vsel %vm1915, %v4807, -inf
        %v5018 = vsel %vm1900, %v4955, -inf
        %v5019 = vsel %vm1901, %v4958, -inf
        %v5020 = vsel %vm1902, %v4961, -inf
        %v5021 = vsel %vm1903, %v4964, -inf
        %v5022 = vsel %vm1904, %v4967, -inf
        %v5023 = vsel %vm1905, %v4970, -inf
        %v5024 = vsel %vm1906, %v4973, -inf
        %v5025 = vsel %vm1907, %v4976, -inf
        %v5026 = vsel %vm1908, %v4979, -inf
        %v5027 = vsel %vm1909, %v4982, -inf
        %v5028 = vsel %vm1910, %v4985, -inf
        %v5029 = vsel %vm1911, %v4988, -inf
        %v5030 = vsel %vm1912, %v4991, -inf
        %v5031 = vsel %vm1913, %v4994, -inf
        %v5032 = vsel %vm1914, %v4997, -inf
        %v5033 = vsel %vm1915, %v5000, -inf
        %5034 = vmax.xlane.f32.xlu0 %v5002
        %v5035 = vpop.xlane.xlu0 %5034
        %5036 = vmax.xlane.f32.xlu0 %v5003
        %v5037 = vpop.xlane.xlu0 %5036
        %5038 = vmax.xlane.f32.xlu0 %v5004
        %v5039 = vpop.xlane.xlu0 %5038
        %5040 = vmax.xlane.f32.xlu0 %v5005
        %v5041 = vpop.xlane.xlu0 %5040
        %5042 = vmax.xlane.f32.xlu0 %v5006
        %v5043 = vpop.xlane.xlu0 %5042
        %5044 = vmax.xlane.f32.xlu0 %v5007
        %v5045 = vpop.xlane.xlu0 %5044
        %5046 = vmax.xlane.f32.xlu0 %v5008
        %v5047 = vpop.xlane.xlu0 %5046
        %5048 = vmax.xlane.f32.xlu0 %v5009
        %v5049 = vpop.xlane.xlu0 %5048
        %5050 = vmax.xlane.f32.xlu0 %v5010
        %v5051 = vpop.xlane.xlu0 %5050
        %5052 = vmax.xlane.f32.xlu0 %v5011
        %v5053 = vpop.xlane.xlu0 %5052
        %5054 = vmax.xlane.f32.xlu0 %v5012
        %v5055 = vpop.xlane.xlu0 %5054
        %5056 = vmax.xlane.f32.xlu0 %v5013
        %v5057 = vpop.xlane.xlu0 %5056
        %5058 = vmax.xlane.f32.xlu0 %v5014
        %v5059 = vpop.xlane.xlu0 %5058
        %5060 = vmax.xlane.f32.xlu0 %v5015
        %v5061 = vpop.xlane.xlu0 %5060
        %5062 = vmax.xlane.f32.xlu0 %v5016
        %v5063 = vpop.xlane.xlu0 %5062
        %5064 = vmax.xlane.f32.xlu0 %v5017
        %v5065 = vpop.xlane.xlu0 %5064
        %5066 = vmax.xlane.f32.xlu0 %v5018
        %v5067 = vpop.xlane.xlu0 %5066
        %5068 = vmax.xlane.f32.xlu0 %v5019
        %v5069 = vpop.xlane.xlu0 %5068
        %5070 = vmax.xlane.f32.xlu0 %v5020
        %v5071 = vpop.xlane.xlu0 %5070
        %5072 = vmax.xlane.f32.xlu0 %v5021
        %v5073 = vpop.xlane.xlu0 %5072
        %5074 = vmax.xlane.f32.xlu0 %v5022
        %v5075 = vpop.xlane.xlu0 %5074
        %5076 = vmax.xlane.f32.xlu0 %v5023
        %v5077 = vpop.xlane.xlu0 %5076
        %5078 = vmax.xlane.f32.xlu0 %v5024
        %v5079 = vpop.xlane.xlu0 %5078
        %5080 = vmax.xlane.f32.xlu0 %v5025
        %v5081 = vpop.xlane.xlu0 %5080
        %5082 = vmax.xlane.f32.xlu0 %v5026
        %v5083 = vpop.xlane.xlu0 %5082
        %5084 = vmax.xlane.f32.xlu0 %v5027
        %v5085 = vpop.xlane.xlu0 %5084
        %5086 = vmax.xlane.f32.xlu0 %v5028
        %v5087 = vpop.xlane.xlu0 %5086
        %5088 = vmax.xlane.f32.xlu0 %v5029
        %v5089 = vpop.xlane.xlu0 %5088
        %5090 = vmax.xlane.f32.xlu0 %v5030
        %v5091 = vpop.xlane.xlu0 %5090
        %5092 = vmax.xlane.f32.xlu0 %v5031
        %v5093 = vpop.xlane.xlu0 %5092
        %5094 = vmax.xlane.f32.xlu0 %v5032
        %v5095 = vpop.xlane.xlu0 %5094
        %5096 = vmax.xlane.f32.xlu0 %v5033
        %v5097 = vpop.xlane.xlu0 %5096
        %v5098 = vsub.f32 %v5002, %v5035
        %v5099 = vsub.f32 %v5003, %v5037
        %v5100 = vsub.f32 %v5004, %v5039
        %v5101 = vsub.f32 %v5005, %v5041
        %v5102 = vsub.f32 %v5006, %v5043
        %v5103 = vsub.f32 %v5007, %v5045
        %v5104 = vsub.f32 %v5008, %v5047
        %v5105 = vsub.f32 %v5009, %v5049
        %v5106 = vsub.f32 %v5010, %v5051
        %v5107 = vsub.f32 %v5011, %v5053
        %v5108 = vsub.f32 %v5012, %v5055
        %v5109 = vsub.f32 %v5013, %v5057
        %v5110 = vsub.f32 %v5014, %v5059
        %v5111 = vsub.f32 %v5015, %v5061
        %v5112 = vsub.f32 %v5016, %v5063
        %v5113 = vsub.f32 %v5017, %v5065
        %v5114 = vsub.f32 %v5018, %v5067
        %v5115 = vsub.f32 %v5019, %v5069
        %v5116 = vsub.f32 %v5020, %v5071
        %v5117 = vsub.f32 %v5021, %v5073
        %v5118 = vsub.f32 %v5022, %v5075
        %v5119 = vsub.f32 %v5023, %v5077
        %v5120 = vsub.f32 %v5024, %v5079
        %v5121 = vsub.f32 %v5025, %v5081
        %v5122 = vsub.f32 %v5026, %v5083
        %v5123 = vsub.f32 %v5027, %v5085
        %v5124 = vsub.f32 %v5028, %v5087
        %v5125 = vsub.f32 %v5029, %v5089
        %v5126 = vsub.f32 %v5030, %v5091
        %v5127 = vsub.f32 %v5031, %v5093
        %v5128 = vsub.f32 %v5032, %v5095
        %v5129 = vsub.f32 %v5033, %v5097
        %v5130 = vmul.f32 %v5098, 1.442695
        %v5131 = vpow.pop %v5130
        %v5132 = vmul.f32 %v5099, 1.442695
        %v5133 = vpow.pop %v5132
        %v5134 = vmul.f32 %v5100, 1.442695
        %v5135 = vpow.pop %v5134
        %v5136 = vmul.f32 %v5101, 1.442695
        %v5137 = vpow.pop %v5136
        %v5138 = vmul.f32 %v5102, 1.442695
        %v5139 = vpow.pop %v5138
        %v5140 = vmul.f32 %v5103, 1.442695
        %v5141 = vpow.pop %v5140
        %v5142 = vmul.f32 %v5104, 1.442695
        %v5143 = vpow.pop %v5142
        %v5144 = vmul.f32 %v5105, 1.442695
        %v5145 = vpow.pop %v5144
        %v5146 = vmul.f32 %v5106, 1.442695
        %v5147 = vpow.pop %v5146
        %v5148 = vmul.f32 %v5107, 1.442695
        %v5149 = vpow.pop %v5148
        %v5150 = vmul.f32 %v5108, 1.442695
        %v5151 = vpow.pop %v5150
        %v5152 = vmul.f32 %v5109, 1.442695
        %v5153 = vpow.pop %v5152
        %v5154 = vmul.f32 %v5110, 1.442695
        %v5155 = vpow.pop %v5154
        %v5156 = vmul.f32 %v5111, 1.442695
        %v5157 = vpow.pop %v5156
        %v5158 = vmul.f32 %v5112, 1.442695
        %v5159 = vpow.pop %v5158
        %v5160 = vmul.f32 %v5113, 1.442695
        %v5161 = vpow.pop %v5160
        %v5162 = vmul.f32 %v5114, 1.442695
        %v5163 = vpow.pop %v5162
        %v5164 = vmul.f32 %v5115, 1.442695
        %v5165 = vpow.pop %v5164
        %v5166 = vmul.f32 %v5116, 1.442695
        %v5167 = vpow.pop %v5166
        %v5168 = vmul.f32 %v5117, 1.442695
        %v5169 = vpow.pop %v5168
        %v5170 = vmul.f32 %v5118, 1.442695
        %v5171 = vpow.pop %v5170
        %v5172 = vmul.f32 %v5119, 1.442695
        %v5173 = vpow.pop %v5172
        %v5174 = vmul.f32 %v5120, 1.442695
        %v5175 = vpow.pop %v5174
        %v5176 = vmul.f32 %v5121, 1.442695
        %v5177 = vpow.pop %v5176
        %v5178 = vmul.f32 %v5122, 1.442695
        %v5179 = vpow.pop %v5178
        %v5180 = vmul.f32 %v5123, 1.442695
        %v5181 = vpow.pop %v5180
        %v5182 = vmul.f32 %v5124, 1.442695
        %v5183 = vpow.pop %v5182
        %v5184 = vmul.f32 %v5125, 1.442695
        %v5185 = vpow.pop %v5184
        %v5186 = vmul.f32 %v5126, 1.442695
        %v5187 = vpow.pop %v5186
        %v5188 = vmul.f32 %v5127, 1.442695
        %v5189 = vpow.pop %v5188
        %v5190 = vmul.f32 %v5128, 1.442695
        %v5191 = vpow.pop %v5190
        %v5192 = vmul.f32 %v5129, 1.442695
        %v5193 = vpow.pop %v5192
        %5194 = vadd.xlane.f32.xlu0 %v5131
        %v5195 = vpop.xlane.xlu0 %5194
        %5196 = vadd.xlane.f32.xlu0 %v5133
        %v5197 = vpop.xlane.xlu0 %5196
        %5198 = vadd.xlane.f32.xlu0 %v5135
        %v5199 = vpop.xlane.xlu0 %5198
        %5200 = vadd.xlane.f32.xlu0 %v5137
        %v5201 = vpop.xlane.xlu0 %5200
        %5202 = vadd.xlane.f32.xlu0 %v5139
        %v5203 = vpop.xlane.xlu0 %5202
        %5204 = vadd.xlane.f32.xlu0 %v5141
        %v5205 = vpop.xlane.xlu0 %5204
        %5206 = vadd.xlane.f32.xlu0 %v5143
        %v5207 = vpop.xlane.xlu0 %5206
        %5208 = vadd.xlane.f32.xlu0 %v5145
        %v5209 = vpop.xlane.xlu0 %5208
        %5210 = vadd.xlane.f32.xlu0 %v5147
        %v5211 = vpop.xlane.xlu0 %5210
        %5212 = vadd.xlane.f32.xlu0 %v5149
        %v5213 = vpop.xlane.xlu0 %5212
        %5214 = vadd.xlane.f32.xlu0 %v5151
        %v5215 = vpop.xlane.xlu0 %5214
        %5216 = vadd.xlane.f32.xlu0 %v5153
        %v5217 = vpop.xlane.xlu0 %5216
        %5218 = vadd.xlane.f32.xlu0 %v5155
        %v5219 = vpop.xlane.xlu0 %5218
        %5220 = vadd.xlane.f32.xlu0 %v5157
        %v5221 = vpop.xlane.xlu0 %5220
        %5222 = vadd.xlane.f32.xlu0 %v5159
        %v5223 = vpop.xlane.xlu0 %5222
        %5224 = vadd.xlane.f32.xlu0 %v5161
        %v5225 = vpop.xlane.xlu0 %5224
        %5226 = vadd.xlane.f32.xlu0 %v5163
        %v5227 = vpop.xlane.xlu0 %5226
        %5228 = vadd.xlane.f32.xlu0 %v5165
        %v5229 = vpop.xlane.xlu0 %5228
        %5230 = vadd.xlane.f32.xlu0 %v5167
        %v5231 = vpop.xlane.xlu0 %5230
        %5232 = vadd.xlane.f32.xlu0 %v5169
        %v5233 = vpop.xlane.xlu0 %5232
        %5234 = vadd.xlane.f32.xlu0 %v5171
        %v5235 = vpop.xlane.xlu0 %5234
        %5236 = vadd.xlane.f32.xlu0 %v5173
        %v5237 = vpop.xlane.xlu0 %5236
        %5238 = vadd.xlane.f32.xlu0 %v5175
        %v5239 = vpop.xlane.xlu0 %5238
        %5240 = vadd.xlane.f32.xlu0 %v5177
        %v5241 = vpop.xlane.xlu0 %5240
        %5242 = vadd.xlane.f32.xlu0 %v5179
        %v5243 = vpop.xlane.xlu0 %5242
        %5244 = vadd.xlane.f32.xlu0 %v5181
        %v5245 = vpop.xlane.xlu0 %5244
        %5246 = vadd.xlane.f32.xlu0 %v5183
        %v5247 = vpop.xlane.xlu0 %5246
        %5248 = vadd.xlane.f32.xlu0 %v5185
        %v5249 = vpop.xlane.xlu0 %5248
        %5250 = vadd.xlane.f32.xlu0 %v5187
        %v5251 = vpop.xlane.xlu0 %5250
        %5252 = vadd.xlane.f32.xlu0 %v5189
        %v5253 = vpop.xlane.xlu0 %5252
        %5254 = vadd.xlane.f32.xlu0 %v5191
        %v5255 = vpop.xlane.xlu0 %5254
        %5256 = vadd.xlane.f32.xlu0 %v5193
        %v5257 = vpop.xlane.xlu0 %5256
        %v5258 = vrcp.pop %v5195
        %v5259 = vrcp.pop %v5197
        %v5260 = vrcp.pop %v5199
        %v5261 = vrcp.pop %v5201
        %v5262 = vrcp.pop %v5203
        %v5263 = vrcp.pop %v5205
        %v5264 = vrcp.pop %v5207
        %v5265 = vrcp.pop %v5209
        %v5266 = vrcp.pop %v5211
        %v5267 = vrcp.pop %v5213
        %v5268 = vrcp.pop %v5215
        %v5269 = vrcp.pop %v5217
        %v5270 = vrcp.pop %v5219
        %v5271 = vrcp.pop %v5221
        %v5272 = vrcp.pop %v5223
        %v5273 = vrcp.pop %v5225
        %v5274 = vrcp.pop %v5227
        %v5275 = vrcp.pop %v5229
        %v5276 = vrcp.pop %v5231
        %v5277 = vrcp.pop %v5233
        %v5278 = vrcp.pop %v5235
        %v5279 = vrcp.pop %v5237
        %v5280 = vrcp.pop %v5239
        %v5281 = vrcp.pop %v5241
        %v5282 = vrcp.pop %v5243
        %v5283 = vrcp.pop %v5245
        %v5284 = vrcp.pop %v5247
        %v5285 = vrcp.pop %v5249
        %v5286 = vrcp.pop %v5251
        %v5287 = vrcp.pop %v5253
        %v5288 = vrcp.pop %v5255
        %v5289 = vrcp.pop %v5257
        %v5290 = vmul.f32 %v5131, %v5258
        %v5291 = vmul.f32 %v5133, %v5259
        %v5292 = vmul.f32 %v5135, %v5260
        %v5293 = vmul.f32 %v5137, %v5261
        %v5294 = vmul.f32 %v5139, %v5262
        %v5295 = vmul.f32 %v5141, %v5263
        %v5296 = vmul.f32 %v5143, %v5264
        %v5297 = vmul.f32 %v5145, %v5265
        %v5298 = vmul.f32 %v5147, %v5266
        %v5299 = vmul.f32 %v5149, %v5267
        %v5300 = vmul.f32 %v5151, %v5268
        %v5301 = vmul.f32 %v5153, %v5269
        %v5302 = vmul.f32 %v5155, %v5270
        %v5303 = vmul.f32 %v5157, %v5271
        %v5304 = vmul.f32 %v5159, %v5272
        %v5305 = vmul.f32 %v5161, %v5273
        %v5306 = vmul.f32 %v5163, %v5274
        %v5307 = vmul.f32 %v5165, %v5275
        %v5308 = vmul.f32 %v5167, %v5276
        %v5309 = vmul.f32 %v5169, %v5277
        %v5310 = vmul.f32 %v5171, %v5278
        %v5311 = vmul.f32 %v5173, %v5279
        %v5312 = vmul.f32 %v5175, %v5280
        %v5313 = vmul.f32 %v5177, %v5281
        %v5314 = vmul.f32 %v5179, %v5282
        %v5315 = vmul.f32 %v5181, %v5283
        %v5316 = vmul.f32 %v5183, %v5284
        %v5317 = vmul.f32 %v5185, %v5285
        %v5318 = vmul.f32 %v5187, %v5286
        %v5319 = vmul.f32 %v5189, %v5287
        %v5320 = vmul.f32 %v5191, %v5288
        %v5321 = vmul.f32 %v5193, %v5289
        %5322 = vrot.lane.b32.xlu0 %v1431, 32
        %v5323 = vpop.permute.xlu0 %5322
        %5324 = vrot.lane.b32.xlu0 %v1434, 32
        %v5325 = vpop.permute.xlu0 %5324
        %5326 = vrot.lane.b32.xlu0 %v1437, 32
        %v5327 = vpop.permute.xlu0 %5326
        %5328 = vrot.lane.b32.xlu0 %v1440, 32
        %v5329 = vpop.permute.xlu0 %5328
        %5330 = vrot.lane.b32.xlu0 %v1443, 32
        %v5331 = vpop.permute.xlu0 %5330
        %5332 = vrot.lane.b32.xlu0 %v1446, 32
        %v5333 = vpop.permute.xlu0 %5332
        %5334 = vrot.lane.b32.xlu0 %v1449, 32
        %v5335 = vpop.permute.xlu0 %5334
        %5336 = vrot.lane.b32.xlu0 %v1452, 32
        %v5337 = vpop.permute.xlu0 %5336
        %5338 = vrot.lane.b32.xlu0 %v1455, 32
        %v5339 = vpop.permute.xlu0 %5338
        %5340 = vrot.lane.b32.xlu0 %v1458, 32
        %v5341 = vpop.permute.xlu0 %5340
        %5342 = vrot.lane.b32.xlu0 %v1461, 32
        %v5343 = vpop.permute.xlu0 %5342
        %5344 = vrot.lane.b32.xlu0 %v1464, 32
        %v5345 = vpop.permute.xlu0 %5344
        %5346 = vrot.lane.b32.xlu0 %v1467, 32
        %v5347 = vpop.permute.xlu0 %5346
        %5348 = vrot.lane.b32.xlu0 %v1470, 32
        %v5349 = vpop.permute.xlu0 %5348
        %5350 = vrot.lane.b32.xlu0 %v1473, 32
        %v5351 = vpop.permute.xlu0 %5350
        %5352 = vrot.lane.b32.xlu0 %v1476, 32
        %v5353 = vpop.permute.xlu0 %5352
        %5370 = vmatpush.msra.mxu0 %v5353
        %5371 = vmatpush.msra.mxu0 %v5351
        %5372 = vmatpush.msra.mxu0 %v5349
        %5373 = vmatpush.msra.mxu0 %v5347
        %5374 = vmatpush.msra.mxu0 %v5345
        %5375 = vmatpush.msra.mxu0 %v5343
        %5376 = vmatpush.msra.mxu0 %v5341
        %5377 = vmatpush.msra.mxu0 %v5339
        %5378 = vmatpush.msra.mxu0 %v5337
        %5379 = vmatpush.msra.mxu0 %v5335
        %5380 = vmatpush.msra.mxu0 %v5333
        %5381 = vmatpush.msra.mxu0 %v5331
        %5382 = vmatpush.msra.mxu0 %v5329
        %5383 = vmatpush.msra.mxu0 %v5327
        %5384 = vmatpush.msra.mxu0 %v5325
        %5385 = vmatpush.msra.mxu0 %v5323
        %5386 = vmatmul.f32.gmra.mxu0 %v5290
        %v5387 = vpop.f32.mrf.mxu0
        %v5388 = vadd.f32 0.0, %v5387
        %5389 = vmatmul.f32.gmra.mxu0 %v5291
        %v5390 = vpop.f32.mrf.mxu0
        %v5391 = vadd.f32 0.0, %v5390
        %5392 = vmatmul.f32.gmra.mxu0 %v5292
        %v5393 = vpop.f32.mrf.mxu0
        %v5394 = vadd.f32 0.0, %v5393
        %5395 = vmatmul.f32.gmra.mxu0 %v5293
        %v5396 = vpop.f32.mrf.mxu0
        %v5397 = vadd.f32 0.0, %v5396
        %5398 = vmatmul.f32.gmra.mxu0 %v5294
        %v5399 = vpop.f32.mrf.mxu0
        %v5400 = vadd.f32 0.0, %v5399
        %5401 = vmatmul.f32.gmra.mxu0 %v5295
        %v5402 = vpop.f32.mrf.mxu0
        %v5403 = vadd.f32 0.0, %v5402
        %5404 = vmatmul.f32.gmra.mxu0 %v5296
        %v5405 = vpop.f32.mrf.mxu0
        %v5406 = vadd.f32 0.0, %v5405
        %5407 = vmatmul.f32.gmra.mxu0 %v5297
        %v5408 = vpop.f32.mrf.mxu0
        %v5409 = vadd.f32 0.0, %v5408
        %5410 = vmatmul.f32.gmra.mxu0 %v5298
        %v5411 = vpop.f32.mrf.mxu0
        %v5412 = vadd.f32 0.0, %v5411
        %5413 = vmatmul.f32.gmra.mxu0 %v5299
        %v5414 = vpop.f32.mrf.mxu0
        %v5415 = vadd.f32 0.0, %v5414
        %5416 = vmatmul.f32.gmra.mxu0 %v5300
        %v5417 = vpop.f32.mrf.mxu0
        %v5418 = vadd.f32 0.0, %v5417
        %5419 = vmatmul.f32.gmra.mxu0 %v5301
        %v5420 = vpop.f32.mrf.mxu0
        %v5421 = vadd.f32 0.0, %v5420
        %5422 = vmatmul.f32.gmra.mxu0 %v5302
        %v5423 = vpop.f32.mrf.mxu0
        %v5424 = vadd.f32 0.0, %v5423
        %5425 = vmatmul.f32.gmra.mxu0 %v5303
        %v5426 = vpop.f32.mrf.mxu0
        %v5427 = vadd.f32 0.0, %v5426
        %5428 = vmatmul.f32.gmra.mxu0 %v5304
        %v5429 = vpop.f32.mrf.mxu0
        %v5430 = vadd.f32 0.0, %v5429
        %5431 = vmatmul.f32.gmra.mxu0 %v5305
        %v5432 = vpop.f32.mrf.mxu0
        %v5433 = vadd.f32 0.0, %v5432
        %5434 = vdwg.mxu0
        %5435 = vrot.lane.b32.xlu0 %v1479, 32
        %v5436 = vpop.permute.xlu0 %5435
        %5437 = vrot.lane.b32.xlu0 %v1482, 32
        %v5438 = vpop.permute.xlu0 %5437
        %5439 = vrot.lane.b32.xlu0 %v1485, 32
        %v5440 = vpop.permute.xlu0 %5439
        %5441 = vrot.lane.b32.xlu0 %v1488, 32
        %v5442 = vpop.permute.xlu0 %5441
        %5443 = vrot.lane.b32.xlu0 %v1491, 32
        %v5444 = vpop.permute.xlu0 %5443
        %5445 = vrot.lane.b32.xlu0 %v1494, 32
        %v5446 = vpop.permute.xlu0 %5445
        %5447 = vrot.lane.b32.xlu0 %v1497, 32
        %v5448 = vpop.permute.xlu0 %5447
        %5449 = vrot.lane.b32.xlu0 %v1500, 32
        %v5450 = vpop.permute.xlu0 %5449
        %5451 = vrot.lane.b32.xlu0 %v1503, 32
        %v5452 = vpop.permute.xlu0 %5451
        %5453 = vrot.lane.b32.xlu0 %v1506, 32
        %v5454 = vpop.permute.xlu0 %5453
        %5455 = vrot.lane.b32.xlu0 %v1509, 32
        %v5456 = vpop.permute.xlu0 %5455
        %5457 = vrot.lane.b32.xlu0 %v1512, 32
        %v5458 = vpop.permute.xlu0 %5457
        %5459 = vrot.lane.b32.xlu0 %v1515, 32
        %v5460 = vpop.permute.xlu0 %5459
        %5461 = vrot.lane.b32.xlu0 %v1518, 32
        %v5462 = vpop.permute.xlu0 %5461
        %5463 = vrot.lane.b32.xlu0 %v1521, 32
        %v5464 = vpop.permute.xlu0 %5463
        %5465 = vrot.lane.b32.xlu0 %v1524, 32
        %v5466 = vpop.permute.xlu0 %5465
        %5483 = vmatpush.msra.mxu0 %v5466
        %5484 = vmatpush.msra.mxu0 %v5464
        %5485 = vmatpush.msra.mxu0 %v5462
        %5486 = vmatpush.msra.mxu0 %v5460
        %5487 = vmatpush.msra.mxu0 %v5458
        %5488 = vmatpush.msra.mxu0 %v5456
        %5489 = vmatpush.msra.mxu0 %v5454
        %5490 = vmatpush.msra.mxu0 %v5452
        %5491 = vmatpush.msra.mxu0 %v5450
        %5492 = vmatpush.msra.mxu0 %v5448
        %5493 = vmatpush.msra.mxu0 %v5446
        %5494 = vmatpush.msra.mxu0 %v5444
        %5495 = vmatpush.msra.mxu0 %v5442
        %5496 = vmatpush.msra.mxu0 %v5440
        %5497 = vmatpush.msra.mxu0 %v5438
        %5498 = vmatpush.msra.mxu0 %v5436
        %5499 = vmatmul.f32.gmra.mxu0 %v5306
        %v5500 = vpop.f32.mrf.mxu0
        %v5501 = vadd.f32 0.0, %v5500
        %5502 = vmatmul.f32.gmra.mxu0 %v5307
        %v5503 = vpop.f32.mrf.mxu0
        %v5504 = vadd.f32 0.0, %v5503
        %5505 = vmatmul.f32.gmra.mxu0 %v5308
        %v5506 = vpop.f32.mrf.mxu0
        %v5507 = vadd.f32 0.0, %v5506
        %5508 = vmatmul.f32.gmra.mxu0 %v5309
        %v5509 = vpop.f32.mrf.mxu0
        %v5510 = vadd.f32 0.0, %v5509
        %5511 = vmatmul.f32.gmra.mxu0 %v5310
        %v5512 = vpop.f32.mrf.mxu0
        %v5513 = vadd.f32 0.0, %v5512
        %5514 = vmatmul.f32.gmra.mxu0 %v5311
        %v5515 = vpop.f32.mrf.mxu0
        %v5516 = vadd.f32 0.0, %v5515
        %5517 = vmatmul.f32.gmra.mxu0 %v5312
        %v5518 = vpop.f32.mrf.mxu0
        %v5519 = vadd.f32 0.0, %v5518
        %5520 = vmatmul.f32.gmra.mxu0 %v5313
        %v5521 = vpop.f32.mrf.mxu0
        %v5522 = vadd.f32 0.0, %v5521
        %5523 = vmatmul.f32.gmra.mxu0 %v5314
        %v5524 = vpop.f32.mrf.mxu0
        %v5525 = vadd.f32 0.0, %v5524
        %5526 = vmatmul.f32.gmra.mxu0 %v5315
        %v5527 = vpop.f32.mrf.mxu0
        %v5528 = vadd.f32 0.0, %v5527
        %5529 = vmatmul.f32.gmra.mxu0 %v5316
        %v5530 = vpop.f32.mrf.mxu0
        %v5531 = vadd.f32 0.0, %v5530
        %5532 = vmatmul.f32.gmra.mxu0 %v5317
        %v5533 = vpop.f32.mrf.mxu0
        %v5534 = vadd.f32 0.0, %v5533
        %5535 = vmatmul.f32.gmra.mxu0 %v5318
        %v5536 = vpop.f32.mrf.mxu0
        %v5537 = vadd.f32 0.0, %v5536
        %5538 = vmatmul.f32.gmra.mxu0 %v5319
        %v5539 = vpop.f32.mrf.mxu0
        %v5540 = vadd.f32 0.0, %v5539
        %5541 = vmatmul.f32.gmra.mxu0 %v5320
        %v5542 = vpop.f32.mrf.mxu0
        %v5543 = vadd.f32 0.0, %v5542
        %5544 = vmatmul.f32.gmra.mxu0 %v5321
        %v5545 = vpop.f32.mrf.mxu0
        %v5546 = vadd.f32 0.0, %v5545
        %5547 = vdwg.mxu0
        %5580 = vrot.lane.b32.xlu0 %v5388, 96
        %v5581 = vpop.permute.xlu0 %5580
        %5582 = vrot.lane.b32.xlu0 %v5391, 96
        %v5583 = vpop.permute.xlu0 %5582
        %5584 = vrot.lane.b32.xlu0 %v5394, 96
        %v5585 = vpop.permute.xlu0 %5584
        %5586 = vrot.lane.b32.xlu0 %v5397, 96
        %v5587 = vpop.permute.xlu0 %5586
        %5588 = vrot.lane.b32.xlu0 %v5400, 96
        %v5589 = vpop.permute.xlu0 %5588
        %5590 = vrot.lane.b32.xlu0 %v5403, 96
        %v5591 = vpop.permute.xlu0 %5590
        %5592 = vrot.lane.b32.xlu0 %v5406, 96
        %v5593 = vpop.permute.xlu0 %5592
        %5594 = vrot.lane.b32.xlu0 %v5409, 96
        %v5595 = vpop.permute.xlu0 %5594
        %5596 = vrot.lane.b32.xlu0 %v5412, 96
        %v5597 = vpop.permute.xlu0 %5596
        %5598 = vrot.lane.b32.xlu0 %v5415, 96
        %v5599 = vpop.permute.xlu0 %5598
        %5600 = vrot.lane.b32.xlu0 %v5418, 96
        %v5601 = vpop.permute.xlu0 %5600
        %5602 = vrot.lane.b32.xlu0 %v5421, 96
        %v5603 = vpop.permute.xlu0 %5602
        %5604 = vrot.lane.b32.xlu0 %v5424, 96
        %v5605 = vpop.permute.xlu0 %5604
        %5606 = vrot.lane.b32.xlu0 %v5427, 96
        %v5607 = vpop.permute.xlu0 %5606
        %5608 = vrot.lane.b32.xlu0 %v5430, 96
        %v5609 = vpop.permute.xlu0 %5608
        %5610 = vrot.lane.b32.xlu0 %v5433, 96
        %v5611 = vpop.permute.xlu0 %5610
        %5612 = vrot.lane.b32.xlu0 %v5501, 96
        %v5613 = vpop.permute.xlu0 %5612
        %5614 = vrot.lane.b32.xlu0 %v5504, 96
        %v5615 = vpop.permute.xlu0 %5614
        %5616 = vrot.lane.b32.xlu0 %v5507, 96
        %v5617 = vpop.permute.xlu0 %5616
        %5618 = vrot.lane.b32.xlu0 %v5510, 96
        %v5619 = vpop.permute.xlu0 %5618
        %5620 = vrot.lane.b32.xlu0 %v5513, 96
        %v5621 = vpop.permute.xlu0 %5620
        %5622 = vrot.lane.b32.xlu0 %v5516, 96
        %v5623 = vpop.permute.xlu0 %5622
        %5624 = vrot.lane.b32.xlu0 %v5519, 96
        %v5625 = vpop.permute.xlu0 %5624
        %5626 = vrot.lane.b32.xlu0 %v5522, 96
        %v5627 = vpop.permute.xlu0 %5626
        %5628 = vrot.lane.b32.xlu0 %v5525, 96
        %v5629 = vpop.permute.xlu0 %5628
        %5630 = vrot.lane.b32.xlu0 %v5528, 96
        %v5631 = vpop.permute.xlu0 %5630
        %5632 = vrot.lane.b32.xlu0 %v5531, 96
        %v5633 = vpop.permute.xlu0 %5632
        %5634 = vrot.lane.b32.xlu0 %v5534, 96
        %v5635 = vpop.permute.xlu0 %5634
        %5636 = vrot.lane.b32.xlu0 %v5537, 96
        %v5637 = vpop.permute.xlu0 %5636
        %5638 = vrot.lane.b32.xlu0 %v5540, 96
        %v5639 = vpop.permute.xlu0 %5638
        %5640 = vrot.lane.b32.xlu0 %v5543, 96
        %v5641 = vpop.permute.xlu0 %5640
        %5642 = vrot.lane.b32.xlu0 %v5546, 96
        %v5643 = vpop.permute.xlu0 %5642
        %vm5676 = vcmask 1048320
        %5677 = vst.msk [vmem:[#allocation2] sm:$0xff] %vm5676, %v5581
        %5678 = vst.msk [vmem:[#allocation2 + $0x8] sm:$0xff] %vm5676, %v5583
        %5679 = vst.msk [vmem:[#allocation2 + $0x10] sm:$0xff] %vm5676, %v5585
        %5680 = vst.msk [vmem:[#allocation2 + $0x18] sm:$0xff] %vm5676, %v5587
        %5681 = vst.msk [vmem:[#allocation2 + $0x20] sm:$0xff] %vm5676, %v5589
        %5682 = vst.msk [vmem:[#allocation2 + $0x28] sm:$0xff] %vm5676, %v5591
        %5683 = vst.msk [vmem:[#allocation2 + $0x30] sm:$0xff] %vm5676, %v5593
        %5684 = vst.msk [vmem:[#allocation2 + $0x38] sm:$0xff] %vm5676, %v5595
        %5685 = vst.msk [vmem:[#allocation2 + $0x40] sm:$0xff] %vm5676, %v5597
        %5686 = vst.msk [vmem:[#allocation2 + $0x48] sm:$0xff] %vm5676, %v5599
        %5687 = vst.msk [vmem:[#allocation2 + $0x50] sm:$0xff] %vm5676, %v5601
        %5688 = vst.msk [vmem:[#allocation2 + $0x58] sm:$0xff] %vm5676, %v5603
        %5689 = vst.msk [vmem:[#allocation2 + $0x60] sm:$0xff] %vm5676, %v5605
        %5690 = vst.msk [vmem:[#allocation2 + $0x68] sm:$0xff] %vm5676, %v5607
        %5691 = vst.msk [vmem:[#allocation2 + $0x70] sm:$0xff] %vm5676, %v5609
        %5692 = vst.msk [vmem:[#allocation2 + $0x78] sm:$0xff] %vm5676, %v5611
        %5693 = vst.msk [vmem:[#allocation2 + $0x80] sm:$0xff] %vm5676, %v5613
        %5694 = vst.msk [vmem:[#allocation2 + $0x88] sm:$0xff] %vm5676, %v5615
        %5695 = vst.msk [vmem:[#allocation2 + $0x90] sm:$0xff] %vm5676, %v5617
        %5696 = vst.msk [vmem:[#allocation2 + $0x98] sm:$0xff] %vm5676, %v5619
        %5697 = vst.msk [vmem:[#allocation2 + $0xa0] sm:$0xff] %vm5676, %v5621
        %5698 = vst.msk [vmem:[#allocation2 + $0xa8] sm:$0xff] %vm5676, %v5623
        %5699 = vst.msk [vmem:[#allocation2 + $0xb0] sm:$0xff] %vm5676, %v5625
        %5700 = vst.msk [vmem:[#allocation2 + $0xb8] sm:$0xff] %vm5676, %v5627
        %5701 = vst.msk [vmem:[#allocation2 + $0xc0] sm:$0xff] %vm5676, %v5629
        %5702 = vst.msk [vmem:[#allocation2 + $0xc8] sm:$0xff] %vm5676, %v5631
        %5703 = vst.msk [vmem:[#allocation2 + $0xd0] sm:$0xff] %vm5676, %v5633
        %5704 = vst.msk [vmem:[#allocation2 + $0xd8] sm:$0xff] %vm5676, %v5635
        %5705 = vst.msk [vmem:[#allocation2 + $0xe0] sm:$0xff] %vm5676, %v5637
        %5706 = vst.msk [vmem:[#allocation2 + $0xe8] sm:$0xff] %vm5676, %v5639
        %5707 = vst.msk [vmem:[#allocation2 + $0xf0] sm:$0xff] %vm5676, %v5641
        %5708 = vst.msk [vmem:[#allocation2 + $0xf8] sm:$0xff] %vm5676, %v5643
        %v5709 = vld [vmem:[#allocation2] sm:$0xff]
        %v5710 = vld [vmem:[#allocation2 + $0x8] sm:$0xff]
        %v5711 = vld [vmem:[#allocation2 + $0x10] sm:$0xff]
        %v5712 = vld [vmem:[#allocation2 + $0x18] sm:$0xff]
        %v5713 = vld [vmem:[#allocation2 + $0x20] sm:$0xff]
        %v5714 = vld [vmem:[#allocation2 + $0x28] sm:$0xff]
        %v5715 = vld [vmem:[#allocation2 + $0x30] sm:$0xff]
        %v5716 = vld [vmem:[#allocation2 + $0x38] sm:$0xff]
        %v5717 = vld [vmem:[#allocation2 + $0x40] sm:$0xff]
        %v5718 = vld [vmem:[#allocation2 + $0x48] sm:$0xff]
        %v5719 = vld [vmem:[#allocation2 + $0x50] sm:$0xff]
        %v5720 = vld [vmem:[#allocation2 + $0x58] sm:$0xff]
        %v5721 = vld [vmem:[#allocation2 + $0x60] sm:$0xff]
        %v5722 = vld [vmem:[#allocation2 + $0x68] sm:$0xff]
        %v5723 = vld [vmem:[#allocation2 + $0x70] sm:$0xff]
        %v5724 = vld [vmem:[#allocation2 + $0x78] sm:$0xff]
        %v5725 = vld [vmem:[#allocation2 + $0x80] sm:$0xff]
        %v5726 = vld [vmem:[#allocation2 + $0x88] sm:$0xff]
        %v5727 = vld [vmem:[#allocation2 + $0x90] sm:$0xff]
        %v5728 = vld [vmem:[#allocation2 + $0x98] sm:$0xff]
        %v5729 = vld [vmem:[#allocation2 + $0xa0] sm:$0xff]
        %v5730 = vld [vmem:[#allocation2 + $0xa8] sm:$0xff]
        %v5731 = vld [vmem:[#allocation2 + $0xb0] sm:$0xff]
        %v5732 = vld [vmem:[#allocation2 + $0xb8] sm:$0xff]
        %v5733 = vld [vmem:[#allocation2 + $0xc0] sm:$0xff]
        %v5734 = vld [vmem:[#allocation2 + $0xc8] sm:$0xff]
        %v5735 = vld [vmem:[#allocation2 + $0xd0] sm:$0xff]
        %v5736 = vld [vmem:[#allocation2 + $0xd8] sm:$0xff]
        %v5737 = vld [vmem:[#allocation2 + $0xe0] sm:$0xff]
        %v5738 = vld [vmem:[#allocation2 + $0xe8] sm:$0xff]
        %v5739 = vld [vmem:[#allocation2 + $0xf0] sm:$0xff]
        %v5740 = vld [vmem:[#allocation2 + $0xf8] sm:$0xff]
        %v5741 = vld [vmem:[#allocation8] sm:$0xff]
        %v5742 = vld [vmem:[#allocation8 + $0x8] sm:$0xff]
        %v5743 = vld [vmem:[#allocation8 + $0x10] sm:$0xff]
        %v5744 = vld [vmem:[#allocation8 + $0x18] sm:$0xff]
        %v5745 = vld [vmem:[#allocation8 + $0x20] sm:$0xff]
        %v5746 = vld [vmem:[#allocation8 + $0x28] sm:$0xff]
        %v5747 = vld [vmem:[#allocation8 + $0x30] sm:$0xff]
        %v5748 = vld [vmem:[#allocation8 + $0x38] sm:$0xff]
        %v5749 = vld [vmem:[#allocation8 + $0x40] sm:$0xff]
        %v5750 = vld [vmem:[#allocation8 + $0x48] sm:$0xff]
        %v5751 = vld [vmem:[#allocation8 + $0x50] sm:$0xff]
        %v5752 = vld [vmem:[#allocation8 + $0x58] sm:$0xff]
        %v5753 = vld [vmem:[#allocation8 + $0x60] sm:$0xff]
        %v5754 = vld [vmem:[#allocation8 + $0x68] sm:$0xff]
        %v5755 = vld [vmem:[#allocation8 + $0x70] sm:$0xff]
        %v5756 = vld [vmem:[#allocation8 + $0x78] sm:$0xff]
        %v5757 = vld [vmem:[#allocation8 + $0x80] sm:$0xff]
        %v5758 = vld [vmem:[#allocation8 + $0x88] sm:$0xff]
        %v5759 = vld [vmem:[#allocation8 + $0x90] sm:$0xff]
        %v5760 = vld [vmem:[#allocation8 + $0x98] sm:$0xff]
        %v5761 = vld [vmem:[#allocation8 + $0xa0] sm:$0xff]
        %v5762 = vld [vmem:[#allocation8 + $0xa8] sm:$0xff]
        %v5763 = vld [vmem:[#allocation8 + $0xb0] sm:$0xff]
        %v5764 = vld [vmem:[#allocation8 + $0xb8] sm:$0xff]
        %v5765 = vld [vmem:[#allocation8 + $0xc0] sm:$0xff]
        %v5766 = vld [vmem:[#allocation8 + $0xc8] sm:$0xff]
        %v5767 = vld [vmem:[#allocation8 + $0xd0] sm:$0xff]
        %v5768 = vld [vmem:[#allocation8 + $0xd8] sm:$0xff]
        %v5769 = vld [vmem:[#allocation8 + $0xe0] sm:$0xff]
        %v5770 = vld [vmem:[#allocation8 + $0xe8] sm:$0xff]
        %v5771 = vld [vmem:[#allocation8 + $0xf0] sm:$0xff]
        %v5772 = vld [vmem:[#allocation8 + $0xf8] sm:$0xff]
        %v5773 = vld [vmem:[#allocation8 + $0x100] sm:$0xff]
        %v5774 = vld [vmem:[#allocation8 + $0x108] sm:$0xff]
        %v5775 = vld [vmem:[#allocation8 + $0x110] sm:$0xff]
        %v5776 = vld [vmem:[#allocation8 + $0x118] sm:$0xff]
        %v5777 = vld [vmem:[#allocation8 + $0x120] sm:$0xff]
        %v5778 = vld [vmem:[#allocation8 + $0x128] sm:$0xff]
        %v5779 = vld [vmem:[#allocation8 + $0x130] sm:$0xff]
        %v5780 = vld [vmem:[#allocation8 + $0x138] sm:$0xff]
        %v5781 = vld [vmem:[#allocation8 + $0x140] sm:$0xff]
        %v5782 = vld [vmem:[#allocation8 + $0x148] sm:$0xff]
        %v5783 = vld [vmem:[#allocation8 + $0x150] sm:$0xff]
        %v5784 = vld [vmem:[#allocation8 + $0x158] sm:$0xff]
        %v5785 = vld [vmem:[#allocation8 + $0x160] sm:$0xff]
        %v5786 = vld [vmem:[#allocation8 + $0x168] sm:$0xff]
        %v5787 = vld [vmem:[#allocation8 + $0x170] sm:$0xff]
        %v5788 = vld [vmem:[#allocation8 + $0x178] sm:$0xff]
        %v5789 = vld [vmem:[#allocation9] sm:$0x7]
        %v5791 = vperm.slane %v5789, 0
        %v5792 = vperm.slane %v5789, 1
        %v5793 = vperm.slane %v5789, 2
        %5797 = vmatpush.msra.mxu0 %v5786
        %5798 = vmatpush.msra.mxu0 %v5783
        %5799 = vmatpush.msra.mxu0 %v5780
        %5800 = vmatpush.msra.mxu0 %v5777
        %5801 = vmatpush.msra.mxu0 %v5774
        %5802 = vmatpush.msra.mxu0 %v5771
        %5803 = vmatpush.msra.mxu0 %v5768
        %5804 = vmatpush.msra.mxu0 %v5765
        %5805 = vmatpush.msra.mxu0 %v5762
        %5806 = vmatpush.msra.mxu0 %v5759
        %5807 = vmatpush.msra.mxu0 %v5756
        %5808 = vmatpush.msra.mxu0 %v5753
        %5809 = vmatpush.msra.mxu0 %v5750
        %5810 = vmatpush.msra.mxu0 %v5747
        %5811 = vmatpush.msra.mxu0 %v5744
        %5812 = vmatpush.msra.mxu0 %v5741
        %5813 = vmatmul.f32.gmra.mxu0 %v5709
        %v5814 = vpop.f32.mrf.mxu0
        %v5815 = vadd.f32 %v5791, %v5814
        %5816 = vmatmul.f32.gmra.mxu0 %v5710
        %v5817 = vpop.f32.mrf.mxu0
        %v5818 = vadd.f32 %v5791, %v5817
        %5819 = vmatmul.f32.gmra.mxu0 %v5711
        %v5820 = vpop.f32.mrf.mxu0
        %v5821 = vadd.f32 %v5791, %v5820
        %5822 = vmatmul.f32.gmra.mxu0 %v5712
        %v5823 = vpop.f32.mrf.mxu0
        %v5824 = vadd.f32 %v5791, %v5823
        %5825 = vmatmul.f32.gmra.mxu0 %v5713
        %v5826 = vpop.f32.mrf.mxu0
        %v5827 = vadd.f32 %v5791, %v5826
        %5828 = vmatmul.f32.gmra.mxu0 %v5714
        %v5829 = vpop.f32.mrf.mxu0
        %v5830 = vadd.f32 %v5791, %v5829
        %5831 = vmatmul.f32.gmra.mxu0 %v5715
        %v5832 = vpop.f32.mrf.mxu0
        %v5833 = vadd.f32 %v5791, %v5832
        %5834 = vmatmul.f32.gmra.mxu0 %v5716
        %v5835 = vpop.f32.mrf.mxu0
        %v5836 = vadd.f32 %v5791, %v5835
        %5837 = vmatmul.f32.gmra.mxu0 %v5717
        %v5838 = vpop.f32.mrf.mxu0
        %v5839 = vadd.f32 %v5791, %v5838
        %5840 = vmatmul.f32.gmra.mxu0 %v5718
        %v5841 = vpop.f32.mrf.mxu0
        %v5842 = vadd.f32 %v5791, %v5841
        %5843 = vmatmul.f32.gmra.mxu0 %v5719
        %v5844 = vpop.f32.mrf.mxu0
        %v5845 = vadd.f32 %v5791, %v5844
        %5846 = vmatmul.f32.gmra.mxu0 %v5720
        %v5847 = vpop.f32.mrf.mxu0
        %v5848 = vadd.f32 %v5791, %v5847
        %5849 = vmatmul.f32.gmra.mxu0 %v5721
        %v5850 = vpop.f32.mrf.mxu0
        %v5851 = vadd.f32 %v5791, %v5850
        %5852 = vmatmul.f32.gmra.mxu0 %v5722
        %v5853 = vpop.f32.mrf.mxu0
        %v5854 = vadd.f32 %v5791, %v5853
        %5855 = vmatmul.f32.gmra.mxu0 %v5723
        %v5856 = vpop.f32.mrf.mxu0
        %v5857 = vadd.f32 %v5791, %v5856
        %5858 = vmatmul.f32.gmra.mxu0 %v5724
        %v5859 = vpop.f32.mrf.mxu0
        %v5860 = vadd.f32 %v5791, %v5859
        %5861 = vmatmul.f32.gmra.mxu0 %v5725
        %v5862 = vpop.f32.mrf.mxu0
        %v5863 = vadd.f32 %v5791, %v5862
        %5864 = vmatmul.f32.gmra.mxu0 %v5726
        %v5865 = vpop.f32.mrf.mxu0
        %v5866 = vadd.f32 %v5791, %v5865
        %5867 = vmatmul.f32.gmra.mxu0 %v5727
        %v5868 = vpop.f32.mrf.mxu0
        %v5869 = vadd.f32 %v5791, %v5868
        %5870 = vmatmul.f32.gmra.mxu0 %v5728
        %v5871 = vpop.f32.mrf.mxu0
        %v5872 = vadd.f32 %v5791, %v5871
        %5873 = vmatmul.f32.gmra.mxu0 %v5729
        %v5874 = vpop.f32.mrf.mxu0
        %v5875 = vadd.f32 %v5791, %v5874
        %5876 = vmatmul.f32.gmra.mxu0 %v5730
        %v5877 = vpop.f32.mrf.mxu0
        %v5878 = vadd.f32 %v5791, %v5877
        %5879 = vmatmul.f32.gmra.mxu0 %v5731
        %v5880 = vpop.f32.mrf.mxu0
        %v5881 = vadd.f32 %v5791, %v5880
        %5882 = vmatmul.f32.gmra.mxu0 %v5732
        %v5883 = vpop.f32.mrf.mxu0
        %v5884 = vadd.f32 %v5791, %v5883
        %5885 = vmatmul.f32.gmra.mxu0 %v5733
        %v5886 = vpop.f32.mrf.mxu0
        %v5887 = vadd.f32 %v5791, %v5886
        %5888 = vmatmul.f32.gmra.mxu0 %v5734
        %v5889 = vpop.f32.mrf.mxu0
        %v5890 = vadd.f32 %v5791, %v5889
        %5891 = vmatmul.f32.gmra.mxu0 %v5735
        %v5892 = vpop.f32.mrf.mxu0
        %v5893 = vadd.f32 %v5791, %v5892
        %5894 = vmatmul.f32.gmra.mxu0 %v5736
        %v5895 = vpop.f32.mrf.mxu0
        %v5896 = vadd.f32 %v5791, %v5895
        %5897 = vmatmul.f32.gmra.mxu0 %v5737
        %v5898 = vpop.f32.mrf.mxu0
        %v5899 = vadd.f32 %v5791, %v5898
        %5900 = vmatmul.f32.gmra.mxu0 %v5738
        %v5901 = vpop.f32.mrf.mxu0
        %v5902 = vadd.f32 %v5791, %v5901
        %5903 = vmatmul.f32.gmra.mxu0 %v5739
        %v5904 = vpop.f32.mrf.mxu0
        %v5905 = vadd.f32 %v5791, %v5904
        %5906 = vmatmul.f32.gmra.mxu0 %v5740
        %v5907 = vpop.f32.mrf.mxu0
        %v5908 = vadd.f32 %v5791, %v5907
        %5909 = vdwg.mxu0
        %5910 = vmatpush.msra.mxu0 %v5787
        %5911 = vmatpush.msra.mxu0 %v5784
        %5912 = vmatpush.msra.mxu0 %v5781
        %5913 = vmatpush.msra.mxu0 %v5778
        %5914 = vmatpush.msra.mxu0 %v5775
        %5915 = vmatpush.msra.mxu0 %v5772
        %5916 = vmatpush.msra.mxu0 %v5769
        %5917 = vmatpush.msra.mxu0 %v5766
        %5918 = vmatpush.msra.mxu0 %v5763
        %5919 = vmatpush.msra.mxu0 %v5760
        %5920 = vmatpush.msra.mxu0 %v5757
        %5921 = vmatpush.msra.mxu0 %v5754
        %5922 = vmatpush.msra.mxu0 %v5751
        %5923 = vmatpush.msra.mxu0 %v5748
        %5924 = vmatpush.msra.mxu0 %v5745
        %5925 = vmatpush.msra.mxu0 %v5742
        %5926 = vmatmul.f32.gmra.mxu0 %v5709
        %v5927 = vpop.f32.mrf.mxu0
        %v5928 = vadd.f32 %v5792, %v5927
        %5929 = vmatmul.f32.gmra.mxu0 %v5710
        %v5930 = vpop.f32.mrf.mxu0
        %v5931 = vadd.f32 %v5792, %v5930
        %5932 = vmatmul.f32.gmra.mxu0 %v5711
        %v5933 = vpop.f32.mrf.mxu0
        %v5934 = vadd.f32 %v5792, %v5933
        %5935 = vmatmul.f32.gmra.mxu0 %v5712
        %v5936 = vpop.f32.mrf.mxu0
        %v5937 = vadd.f32 %v5792, %v5936
        %5938 = vmatmul.f32.gmra.mxu0 %v5713
        %v5939 = vpop.f32.mrf.mxu0
        %v5940 = vadd.f32 %v5792, %v5939
        %5941 = vmatmul.f32.gmra.mxu0 %v5714
        %v5942 = vpop.f32.mrf.mxu0
        %v5943 = vadd.f32 %v5792, %v5942
        %5944 = vmatmul.f32.gmra.mxu0 %v5715
        %v5945 = vpop.f32.mrf.mxu0
        %v5946 = vadd.f32 %v5792, %v5945
        %5947 = vmatmul.f32.gmra.mxu0 %v5716
        %v5948 = vpop.f32.mrf.mxu0
        %v5949 = vadd.f32 %v5792, %v5948
        %5950 = vmatmul.f32.gmra.mxu0 %v5717
        %v5951 = vpop.f32.mrf.mxu0
        %v5952 = vadd.f32 %v5792, %v5951
        %5953 = vmatmul.f32.gmra.mxu0 %v5718
        %v5954 = vpop.f32.mrf.mxu0
        %v5955 = vadd.f32 %v5792, %v5954
        %5956 = vmatmul.f32.gmra.mxu0 %v5719
        %v5957 = vpop.f32.mrf.mxu0
        %v5958 = vadd.f32 %v5792, %v5957
        %5959 = vmatmul.f32.gmra.mxu0 %v5720
        %v5960 = vpop.f32.mrf.mxu0
        %v5961 = vadd.f32 %v5792, %v5960
        %5962 = vmatmul.f32.gmra.mxu0 %v5721
        %v5963 = vpop.f32.mrf.mxu0
        %v5964 = vadd.f32 %v5792, %v5963
        %5965 = vmatmul.f32.gmra.mxu0 %v5722
        %v5966 = vpop.f32.mrf.mxu0
        %v5967 = vadd.f32 %v5792, %v5966
        %5968 = vmatmul.f32.gmra.mxu0 %v5723
        %v5969 = vpop.f32.mrf.mxu0
        %v5970 = vadd.f32 %v5792, %v5969
        %5971 = vmatmul.f32.gmra.mxu0 %v5724
        %v5972 = vpop.f32.mrf.mxu0
        %v5973 = vadd.f32 %v5792, %v5972
        %5974 = vmatmul.f32.gmra.mxu0 %v5725
        %v5975 = vpop.f32.mrf.mxu0
        %v5976 = vadd.f32 %v5792, %v5975
        %5977 = vmatmul.f32.gmra.mxu0 %v5726
        %v5978 = vpop.f32.mrf.mxu0
        %v5979 = vadd.f32 %v5792, %v5978
        %5980 = vmatmul.f32.gmra.mxu0 %v5727
        %v5981 = vpop.f32.mrf.mxu0
        %v5982 = vadd.f32 %v5792, %v5981
        %5983 = vmatmul.f32.gmra.mxu0 %v5728
        %v5984 = vpop.f32.mrf.mxu0
        %v5985 = vadd.f32 %v5792, %v5984
        %5986 = vmatmul.f32.gmra.mxu0 %v5729
        %v5987 = vpop.f32.mrf.mxu0
        %v5988 = vadd.f32 %v5792, %v5987
        %5989 = vmatmul.f32.gmra.mxu0 %v5730
        %v5990 = vpop.f32.mrf.mxu0
        %v5991 = vadd.f32 %v5792, %v5990
        %5992 = vmatmul.f32.gmra.mxu0 %v5731
        %v5993 = vpop.f32.mrf.mxu0
        %v5994 = vadd.f32 %v5792, %v5993
        %5995 = vmatmul.f32.gmra.mxu0 %v5732
        %v5996 = vpop.f32.mrf.mxu0
        %v5997 = vadd.f32 %v5792, %v5996
        %5998 = vmatmul.f32.gmra.mxu0 %v5733
        %v5999 = vpop.f32.mrf.mxu0
        %v6000 = vadd.f32 %v5792, %v5999
        %6001 = vmatmul.f32.gmra.mxu0 %v5734
        %v6002 = vpop.f32.mrf.mxu0
        %v6003 = vadd.f32 %v5792, %v6002
        %6004 = vmatmul.f32.gmra.mxu0 %v5735
        %v6005 = vpop.f32.mrf.mxu0
        %v6006 = vadd.f32 %v5792, %v6005
        %6007 = vmatmul.f32.gmra.mxu0 %v5736
        %v6008 = vpop.f32.mrf.mxu0
        %v6009 = vadd.f32 %v5792, %v6008
        %6010 = vmatmul.f32.gmra.mxu0 %v5737
        %v6011 = vpop.f32.mrf.mxu0
        %v6012 = vadd.f32 %v5792, %v6011
        %6013 = vmatmul.f32.gmra.mxu0 %v5738
        %v6014 = vpop.f32.mrf.mxu0
        %v6015 = vadd.f32 %v5792, %v6014
        %6016 = vmatmul.f32.gmra.mxu0 %v5739
        %v6017 = vpop.f32.mrf.mxu0
        %v6018 = vadd.f32 %v5792, %v6017
        %6019 = vmatmul.f32.gmra.mxu0 %v5740
        %v6020 = vpop.f32.mrf.mxu0
        %v6021 = vadd.f32 %v5792, %v6020
        %6022 = vdwg.mxu0
        %6023 = vmatpush.msra.mxu0 %v5788
        %6024 = vmatpush.msra.mxu0 %v5785
        %6025 = vmatpush.msra.mxu0 %v5782
        %6026 = vmatpush.msra.mxu0 %v5779
        %6027 = vmatpush.msra.mxu0 %v5776
        %6028 = vmatpush.msra.mxu0 %v5773
        %6029 = vmatpush.msra.mxu0 %v5770
        %6030 = vmatpush.msra.mxu0 %v5767
        %6031 = vmatpush.msra.mxu0 %v5764
        %6032 = vmatpush.msra.mxu0 %v5761
        %6033 = vmatpush.msra.mxu0 %v5758
        %6034 = vmatpush.msra.mxu0 %v5755
        %6035 = vmatpush.msra.mxu0 %v5752
        %6036 = vmatpush.msra.mxu0 %v5749
        %6037 = vmatpush.msra.mxu0 %v5746
        %6038 = vmatpush.msra.mxu0 %v5743
        %6039 = vmatmul.f32.gmra.mxu0 %v5709
        %v6040 = vpop.f32.mrf.mxu0
        %v6041 = vadd.f32 %v5793, %v6040
        %6042 = vmatmul.f32.gmra.mxu0 %v5710
        %v6043 = vpop.f32.mrf.mxu0
        %v6044 = vadd.f32 %v5793, %v6043
        %6045 = vmatmul.f32.gmra.mxu0 %v5711
        %v6046 = vpop.f32.mrf.mxu0
        %v6047 = vadd.f32 %v5793, %v6046
        %6048 = vmatmul.f32.gmra.mxu0 %v5712
        %v6049 = vpop.f32.mrf.mxu0
        %v6050 = vadd.f32 %v5793, %v6049
        %6051 = vmatmul.f32.gmra.mxu0 %v5713
        %v6052 = vpop.f32.mrf.mxu0
        %v6053 = vadd.f32 %v5793, %v6052
        %6054 = vmatmul.f32.gmra.mxu0 %v5714
        %v6055 = vpop.f32.mrf.mxu0
        %v6056 = vadd.f32 %v5793, %v6055
        %6057 = vmatmul.f32.gmra.mxu0 %v5715
        %v6058 = vpop.f32.mrf.mxu0
        %v6059 = vadd.f32 %v5793, %v6058
        %6060 = vmatmul.f32.gmra.mxu0 %v5716
        %v6061 = vpop.f32.mrf.mxu0
        %v6062 = vadd.f32 %v5793, %v6061
        %6063 = vmatmul.f32.gmra.mxu0 %v5717
        %v6064 = vpop.f32.mrf.mxu0
        %v6065 = vadd.f32 %v5793, %v6064
        %6066 = vmatmul.f32.gmra.mxu0 %v5718
        %v6067 = vpop.f32.mrf.mxu0
        %v6068 = vadd.f32 %v5793, %v6067
        %6069 = vmatmul.f32.gmra.mxu0 %v5719
        %v6070 = vpop.f32.mrf.mxu0
        %v6071 = vadd.f32 %v5793, %v6070
        %6072 = vmatmul.f32.gmra.mxu0 %v5720
        %v6073 = vpop.f32.mrf.mxu0
        %v6074 = vadd.f32 %v5793, %v6073
        %6075 = vmatmul.f32.gmra.mxu0 %v5721
        %v6076 = vpop.f32.mrf.mxu0
        %v6077 = vadd.f32 %v5793, %v6076
        %6078 = vmatmul.f32.gmra.mxu0 %v5722
        %v6079 = vpop.f32.mrf.mxu0
        %v6080 = vadd.f32 %v5793, %v6079
        %6081 = vmatmul.f32.gmra.mxu0 %v5723
        %v6082 = vpop.f32.mrf.mxu0
        %v6083 = vadd.f32 %v5793, %v6082
        %6084 = vmatmul.f32.gmra.mxu0 %v5724
        %v6085 = vpop.f32.mrf.mxu0
        %v6086 = vadd.f32 %v5793, %v6085
        %6087 = vmatmul.f32.gmra.mxu0 %v5725
        %v6088 = vpop.f32.mrf.mxu0
        %v6089 = vadd.f32 %v5793, %v6088
        %6090 = vmatmul.f32.gmra.mxu0 %v5726
        %v6091 = vpop.f32.mrf.mxu0
        %v6092 = vadd.f32 %v5793, %v6091
        %6093 = vmatmul.f32.gmra.mxu0 %v5727
        %v6094 = vpop.f32.mrf.mxu0
        %v6095 = vadd.f32 %v5793, %v6094
        %6096 = vmatmul.f32.gmra.mxu0 %v5728
        %v6097 = vpop.f32.mrf.mxu0
        %v6098 = vadd.f32 %v5793, %v6097
        %6099 = vmatmul.f32.gmra.mxu0 %v5729
        %v6100 = vpop.f32.mrf.mxu0
        %v6101 = vadd.f32 %v5793, %v6100
        %6102 = vmatmul.f32.gmra.mxu0 %v5730
        %v6103 = vpop.f32.mrf.mxu0
        %v6104 = vadd.f32 %v5793, %v6103
        %6105 = vmatmul.f32.gmra.mxu0 %v5731
        %v6106 = vpop.f32.mrf.mxu0
        %v6107 = vadd.f32 %v5793, %v6106
        %6108 = vmatmul.f32.gmra.mxu0 %v5732
        %v6109 = vpop.f32.mrf.mxu0
        %v6110 = vadd.f32 %v5793, %v6109
        %6111 = vmatmul.f32.gmra.mxu0 %v5733
        %v6112 = vpop.f32.mrf.mxu0
        %v6113 = vadd.f32 %v5793, %v6112
        %6114 = vmatmul.f32.gmra.mxu0 %v5734
        %v6115 = vpop.f32.mrf.mxu0
        %v6116 = vadd.f32 %v5793, %v6115
        %6117 = vmatmul.f32.gmra.mxu0 %v5735
        %v6118 = vpop.f32.mrf.mxu0
        %v6119 = vadd.f32 %v5793, %v6118
        %6120 = vmatmul.f32.gmra.mxu0 %v5736
        %v6121 = vpop.f32.mrf.mxu0
        %v6122 = vadd.f32 %v5793, %v6121
        %6123 = vmatmul.f32.gmra.mxu0 %v5737
        %v6124 = vpop.f32.mrf.mxu0
        %v6125 = vadd.f32 %v5793, %v6124
        %6126 = vmatmul.f32.gmra.mxu0 %v5738
        %v6127 = vpop.f32.mrf.mxu0
        %v6128 = vadd.f32 %v5793, %v6127
        %6129 = vmatmul.f32.gmra.mxu0 %v5739
        %v6130 = vpop.f32.mrf.mxu0
        %v6131 = vadd.f32 %v5793, %v6130
        %6132 = vmatmul.f32.gmra.mxu0 %v5740
        %v6133 = vpop.f32.mrf.mxu0
        %v6134 = vadd.f32 %v5793, %v6133
        %6135 = vdwg.mxu0
        %6136 = vst [vmem:[%s266] sm:$0xff] %v5815
        %6137 = vst [vmem:[%s266 + $0x8] sm:$0xff] %v5928
        %6138 = vst [vmem:[%s266 + $0x10] sm:$0xff] %v6041
        %6139 = vst [vmem:[%s266 + $0x18] sm:$0xff] %v5818
        %6140 = vst [vmem:[%s266 + $0x20] sm:$0xff] %v5931
        %6141 = vst [vmem:[%s266 + $0x28] sm:$0xff] %v6044
        %6142 = vst [vmem:[%s266 + $0x30] sm:$0xff] %v5821
        %6143 = vst [vmem:[%s266 + $0x38] sm:$0xff] %v5934
        %6144 = vst [vmem:[%s266 + $0x40] sm:$0xff] %v6047
        %6145 = vst [vmem:[%s266 + $0x48] sm:$0xff] %v5824
        %6146 = vst [vmem:[%s266 + $0x50] sm:$0xff] %v5937
        %6147 = vst [vmem:[%s266 + $0x58] sm:$0xff] %v6050
        %6148 = vst [vmem:[%s266 + $0x60] sm:$0xff] %v5827
        %6149 = vst [vmem:[%s266 + $0x68] sm:$0xff] %v5940
        %6150 = vst [vmem:[%s266 + $0x70] sm:$0xff] %v6053
        %6151 = vst [vmem:[%s266 + $0x78] sm:$0xff] %v5830
        %6152 = vst [vmem:[%s266 + $0x80] sm:$0xff] %v5943
        %6153 = vst [vmem:[%s266 + $0x88] sm:$0xff] %v6056
        %6154 = vst [vmem:[%s266 + $0x90] sm:$0xff] %v5833
        %6155 = vst [vmem:[%s266 + $0x98] sm:$0xff] %v5946
        %6156 = vst [vmem:[%s266 + $0xa0] sm:$0xff] %v6059
        %6157 = vst [vmem:[%s266 + $0xa8] sm:$0xff] %v5836
        %6158 = vst [vmem:[%s266 + $0xb0] sm:$0xff] %v5949
        %6159 = vst [vmem:[%s266 + $0xb8] sm:$0xff] %v6062
        %6160 = vst [vmem:[%s266 + $0xc0] sm:$0xff] %v5839
        %6161 = vst [vmem:[%s266 + $0xc8] sm:$0xff] %v5952
        %6162 = vst [vmem:[%s266 + $0xd0] sm:$0xff] %v6065
        %6163 = vst [vmem:[%s266 + $0xd8] sm:$0xff] %v5842
        %6164 = vst [vmem:[%s266 + $0xe0] sm:$0xff] %v5955
        %6165 = vst [vmem:[%s266 + $0xe8] sm:$0xff] %v6068
        %6166 = vst [vmem:[%s266 + $0xf0] sm:$0xff] %v5845
        %6167 = vst [vmem:[%s266 + $0xf8] sm:$0xff] %v5958
        %6168 = vst [vmem:[%s266 + $0x100] sm:$0xff] %v6071
        %6169 = vst [vmem:[%s266 + $0x108] sm:$0xff] %v5848
        %6170 = vst [vmem:[%s266 + $0x110] sm:$0xff] %v5961
        %6171 = vst [vmem:[%s266 + $0x118] sm:$0xff] %v6074
        %6172 = vst [vmem:[%s266 + $0x120] sm:$0xff] %v5851
        %6173 = vst [vmem:[%s266 + $0x128] sm:$0xff] %v5964
        %6174 = vst [vmem:[%s266 + $0x130] sm:$0xff] %v6077
        %6175 = vst [vmem:[%s266 + $0x138] sm:$0xff] %v5854
        %6176 = vst [vmem:[%s266 + $0x140] sm:$0xff] %v5967
        %6177 = vst [vmem:[%s266 + $0x148] sm:$0xff] %v6080
        %6178 = vst [vmem:[%s266 + $0x150] sm:$0xff] %v5857
        %6179 = vst [vmem:[%s266 + $0x158] sm:$0xff] %v5970
        %6180 = vst [vmem:[%s266 + $0x160] sm:$0xff] %v6083
        %6181 = vst [vmem:[%s266 + $0x168] sm:$0xff] %v5860
        %6182 = vst [vmem:[%s266 + $0x170] sm:$0xff] %v5973
        %6183 = vst [vmem:[%s266 + $0x178] sm:$0xff] %v6086
        %6184 = vst [vmem:[%s266 + $0x180] sm:$0xff] %v5863
        %6185 = vst [vmem:[%s266 + $0x188] sm:$0xff] %v5976
        %6186 = vst [vmem:[%s266 + $0x190] sm:$0xff] %v6089
        %6187 = vst [vmem:[%s266 + $0x198] sm:$0xff] %v5866
        %6188 = vst [vmem:[%s266 + $0x1a0] sm:$0xff] %v5979
        %6189 = vst [vmem:[%s266 + $0x1a8] sm:$0xff] %v6092
        %6190 = vst [vmem:[%s266 + $0x1b0] sm:$0xff] %v5869
        %6191 = vst [vmem:[%s266 + $0x1b8] sm:$0xff] %v5982
        %6192 = vst [vmem:[%s266 + $0x1c0] sm:$0xff] %v6095
        %6193 = vst [vmem:[%s266 + $0x1c8] sm:$0xff] %v5872
        %6194 = vst [vmem:[%s266 + $0x1d0] sm:$0xff] %v5985
        %6195 = vst [vmem:[%s266 + $0x1d8] sm:$0xff] %v6098
        %6196 = vst [vmem:[%s266 + $0x1e0] sm:$0xff] %v5875
        %6197 = vst [vmem:[%s266 + $0x1e8] sm:$0xff] %v5988
        %6198 = vst [vmem:[%s266 + $0x1f0] sm:$0xff] %v6101
        %6199 = vst [vmem:[%s266 + $0x1f8] sm:$0xff] %v5878
        %6200 = vst [vmem:[%s266 + $0x200] sm:$0xff] %v5991
        %6201 = vst [vmem:[%s266 + $0x208] sm:$0xff] %v6104
        %6202 = vst [vmem:[%s266 + $0x210] sm:$0xff] %v5881
        %6203 = vst [vmem:[%s266 + $0x218] sm:$0xff] %v5994
        %6204 = vst [vmem:[%s266 + $0x220] sm:$0xff] %v6107
        %6205 = vst [vmem:[%s266 + $0x228] sm:$0xff] %v5884
        %6206 = vst [vmem:[%s266 + $0x230] sm:$0xff] %v5997
        %6207 = vst [vmem:[%s266 + $0x238] sm:$0xff] %v6110
        %6208 = vst [vmem:[%s266 + $0x240] sm:$0xff] %v5887
        %6209 = vst [vmem:[%s266 + $0x248] sm:$0xff] %v6000
        %6210 = vst [vmem:[%s266 + $0x250] sm:$0xff] %v6113
        %6211 = vst [vmem:[%s266 + $0x258] sm:$0xff] %v5890
        %6212 = vst [vmem:[%s266 + $0x260] sm:$0xff] %v6003
        %6213 = vst [vmem:[%s266 + $0x268] sm:$0xff] %v6116
        %6214 = vst [vmem:[%s266 + $0x270] sm:$0xff] %v5893
        %6215 = vst [vmem:[%s266 + $0x278] sm:$0xff] %v6006
        %6216 = vst [vmem:[%s266 + $0x280] sm:$0xff] %v6119
        %6217 = vst [vmem:[%s266 + $0x288] sm:$0xff] %v5896
        %6218 = vst [vmem:[%s266 + $0x290] sm:$0xff] %v6009
        %6219 = vst [vmem:[%s266 + $0x298] sm:$0xff] %v6122
        %6220 = vst [vmem:[%s266 + $0x2a0] sm:$0xff] %v5899
        %6221 = vst [vmem:[%s266 + $0x2a8] sm:$0xff] %v6012
        %6222 = vst [vmem:[%s266 + $0x2b0] sm:$0xff] %v6125
        %6223 = vst [vmem:[%s266 + $0x2b8] sm:$0xff] %v5902
        %6224 = vst [vmem:[%s266 + $0x2c0] sm:$0xff] %v6015
        %6225 = vst [vmem:[%s266 + $0x2c8] sm:$0xff] %v6128
        %6226 = vst [vmem:[%s266 + $0x2d0] sm:$0xff] %v5905
        %6227 = vst [vmem:[%s266 + $0x2d8] sm:$0xff] %v6018
        %6228 = vst [vmem:[%s266 + $0x2e0] sm:$0xff] %v6131
        %6229 = vst [vmem:[%s266 + $0x2e8] sm:$0xff] %v5908
        %6230 = vst [vmem:[%s266 + $0x2f0] sm:$0xff] %v6021
        %6231 = vst [vmem:[%s266 + $0x2f8] sm:$0xff] %v6134
        %s6232 = sand.u32 %s120, 1
        %s6233 = scalar_lea.sflag [#allocation5], %s6232
        %s6234 = sand.u32 %s120, 1
        %s6235 = smul.addr %s6234, 768
        %s6236 = scalar_lea.vmem [#allocation11], %s6235
        // Predicated region
        $region53: #{tpu_custom_call.1} parent=35 // pred_check
          %p6237 = pneg %p130
        $region54: #{tpu_custom_call.1} parent=35 // pred_check_branch
          %6239 = sbr.rel (%p6237) target = $region56
        $region55: #{tpu_custom_call.1} parent=35 // pred_region
          %s6240 = smul.u32 2, %s23
          %6242 = vsyncadd %s6233, 0
          %s6243 = smul.addr %s6240, 48
          %s6244 = smul.addr %s6243, 8
          %s6245 = scalar_lea.hbm %s4, %s6244
          %s6246 = sshll.u32 %s6236, 4
          %s6247 = int_to_ptr.vmem [resolvable:$true] %s6246
          %s6248 = sshll.u32 %s6245, 4
          %s6249 = int_to_ptr.hbm [resolvable:$true] %s6248
          %6254 = dma.vmem_to_hbm [thread:$0]  %s6247, 12288, %s6249, %s6233, 384, 384, 24
        $region56: #{tpu_custom_call.1} parent=35 // pred_fallthru
          _
      $region36: #{tpu_custom_call.1} parent=5 // pred_fallthru
        _
      %p6255 = scmp.le.s32.totalorder 2, %s18
      // Predicated region
      $region57: #{tpu_custom_call.1} parent=5 // pred_check
        %p6256 = pneg %p6255
      $region58: #{tpu_custom_call.1} parent=5 // pred_check_branch
        %6258 = sbr.rel (%p6256) target = $region60
      $region59: #{tpu_custom_call.1} parent=5 // pred_region
        %s6259 = ssub.s32 %s18, 2
        // Predicated region
        $region61: #{tpu_custom_call.1} parent=59 // pred_check
          %p6260 = pneg %p136
        $region62: #{tpu_custom_call.1} parent=59 // pred_check_branch
          %6262 = sbr.rel (%p6260) target = $region64
        $region63: #{tpu_custom_call.1} parent=59 // pred_region
          %s6263 = sand.u32 %s121, 1
          %s6264 = scalar_lea.sflag [#allocation5], %s6263
          %s6265 = sand.u32 %s121, 1
          %s6266 = smul.addr %s6265, 768
          %s6267 = scalar_lea.vmem [#allocation11], %s6266
          %6269 = dma.done %s6264, 12288
        $region64: #{tpu_custom_call.1} parent=59 // pred_fallthru
          _
      $region60: #{tpu_custom_call.1} parent=5 // pred_fallthru
        _
    $region6: #{tpu_custom_call.1} parent=1 // loop_footer
      %s22 = sadd.s32 1, %s18
    $region7: #{tpu_custom_call.1} parent=1 // loop_footer_branch
      %17 = sbr.rel target = $region3
    $region8: #{tpu_custom_call.1} parent=1 // loop_exit
      _
    %6270 = vsyncpa [#allocation4], 1
    %s6271 = scalar_lea.sflag [#allocation4], 1
    %6272 = vsyncpa %s6271, 1
    %6273 = vsyncpa [#allocation7], 1
    %6274 = vsyncpa [#allocation10], 1
    %6275 = vsyncpa [#allocation5], 1
    %s6276 = scalar_lea.sflag [#allocation5], 1
    %6277 = vsyncpa %s6276, 1

</llo_original>
